<compile_context>
chip_gen: v5e
topology: v5e:2x2
jax: 0.10.0
libtpu: 0.0.40
codegen_flags: <defaults>
</compile_context>

<pallas_src>
import math
import functools

import numpy as np
import jax
import jax.numpy as jnp
from jax import lax
from jax.experimental import pallas as pl
from jax.experimental.pallas import tpu as pltpu


# ---------------------------------------------------------------------------
# Host-side constant builders (shapes are static at trace time)
# ---------------------------------------------------------------------------
def _bilinear_1d(f):
    """1D factor of the fill_up_weights() bilinear kernel (size 2f)."""
    k = 2 * f
    fc = math.ceil(k / 2)
    c = (2 * fc - 1 - fc % 2) / (2.0 * fc)
    return np.array([1.0 - abs(i / fc - c) for i in range(k)], np.float32)


def _upsample_matrix(n_in, f):
    """Dense (n_out, n_in) matrix of the depthwise bilinear ConvTranspose1d
    (kernel 2f, stride f, padding f//2):  out = A @ in."""
    k, pad = 2 * f, f // 2
    n_out = (n_in - 1) * f - 2 * pad + k
    w1 = _bilinear_1d(f)
    a = np.zeros((n_out, n_in), np.float32)
    for i in range(n_in):
        for kk in range(k):
            o = i * f + kk - pad
            if 0 <= o < n_out:
                a[o, i] += w1[kk]
    return a


def _row_conv_matrices(w_hwio, width):
    """3x3 'same' conv as 3 block-Toeplitz matmuls on row-flattened rows.

    Returns T[ky] of shape (W*Cin, W*Cout) so that
        out_row[y] = sum_ky  in_row[y + ky - 1] @ T[ky]
    Horizontal zero-padding is implicit (missing bands)."""
    kh, kw, cin, cout = w_hwio.shape
    mats = []
    for ky in range(kh):
        t = np.zeros((width * cin, width * cout), np.float32)
        for xo in range(width):
            for dx in range(kw):
                xi = xo + dx - (kw // 2)
                if 0 <= xi < width:
                    t[xi * cin:(xi + 1) * cin, xo * cout:(xo + 1) * cout] = w_hwio[ky, dx]
        mats.append(t)
    return mats


def _fold_bn(conv_b, gamma, beta, mean, var, eps=1e-5):
    """Fold Conv2d bias + inference-mode BatchNorm into per-channel scale/bias."""
    scale = gamma / np.sqrt(var + eps)
    bias = beta - mean * scale + conv_b * scale
    return scale, bias


# ---------------------------------------------------------------------------
# Pallas kernel: one fused IDAUp level  (proj conv+BN+ReLU -> bilinear up ->
# skip add -> node conv+BN+ReLU), one batch image per grid step.
# ---------------------------------------------------------------------------
def _conv3x3_rows(z, t0, t1, t2):
    """'same' 3x3 conv on a row-flattened (H, W*Cin) bf16 slab -> (H, W*Cout) f32."""
    h = z.shape[0]
    r = lax.broadcasted_iota(jnp.int32, (h, h), 0)
    c = lax.broadcasted_iota(jnp.int32, (h, h), 1)
    s_up = jnp.where(c == r - 1, 1.0, 0.0).astype(z.dtype)   # row y <- row y-1
    s_dn = jnp.where(c == r + 1, 1.0, 0.0).astype(z.dtype)   # row y <- row y+1
    z_up = jnp.dot(s_up, z, preferred_element_type=jnp.float32).astype(z.dtype)
    z_dn = jnp.dot(s_dn, z, preferred_element_type=jnp.float32).astype(z.dtype)
    return (jnp.dot(z_up, t0, preferred_element_type=jnp.float32)
            + jnp.dot(z, t1, preferred_element_type=jnp.float32)
            + jnp.dot(z_dn, t2, preferred_element_type=jnp.float32))


def _ida_level_kernel(x_ref, skip_ref,
                      pt0_ref, pt1_ref, pt2_ref, psc_ref, pbi_ref,
                      ay_ref, axc_ref,
                      nt0_ref, nt1_ref, nt2_ref, nsc_ref, nbi_ref,
                      out_ref):
    # --- proj: 3x3 conv (bf16 MXU, f32 accum) + folded BN + ReLU -------------
    p = _conv3x3_rows(x_ref[...], pt0_ref[...], pt1_ref[...], pt2_ref[...])
    p = jnp.maximum(p * psc_ref[...] + pbi_ref[...], 0.0)            # (Hin, Win*O) f32

    # --- up: separable bilinear ConvTranspose as two small matmuls -----------
    pv = jnp.dot(ay_ref[...], p, preferred_element_type=jnp.float32)  # (Hout, Win*O)
    u = jnp.dot(pv, axc_ref[...], preferred_element_type=jnp.float32)  # (Hout, Wout*O)

    # --- node: 3x3 conv( up + skip ) + folded BN + ReLU ----------------------
    z = (u + skip_ref[...]).astype(jnp.bfloat16)
    y = _conv3x3_rows(z, nt0_ref[...], nt1_ref[...], nt2_ref[...])
    y = jnp.maximum(y * nsc_ref[...] + nbi_ref[...], 0.0)
    out_ref[...] = y.astype(out_ref.dtype)


def _ida_level_pallas(x_row, skip_row, lp):
    b, hin, winc = x_row.shape
    _, hout, wouto = skip_row.shape

    def full2(a):
        return pl.BlockSpec(a.shape, lambda i: (0, 0))

    in_specs = [
        pl.BlockSpec((None, hin, winc), lambda i: (i, 0, 0)),     # x (per image)
        pl.BlockSpec((None, hout, wouto), lambda i: (i, 0, 0)),   # skip (per image)
        full2(lp["pt0"]), full2(lp["pt1"]), full2(lp["pt2"]),
        full2(lp["psc"]), full2(lp["pbi"]),
        full2(lp["ay"]), full2(lp["axc"]),
        full2(lp["nt0"]), full2(lp["nt1"]), full2(lp["nt2"]),
        full2(lp["nsc"]), full2(lp["nbi"]),
    ]
    out_specs = pl.BlockSpec((None, hout, wouto), lambda i: (i, 0, 0))

    return pl.pallas_call(
        _ida_level_kernel,
        grid=(b,),
        in_specs=in_specs,
        out_specs=out_specs,
        out_shape=jax.ShapeDtypeStruct((b, hout, wouto), jnp.float32),
        compiler_params=pltpu.CompilerParams(
            dimension_semantics=("parallel",),
            vmem_limit_bytes=32 * 1024 * 1024),
    )(x_row, skip_row,
      lp["pt0"], lp["pt1"], lp["pt2"], lp["psc"], lp["pbi"],
      lp["ay"], lp["axc"],
      lp["nt0"], lp["nt1"], lp["nt2"], lp["nsc"], lp["nbi"])


# ---------------------------------------------------------------------------
# IDAUp forward (mirrors the PyTorch loop over levels)
# ---------------------------------------------------------------------------
def ida_up_forward(layers_nhwc, startp, endp, level_params, o):
    layers = list(layers_nhwc)
    for i in range(startp + 1, endp):
        lp = level_params[i - startp]
        x = layers[i]                       # original pyramid level (NHWC, f32)
        skip = layers[i - 1]                # already at the target resolution
        b, hin, win, cin = x.shape
        _, hout, wout, cskip = skip.shape
        assert cskip == o
        x_row = x.astype(jnp.bfloat16).reshape(b, hin, win * cin)
        skip_row = skip.astype(jnp.float32).reshape(b, hout, wout * o)
        out_row = _ida_level_pallas(x_row, skip_row, lp)
        layers[i] = out_row.reshape(b, hout, wout, o)
    return layers


# ---------------------------------------------------------------------------
# Parameter construction (synthetic, deterministic, no checkpoint)
# ---------------------------------------------------------------------------
def make_idaup_params(key, o, channels, up_f):
    """Random DeformConv (Conv2d 3x3 + BN) params per level, weights in HWIO."""
    raw = [None]                             # index j = constructor index (1..)
    for j in range(1, len(channels)):
        c = channels[j]
        kj = jax.random.fold_in(key, j)
        ks = jax.random.split(kj, 12)

        def conv_bn(kk, cin, cout):
            w = (0.05 * jax.random.normal(kk[0], (3, 3, cin, cout), jnp.float32))
            w = w.astype(jnp.bfloat16).astype(jnp.float32)   # bf16-representable
            return dict(
                w=w,
                b=0.1 * jax.random.normal(kk[1], (cout,), jnp.float32),
                gamma=1.0 + 0.1 * jax.random.normal(kk[2], (cout,), jnp.float32),
                beta=0.1 * jax.random.normal(kk[3], (cout,), jnp.float32),
                mean=0.1 * jax.random.normal(kk[4], (cout,), jnp.float32),
                var=jax.random.uniform(kk[5], (cout,), jnp.float32, 0.5, 1.5),
            )

        raw.append(dict(proj=conv_bn(ks[0:6], c, o),
                        node=conv_bn(ks[6:12], o, o),
                        f=int(up_f[j])))
    return raw


def prepare_level_params(raw_level, hin, win, o):
    """Pack one level's params into the kernel-ready matrices."""
    f = raw_level["f"]

    def conv_pack(cb, width):
        ts = _row_conv_matrices(np.asarray(cb["w"]), width)
        scale, bias = _fold_bn(np.asarray(cb["b"]), np.asarray(cb["gamma"]),
                               np.asarray(cb["beta"]), np.asarray(cb["mean"]),
                               np.asarray(cb["var"]))
        sc = np.tile(scale, width)[None, :].astype(np.float32)
        bi = np.tile(bias, width)[None, :].astype(np.float32)
        return ([jnp.asarray(t, jnp.bfloat16) for t in ts],
                jnp.asarray(sc), jnp.asarray(bi))

    ay = _upsample_matrix(hin, f)                       # (Hout, Hin)
    ax = _upsample_matrix(win, f)                       # (Wout, Win)
    hout, wout = ay.shape[0], ax.shape[0]
    axc = np.kron(ax.T, np.eye(o, dtype=np.float32))    # (Win*O, Wout*O)

    (pt0, pt1, pt2), psc, pbi = conv_pack(raw_level["proj"], win)
    (nt0, nt1, nt2), nsc, nbi = conv_pack(raw_level["node"], wout)

    return dict(pt0=pt0, pt1=pt1, pt2=pt2, psc=psc, pbi=pbi,
                ay=jnp.asarray(ay, jnp.float32),
                axc=jnp.asarray(axc, jnp.float32),
                nt0=nt0, nt1=nt1, nt2=nt2, nsc=nsc, nbi=nbi)


# ---------------------------------------------------------------------------
# Pure-JAX reference (independent path: lax.conv + dilated-conv transpose)
# ---------------------------------------------------------------------------
def _deform_conv_ref(x, cb, eps=1e-5):
    y = lax.conv_general_dilated(
        x, cb["w"], (1, 1), "SAME",
        dimension_numbers=("NHWC", "HWIO", "NHWC"),
        precision=lax.Precision.HIGHEST)
    y = y + cb["b"].reshape(1, 1, 1, -1)
    y = (y - cb["mean"]) / jnp.sqrt(cb["var"] + eps) * cb["gamma"] + cb["beta"]
    return jax.nn.relu(y)


def _upsample_ref(x, f):
    o = x.shape[-1]
    k = 2 * f
    w1 = jnp.asarray(_bilinear_1d(f))
    w2 = jnp.outer(w1, w1)
    w = jnp.broadcast_to(w2[:, :, None, None], (k, k, 1, o))
    return lax.conv_general_dilated(
        x, w, (1, 1), [(k - 1 - f // 2, k - 1 - f // 2)] * 2,
        lhs_dilation=(f, f),
        dimension_numbers=("NHWC", "HWIO", "NHWC"),
        feature_group_count=o,
        precision=lax.Precision.HIGHEST)


def ida_up_ref(layers_nhwc, startp, endp, raw_params):
    layers = list(layers_nhwc)
    for i in range(startp + 1, endp):
        rp = raw_params[i - startp]
        proj = _deform_conv_ref(layers[i], rp["proj"])
        up = _upsample_ref(proj, rp["f"])
        # mirror the kernel's single mixed-precision point (bf16 node-conv input)
        z = (up + layers[i - 1]).astype(jnp.bfloat16).astype(jnp.float32)
        layers[i] = _deform_conv_ref(z, rp["node"])
    return layers


# ---------------------------------------------------------------------------
if __name__ == "__main__":
    O = 32                        # IDAUp output channels 'o'
    CHANNELS = [32, 64, 128]      # per-level input channels
    UP_F = [1, 2, 4]              # per-level upsample factors (DLAUp-style)
    SPATIAL = [(16, 16), (8, 8), (4, 4)]
    B = 2
    STARTP, ENDP = 0, len(CHANNELS)

    key = jax.random.PRNGKey(0)
    k_layers, k_params = jax.random.split(key)

    # Build the input feature pyramid (PyTorch-style NCHW), transpose to NHWC,
    # and round to bf16-representable values so the bf16-MXU kernel path and the
    # f32 reference consume identical inputs.
    layers = []
    for lvl, (c, (h, w)) in enumerate(zip(CHANNELS, SPATIAL)):
        kl = jax.random.fold_in(k_layers, lvl)
        x_nchw = jax.random.normal(kl, (B, c, h, w), jnp.float32)
        x_nhwc = jnp.transpose(x_nchw, (0, 2, 3, 1))
        layers.append(x_nhwc.astype(jnp.bfloat16).astype(jnp.float32))

    raw = make_idaup_params(k_params, O, CHANNELS, UP_F)

    level_params = [None]
    for j in range(1, len(CHANNELS)):
        h, w = SPATIAL[j]
        level_params.append(prepare_level_params(raw[j], h, w, O))

    out_layers = ida_up_forward(layers, STARTP, ENDP, level_params, O)
    jax.block_until_ready(out_layers[STARTP + 1:ENDP])

    ref_layers = ida_up_ref(layers, STARTP, ENDP, raw)

    for i in range(STARTP + 1, ENDP):
        got, ref = out_layers[i], ref_layers[i]
        assert got.shape == ref.shape, (got.shape, ref.shape)
        err = float(jnp.max(jnp.abs(got - ref)))
        assert jnp.allclose(got, ref, atol=2e-2, rtol=2e-2), err

    print("KERNEL_OK")
</pallas_src>

<mosaic_0001>
module attributes {stable_mosaic.version = 11 : i64} {
  func.func @_ida_level_kernel(%arg0: i32, %arg1: memref<1x8x512xbf16, #tpu.memory_space<vmem>>, %arg2: memref<1x16x512xf32, #tpu.memory_space<vmem>>, %arg3: memref<512x256xbf16, #tpu.memory_space<vmem>>, %arg4: memref<512x256xbf16, #tpu.memory_space<vmem>>, %arg5: memref<512x256xbf16, #tpu.memory_space<vmem>>, %arg6: memref<1x256xf32, #tpu.memory_space<vmem>>, %arg7: memref<1x256xf32, #tpu.memory_space<vmem>>, %arg8: memref<16x8xf32, #tpu.memory_space<vmem>>, %arg9: memref<256x512xf32, #tpu.memory_space<vmem>>, %arg10: memref<512x512xbf16, #tpu.memory_space<vmem>>, %arg11: memref<512x512xbf16, #tpu.memory_space<vmem>>, %arg12: memref<512x512xbf16, #tpu.memory_space<vmem>>, %arg13: memref<1x512xf32, #tpu.memory_space<vmem>>, %arg14: memref<1x512xf32, #tpu.memory_space<vmem>>, %arg15: memref<1x16x512xf32, #tpu.memory_space<vmem>>) attributes {dimension_semantics = [#tpu.dimension_semantics<parallel>], iteration_bounds = array<i64: 2>, scalar_prefetch = 0 : i64, scratch_operands = 0 : i64, tpu.core_type = #tpu.core_type<tc>, window_params = [{transform_indices = @transform_0, window_bounds = array<i64: 1, 8, 512>}, {transform_indices = @transform_1, window_bounds = array<i64: 1, 16, 512>}, {pipeline_mode = #tpu.pipeline_mode<synchronous>, transform_indices = @transform_2, window_bounds = array<i64: 512, 256>}, {pipeline_mode = #tpu.pipeline_mode<synchronous>, transform_indices = @transform_3, window_bounds = array<i64: 512, 256>}, {pipeline_mode = #tpu.pipeline_mode<synchronous>, transform_indices = @transform_4, window_bounds = array<i64: 512, 256>}, {pipeline_mode = #tpu.pipeline_mode<synchronous>, transform_indices = @transform_5, window_bounds = array<i64: 1, 256>}, {pipeline_mode = #tpu.pipeline_mode<synchronous>, transform_indices = @transform_6, window_bounds = array<i64: 1, 256>}, {pipeline_mode = #tpu.pipeline_mode<synchronous>, transform_indices = @transform_7, window_bounds = array<i64: 16, 8>}, {pipeline_mode = #tpu.pipeline_mode<synchronous>, transform_indices = @transform_8, window_bounds = array<i64: 256, 512>}, {pipeline_mode = #tpu.pipeline_mode<synchronous>, transform_indices = @transform_9, window_bounds = array<i64: 512, 512>}, {pipeline_mode = #tpu.pipeline_mode<synchronous>, transform_indices = @transform_10, window_bounds = array<i64: 512, 512>}, {pipeline_mode = #tpu.pipeline_mode<synchronous>, transform_indices = @transform_11, window_bounds = array<i64: 512, 512>}, {pipeline_mode = #tpu.pipeline_mode<synchronous>, transform_indices = @transform_12, window_bounds = array<i64: 1, 512>}, {pipeline_mode = #tpu.pipeline_mode<synchronous>, transform_indices = @transform_13, window_bounds = array<i64: 1, 512>}, {transform_indices = @transform_14, window_bounds = array<i64: 1, 16, 512>}]} {
    %c0 = arith.constant 0 : index
    %c0_0 = arith.constant 0 : index
    %c0_1 = arith.constant 0 : index
    %0 = vector.load %arg1[%c0, %c0_0, %c0_1] : memref<1x8x512xbf16, #tpu.memory_space<vmem>>, vector<1x8x512xbf16>
    %1 = vector.shape_cast %0 : vector<1x8x512xbf16> to vector<8x512xbf16>
    %c0_2 = arith.constant 0 : index
    %c0_3 = arith.constant 0 : index
    %2 = vector.load %arg3[%c0_2, %c0_3] : memref<512x256xbf16, #tpu.memory_space<vmem>>, vector<512x256xbf16>
    %c0_4 = arith.constant 0 : index
    %c0_5 = arith.constant 0 : index
    %3 = vector.load %arg4[%c0_4, %c0_5] : memref<512x256xbf16, #tpu.memory_space<vmem>>, vector<512x256xbf16>
    %c0_6 = arith.constant 0 : index
    %c0_7 = arith.constant 0 : index
    %4 = vector.load %arg5[%c0_6, %c0_7] : memref<512x256xbf16, #tpu.memory_space<vmem>>, vector<512x256xbf16>
    %5 = tpu.iota {dimensions = array<i32: 0>} : vector<8x8xi32>
    %6 = tpu.iota {dimensions = array<i32: 1>} : vector<8x8xi32>
    %c1_i32 = arith.constant 1 : i32
    %7 = vector.broadcast %c1_i32 : i32 to vector<8x8xi32>
    %8 = arith.subi %5, %7 : vector<8x8xi32>
    %9 = arith.cmpi eq, %6, %8 : vector<8x8xi32>
    %cst = arith.constant 1.000000e+00 : f32
    %cst_8 = arith.constant 0.000000e+00 : f32
    %10 = vector.broadcast %cst : f32 to vector<8x8xf32>
    %11 = vector.broadcast %cst_8 : f32 to vector<8x8xf32>
    %12 = arith.select %9, %10, %11 : vector<8x8xi1>, vector<8x8xf32>
    %13 = arith.truncf %12 : vector<8x8xf32> to vector<8x8xbf16>
    %c1_i32_9 = arith.constant 1 : i32
    %14 = vector.broadcast %c1_i32_9 : i32 to vector<8x8xi32>
    %15 = arith.addi %5, %14 : vector<8x8xi32>
    %16 = arith.cmpi eq, %6, %15 : vector<8x8xi32>
    %cst_10 = arith.constant 1.000000e+00 : f32
    %cst_11 = arith.constant 0.000000e+00 : f32
    %17 = vector.broadcast %cst_10 : f32 to vector<8x8xf32>
    %18 = vector.broadcast %cst_11 : f32 to vector<8x8xf32>
    %19 = arith.select %16, %17, %18 : vector<8x8xi1>, vector<8x8xf32>
    %20 = arith.truncf %19 : vector<8x8xf32> to vector<8x8xbf16>
    %cst_12 = arith.constant dense<0.000000e+00> : vector<8x512xf32>
    %21 = tpu.matmul %13, %1, %cst_12 {dimension_numbers = #tpu.dot_dimension_numbers<[1], [0], [0], [1], [0, 0, 1, 1], [], []>} : vector<8x8xbf16>, vector<8x512xbf16>, vector<8x512xf32> -> vector<8x512xf32>
    %22 = arith.truncf %21 : vector<8x512xf32> to vector<8x512xbf16>
    %cst_13 = arith.constant dense<0.000000e+00> : vector<8x512xf32>
    %23 = tpu.matmul %20, %1, %cst_13 {dimension_numbers = #tpu.dot_dimension_numbers<[1], [0], [0], [1], [0, 0, 1, 1], [], []>} : vector<8x8xbf16>, vector<8x512xbf16>, vector<8x512xf32> -> vector<8x512xf32>
    %24 = arith.truncf %23 : vector<8x512xf32> to vector<8x512xbf16>
    %cst_14 = arith.constant dense<0.000000e+00> : vector<8x256xf32>
    %25 = tpu.matmul %22, %2, %cst_14 {dimension_numbers = #tpu.dot_dimension_numbers<[1], [0], [0], [1], [0, 0, 1, 1], [], []>} : vector<8x512xbf16>, vector<512x256xbf16>, vector<8x256xf32> -> vector<8x256xf32>
    %cst_15 = arith.constant dense<0.000000e+00> : vector<8x256xf32>
    %26 = tpu.matmul %1, %3, %cst_15 {dimension_numbers = #tpu.dot_dimension_numbers<[1], [0], [0], [1], [0, 0, 1, 1], [], []>} : vector<8x512xbf16>, vector<512x256xbf16>, vector<8x256xf32> -> vector<8x256xf32>
    %27 = arith.addf %25, %26 : vector<8x256xf32>
    %cst_16 = arith.constant dense<0.000000e+00> : vector<8x256xf32>
    %28 = tpu.matmul %24, %4, %cst_16 {dimension_numbers = #tpu.dot_dimension_numbers<[1], [0], [0], [1], [0, 0, 1, 1], [], []>} : vector<8x512xbf16>, vector<512x256xbf16>, vector<8x256xf32> -> vector<8x256xf32>
    %29 = arith.addf %27, %28 : vector<8x256xf32>
    %c0_17 = arith.constant 0 : index
    %c0_18 = arith.constant 0 : index
    %30 = vector.load %arg6[%c0_17, %c0_18] : memref<1x256xf32, #tpu.memory_space<vmem>>, vector<1x256xf32>
    %31 = vector.broadcast %30 : vector<1x256xf32> to vector<8x256xf32>
    %32 = arith.mulf %29, %31 : vector<8x256xf32>
    %c0_19 = arith.constant 0 : index
    %c0_20 = arith.constant 0 : index
    %33 = vector.load %arg7[%c0_19, %c0_20] : memref<1x256xf32, #tpu.memory_space<vmem>>, vector<1x256xf32>
    %34 = vector.broadcast %33 : vector<1x256xf32> to vector<8x256xf32>
    %35 = arith.addf %32, %34 : vector<8x256xf32>
    %cst_21 = arith.constant 0.000000e+00 : f32
    %36 = vector.broadcast %cst_21 : f32 to vector<8x256xf32>
    %37 = arith.maximumf %35, %36 : vector<8x256xf32>
    %c0_22 = arith.constant 0 : index
    %c0_23 = arith.constant 0 : index
    %38 = vector.load %arg8[%c0_22, %c0_23] : memref<16x8xf32, #tpu.memory_space<vmem>>, vector<16x8xf32>
    %cst_24 = arith.constant dense<0.000000e+00> : vector<16x256xf32>
    %39 = tpu.matmul %38, %37, %cst_24 {dimension_numbers = #tpu.dot_dimension_numbers<[1], [0], [0], [1], [0, 0, 1, 1], [], []>} : vector<16x8xf32>, vector<8x256xf32>, vector<16x256xf32> -> vector<16x256xf32>
    %c0_25 = arith.constant 0 : index
    %c0_26 = arith.constant 0 : index
    %40 = vector.load %arg9[%c0_25, %c0_26] : memref<256x512xf32, #tpu.memory_space<vmem>>, vector<256x512xf32>
    %cst_27 = arith.constant dense<0.000000e+00> : vector<16x512xf32>
    %41 = tpu.matmul %39, %40, %cst_27 {dimension_numbers = #tpu.dot_dimension_numbers<[1], [0], [0], [1], [0, 0, 1, 1], [], []>} : vector<16x256xf32>, vector<256x512xf32>, vector<16x512xf32> -> vector<16x512xf32>
    %c0_28 = arith.constant 0 : index
    %c0_29 = arith.constant 0 : index
    %c0_30 = arith.constant 0 : index
    %42 = vector.load %arg2[%c0_28, %c0_29, %c0_30] : memref<1x16x512xf32, #tpu.memory_space<vmem>>, vector<1x16x512xf32>
    %43 = vector.shape_cast %42 : vector<1x16x512xf32> to vector<16x512xf32>
    %44 = arith.addf %41, %43 : vector<16x512xf32>
    %45 = arith.truncf %44 : vector<16x512xf32> to vector<16x512xbf16>
    %c0_31 = arith.constant 0 : index
    %c0_32 = arith.constant 0 : index
    %46 = vector.load %arg10[%c0_31, %c0_32] : memref<512x512xbf16, #tpu.memory_space<vmem>>, vector<512x512xbf16>
    %c0_33 = arith.constant 0 : index
    %c0_34 = arith.constant 0 : index
    %47 = vector.load %arg11[%c0_33, %c0_34] : memref<512x512xbf16, #tpu.memory_space<vmem>>, vector<512x512xbf16>
    %c0_35 = arith.constant 0 : index
    %c0_36 = arith.constant 0 : index
    %48 = vector.load %arg12[%c0_35, %c0_36] : memref<512x512xbf16, #tpu.memory_space<vmem>>, vector<512x512xbf16>
    %49 = tpu.iota {dimensions = array<i32: 0>} : vector<16x16xi32>
    %50 = tpu.iota {dimensions = array<i32: 1>} : vector<16x16xi32>
    %c1_i32_37 = arith.constant 1 : i32
    %51 = vector.broadcast %c1_i32_37 : i32 to vector<16x16xi32>
    %52 = arith.subi %49, %51 : vector<16x16xi32>
    %53 = arith.cmpi eq, %50, %52 : vector<16x16xi32>
    %cst_38 = arith.constant 1.000000e+00 : f32
    %cst_39 = arith.constant 0.000000e+00 : f32
    %54 = vector.broadcast %cst_38 : f32 to vector<16x16xf32>
    %55 = vector.broadcast %cst_39 : f32 to vector<16x16xf32>
    %56 = arith.select %53, %54, %55 : vector<16x16xi1>, vector<16x16xf32>
    %57 = arith.truncf %56 : vector<16x16xf32> to vector<16x16xbf16>
    %c1_i32_40 = arith.constant 1 : i32
    %58 = vector.broadcast %c1_i32_40 : i32 to vector<16x16xi32>
    %59 = arith.addi %49, %58 : vector<16x16xi32>
    %60 = arith.cmpi eq, %50, %59 : vector<16x16xi32>
    %cst_41 = arith.constant 1.000000e+00 : f32
    %cst_42 = arith.constant 0.000000e+00 : f32
    %61 = vector.broadcast %cst_41 : f32 to vector<16x16xf32>
    %62 = vector.broadcast %cst_42 : f32 to vector<16x16xf32>
    %63 = arith.select %60, %61, %62 : vector<16x16xi1>, vector<16x16xf32>
    %64 = arith.truncf %63 : vector<16x16xf32> to vector<16x16xbf16>
    %cst_43 = arith.constant dense<0.000000e+00> : vector<16x512xf32>
    %65 = tpu.matmul %57, %45, %cst_43 {dimension_numbers = #tpu.dot_dimension_numbers<[1], [0], [0], [1], [0, 0, 1, 1], [], []>} : vector<16x16xbf16>, vector<16x512xbf16>, vector<16x512xf32> -> vector<16x512xf32>
    %66 = arith.truncf %65 : vector<16x512xf32> to vector<16x512xbf16>
    %cst_44 = arith.constant dense<0.000000e+00> : vector<16x512xf32>
    %67 = tpu.matmul %64, %45, %cst_44 {dimension_numbers = #tpu.dot_dimension_numbers<[1], [0], [0], [1], [0, 0, 1, 1], [], []>} : vector<16x16xbf16>, vector<16x512xbf16>, vector<16x512xf32> -> vector<16x512xf32>
    %68 = arith.truncf %67 : vector<16x512xf32> to vector<16x512xbf16>
    %cst_45 = arith.constant dense<0.000000e+00> : vector<16x512xf32>
    %69 = tpu.matmul %66, %46, %cst_45 {dimension_numbers = #tpu.dot_dimension_numbers<[1], [0], [0], [1], [0, 0, 1, 1], [], []>} : vector<16x512xbf16>, vector<512x512xbf16>, vector<16x512xf32> -> vector<16x512xf32>
    %cst_46 = arith.constant dense<0.000000e+00> : vector<16x512xf32>
    %70 = tpu.matmul %45, %47, %cst_46 {dimension_numbers = #tpu.dot_dimension_numbers<[1], [0], [0], [1], [0, 0, 1, 1], [], []>} : vector<16x512xbf16>, vector<512x512xbf16>, vector<16x512xf32> -> vector<16x512xf32>
    %71 = arith.addf %69, %70 : vector<16x512xf32>
    %cst_47 = arith.constant dense<0.000000e+00> : vector<16x512xf32>
    %72 = tpu.matmul %68, %48, %cst_47 {dimension_numbers = #tpu.dot_dimension_numbers<[1], [0], [0], [1], [0, 0, 1, 1], [], []>} : vector<16x512xbf16>, vector<512x512xbf16>, vector<16x512xf32> -> vector<16x512xf32>
    %73 = arith.addf %71, %72 : vector<16x512xf32>
    %c0_48 = arith.constant 0 : index
    %c0_49 = arith.constant 0 : index
    %74 = vector.load %arg13[%c0_48, %c0_49] : memref<1x512xf32, #tpu.memory_space<vmem>>, vector<1x512xf32>
    %75 = vector.broadcast %74 : vector<1x512xf32> to vector<16x512xf32>
    %76 = arith.mulf %73, %75 : vector<16x512xf32>
    %c0_50 = arith.constant 0 : index
    %c0_51 = arith.constant 0 : index
    %77 = vector.load %arg14[%c0_50, %c0_51] : memref<1x512xf32, #tpu.memory_space<vmem>>, vector<1x512xf32>
    %78 = vector.broadcast %77 : vector<1x512xf32> to vector<16x512xf32>
    %79 = arith.addf %76, %78 : vector<16x512xf32>
    %cst_52 = arith.constant 0.000000e+00 : f32
    %80 = vector.broadcast %cst_52 : f32 to vector<16x512xf32>
    %81 = arith.maximumf %79, %80 : vector<16x512xf32>
    %c0_53 = arith.constant 0 : index
    %c0_54 = arith.constant 0 : index
    %c0_55 = arith.constant 0 : index
    %82 = vector.load %arg15[%c0_53, %c0_54, %c0_55] : memref<1x16x512xf32, #tpu.memory_space<vmem>>, vector<1x16x512xf32>
    %83 = vector.shape_cast %82 : vector<1x16x512xf32> to vector<16x512xf32>
    %84 = vector.shape_cast %81 : vector<16x512xf32> to vector<1x16x512xf32>
    tpu.vector_store %arg15[%c0_53, %c0_54, %c0_55], %84 {strides = array<i32>} : memref<1x16x512xf32, #tpu.memory_space<vmem>>, vector<1x16x512xf32>,
    return
  }
  func.func @transform_0(%arg0: i32) -> (i32, i32, i32) {
    %c0_i32 = arith.constant 0 : i32
    %c0_i32_0 = arith.constant 0 : i32
    %c0_i32_1 = arith.constant 0 : i32
    return %arg0, %c0_i32, %c0_i32_0 : i32, i32, i32
  }
  func.func @transform_1(%arg0: i32) -> (i32, i32, i32) {
    %c0_i32 = arith.constant 0 : i32
    %c0_i32_0 = arith.constant 0 : i32
    %c0_i32_1 = arith.constant 0 : i32
    return %arg0, %c0_i32, %c0_i32_0 : i32, i32, i32
  }
  func.func @transform_2(%arg0: i32) -> (i32, i32) {
    %c0_i32 = arith.constant 0 : i32
    %c0_i32_0 = arith.constant 0 : i32
    %c0_i32_1 = arith.constant 0 : i32
    return %c0_i32, %c0_i32_0 : i32, i32
  }
  func.func @transform_3(%arg0: i32) -> (i32, i32) {
    %c0_i32 = arith.constant 0 : i32
    %c0_i32_0 = arith.constant 0 : i32
    %c0_i32_1 = arith.constant 0 : i32
    return %c0_i32, %c0_i32_0 : i32, i32
  }
  func.func @transform_4(%arg0: i32) -> (i32, i32) {
    %c0_i32 = arith.constant 0 : i32
    %c0_i32_0 = arith.constant 0 : i32
    %c0_i32_1 = arith.constant 0 : i32
    return %c0_i32, %c0_i32_0 : i32, i32
  }
  func.func @transform_5(%arg0: i32) -> (i32, i32) {
    %c0_i32 = arith.constant 0 : i32
    %c0_i32_0 = arith.constant 0 : i32
    %c0_i32_1 = arith.constant 0 : i32
    return %c0_i32, %c0_i32_0 : i32, i32
  }
  func.func @transform_6(%arg0: i32) -> (i32, i32) {
    %c0_i32 = arith.constant 0 : i32
    %c0_i32_0 = arith.constant 0 : i32
    %c0_i32_1 = arith.constant 0 : i32
    return %c0_i32, %c0_i32_0 : i32, i32
  }
  func.func @transform_7(%arg0: i32) -> (i32, i32) {
    %c0_i32 = arith.constant 0 : i32
    %c0_i32_0 = arith.constant 0 : i32
    %c0_i32_1 = arith.constant 0 : i32
    return %c0_i32, %c0_i32_0 : i32, i32
  }
  func.func @transform_8(%arg0: i32) -> (i32, i32) {
    %c0_i32 = arith.constant 0 : i32
    %c0_i32_0 = arith.constant 0 : i32
    %c0_i32_1 = arith.constant 0 : i32
    return %c0_i32, %c0_i32_0 : i32, i32
  }
  func.func @transform_9(%arg0: i32) -> (i32, i32) {
    %c0_i32 = arith.constant 0 : i32
    %c0_i32_0 = arith.constant 0 : i32
    %c0_i32_1 = arith.constant 0 : i32
    return %c0_i32, %c0_i32_0 : i32, i32
  }
  func.func @transform_10(%arg0: i32) -> (i32, i32) {
    %c0_i32 = arith.constant 0 : i32
    %c0_i32_0 = arith.constant 0 : i32
    %c0_i32_1 = arith.constant 0 : i32
    return %c0_i32, %c0_i32_0 : i32, i32
  }
  func.func @transform_11(%arg0: i32) -> (i32, i32) {
    %c0_i32 = arith.constant 0 : i32
    %c0_i32_0 = arith.constant 0 : i32
    %c0_i32_1 = arith.constant 0 : i32
    return %c0_i32, %c0_i32_0 : i32, i32
  }
  func.func @transform_12(%arg0: i32) -> (i32, i32) {
    %c0_i32 = arith.constant 0 : i32
    %c0_i32_0 = arith.constant 0 : i32
    %c0_i32_1 = arith.constant 0 : i32
    return %c0_i32, %c0_i32_0 : i32, i32
  }
  func.func @transform_13(%arg0: i32) -> (i32, i32) {
    %c0_i32 = arith.constant 0 : i32
    %c0_i32_0 = arith.constant 0 : i32
    %c0_i32_1 = arith.constant 0 : i32
    return %c0_i32, %c0_i32_0 : i32, i32
  }
  func.func @transform_14(%arg0: i32) -> (i32, i32, i32) {
    %c0_i32 = arith.constant 0 : i32
    %c0_i32_0 = arith.constant 0 : i32
    %c0_i32_1 = arith.constant 0 : i32
    return %arg0, %c0_i32, %c0_i32_0 : i32, i32, i32
  }
}

</mosaic_0001>

<llo_original>
// kernel: tpu_custom_call.1
$region0: #{tpu_custom_call.1}
  #allocation0 [shape = 'u32[]', space=smem, size = 0x4, offset = 0x4, fixed_abs, tag = 'smem constant byte address 0x4 - core index']
  #allocation1 [shape = 'u32[72,128]{1,0:T(1,128)}', space=vmem, size = 0x9000, scoped, tag = 'internal scratch']
  %s0 = inlined_call_operand.hbm [shape: bf16[2,8,512], index: 0, kind: input, shape index: {}]
  %s1 = inlined_call_operand.hbm [shape: f32[2,16,512], index: 1, kind: input, shape index: {}]
  %s2 = inlined_call_operand.hbm [shape: bf16[512,256], index: 2, kind: input, shape index: {}]
  %s3 = inlined_call_operand.hbm [shape: bf16[512,256], index: 3, kind: input, shape index: {}]
  %s4 = inlined_call_operand.hbm [shape: bf16[512,256], index: 4, kind: input, shape index: {}]
  %s5 = inlined_call_operand.vmem [shape: f32[1,256], index: 5, kind: input, shape index: {}]
  %s6 = inlined_call_operand.vmem [shape: f32[1,256], index: 6, kind: input, shape index: {}]
  %s7 = inlined_call_operand.vmem [shape: f32[16,8], index: 7, kind: input, shape index: {}]
  %s8 = inlined_call_operand.hbm [shape: f32[256,512], index: 8, kind: input, shape index: {}]
  %s9 = inlined_call_operand.hbm [shape: bf16[512,512], index: 9, kind: input, shape index: {}]
  %s10 = inlined_call_operand.hbm [shape: bf16[512,512], index: 10, kind: input, shape index: {}]
  %s11 = inlined_call_operand.hbm [shape: bf16[512,512], index: 11, kind: input, shape index: {}]
  %s12 = inlined_call_operand.vmem [shape: f32[1,512], index: 12, kind: input, shape index: {}]
  %s13 = inlined_call_operand.vmem [shape: f32[1,512], index: 13, kind: input, shape index: {}]
  %s14 = inlined_call_operand.hbm [shape: f32[2,16,512], index: 14, kind: output, shape index: {}]
  %s15 = sld [smem:[#allocation0]]
  $region125: #{tpu_custom_call.1} parent=0
    _
  %s17 = ssub.s32 1, %s15
  %s18 = scalar_select 0, %s17, %s15
  $region1: #{tpu_custom_call.1} parent=0
    #allocation2 [shape = 'u8[16384]{0}', space=vmem, size = 0x4000, scoped, tag = 'input window, operand 0']
    #allocation3 [shape = 's32[2]{0}', space=sflag, size = 0x8, scoped, tag = 'scoped memory for tpu_custom_call.1']
    #allocation4 [shape = 's32[2]{0}', space=sflag, size = 0x8, scoped, tag = 'scoped memory for tpu_custom_call.1']
    #allocation5 [shape = 'u8[65536]{0}', space=vmem, size = 0x10000, scoped, tag = 'input window, operand 1']
    #allocation6 [shape = 's32[2]{0}', space=sflag, size = 0x8, scoped, tag = 'scoped memory for tpu_custom_call.1']
    #allocation7 [shape = 'u8[262144]{0}', space=vmem, size = 0x40000, scoped, tag = 'input window, operand 2, single buffered']
    #allocation8 [shape = 'u8[262144]{0}', space=vmem, size = 0x40000, scoped, tag = 'input window, operand 3, single buffered']
    #allocation9 [shape = 's32[1]{0}', space=sflag, size = 0x4, scoped, tag = 'scoped memory for tpu_custom_call.1']
    #allocation10 [shape = 'u8[262144]{0}', space=vmem, size = 0x40000, scoped, tag = 'input window, operand 4, single buffered']
    #allocation11 [shape = 'u8[524288]{0}', space=vmem, size = 0x80000, scoped, tag = 'input window, operand 8, single buffered']
    #allocation12 [shape = 's32[1]{0}', space=sflag, size = 0x4, scoped, tag = 'scoped memory for tpu_custom_call.1']
    #allocation13 [shape = 'u8[524288]{0}', space=vmem, size = 0x80000, scoped, tag = 'input window, operand 9, single buffered']
    #allocation14 [shape = 'u8[524288]{0}', space=vmem, size = 0x80000, scoped, tag = 'input window, operand 10, single buffered']
    #allocation15 [shape = 's32[1]{0}', space=sflag, size = 0x4, scoped, tag = 'scoped memory for tpu_custom_call.1']
    #allocation16 [shape = 'u8[524288]{0}', space=vmem, size = 0x80000, scoped, tag = 'input window, operand 11, single buffered']
    #allocation17 [shape = 'u8[65536]{0}', space=vmem, size = 0x10000, scoped, tag = 'output window, operand 0']
    %19 = vsyncpa [#allocation3], 0
    %s20 = scalar_lea.sflag [#allocation3], 1
    %21 = vsyncpa %s20, 0
    %22 = vsyncpa [#allocation6], 0
    %s23 = scalar_lea.sflag [#allocation6], 1
    %24 = vsyncpa %s23, 0
    %25 = vsyncpa [#allocation9], 0
    %26 = vsyncpa [#allocation12], 0
    %27 = vsyncpa [#allocation15], 0
    %28 = vsyncpa [#allocation4], 0
    %s29 = scalar_lea.sflag [#allocation4], 1
    %30 = vsyncpa %s29, 0
    loop: start=0, step=1, limit=4
    $region2: #{tpu_custom_call.1} parent=1 // loop_pre_header
      _
    $region3: #{tpu_custom_call.1} parent=1 // loop_header
      %s32 = sphi 0, %s36
      %p33 = scmp.ge.s32.totalorder %s32, 4
      %s42 = sphi 0, %s44
      %s45 = sphi 0, %s42
      %s46 = sphi 0, %s45
      %s62 = sphi 0, %s46
      %s68 = sphi 0, %s70
      %s71 = sphi 0, %s68
      %s72 = sphi 0, %s71
      %s88 = sphi 0, %s72
      %s92 = sphi 0, %s92
      %s94 = sphi 0, %s92
      %s95 = sphi 0, %s94
      %s109 = sphi 0, %s95
      %s113 = sphi 0, %s113
      %s115 = sphi 0, %s113
      %s116 = sphi 0, %s115
      %s130 = sphi 0, %s116
      %s134 = sphi 0, %s134
      %s136 = sphi 0, %s134
      %s137 = sphi 0, %s136
      %s151 = sphi 0, %s137
      %s155 = sphi 0, %s155
      %s157 = sphi 0, %s155
      %s158 = sphi 0, %s157
      %s172 = sphi 0, %s158
      %s176 = sphi 0, %s176
      %s178 = sphi 0, %s176
      %s179 = sphi 0, %s178
      %s193 = sphi 0, %s179
      %s197 = sphi 0, %s197
      %s199 = sphi 0, %s197
      %s200 = sphi 0, %s199
      %s214 = sphi 0, %s200
      %s218 = sphi 0, %s218
      %s220 = sphi 0, %s218
      %s221 = sphi 0, %s220
      %s235 = sphi 0, %s221
      %s239 = sphi 0, %s239
      %s241 = sphi 0, %s239
      %s242 = sphi 0, %s241
      %s256 = sphi 0, %s242
      %s260 = sphi 0, %s260
      %s262 = sphi 0, %s260
      %s263 = sphi 0, %s262
      %s277 = sphi 0, %s263
      %s281 = sphi 0, %s281
      %s283 = sphi 0, %s281
      %s284 = sphi 0, %s283
      %s298 = sphi 0, %s284
      %s302 = sphi 0, %s302
      %s304 = sphi 0, %s302
      %s305 = sphi 0, %s304
      %s319 = sphi 0, %s305
      %s323 = sphi 0, %s323
      %s325 = sphi 0, %s323
      %s326 = sphi 0, %s325
      %s340 = sphi 0, %s326
      %s346 = sphi 0, %s348
      %s349 = sphi 0, %s346
      %s350 = sphi 0, %s349
      %s366 = sphi 0, %s350
    $region4: #{tpu_custom_call.1} parent=1 // loop_header_branch
      %35 = sbr.rel (%p33) target = $region8
    $region5: #{tpu_custom_call.1} parent=1 // loop_body
      %s37 = ssub.s32 %s32, 1
      %s38 = ssub.s32 %s32, 2
      %s39 = sadd.s32 %s32, 1
      %s40 = ssub.s32 %s32, %s39
      %p41 = scmp.eq.s32.totalorder %s40, 0
      %s43 = sadd.s32 %s42, 1
      %s44 = scalar_select %p41, %s42, %s43
      %p47 = pneg %p41
      %p48 = scmp.eq.s32.totalorder %s32, 1
      %p49 = por %p47, %p48
      %p50 = scmp.ne.s32.totalorder %s42, %s45
      %p51 = scmp.eq.s32.totalorder %s32, 0
      %p52 = por %p50, %p51
      %p53 = scmp.ne.s32.totalorder %s42, %s45
      %p54 = scmp.eq.s32.totalorder %s37, 1
      %p55 = por %p53, %p54
      %p56 = scmp.ne.s32.totalorder %s45, %s46
      %p57 = scmp.eq.s32.totalorder %s37, 0
      %p58 = por %p56, %p57
      %p59 = scmp.ne.s32.totalorder %s45, %s46
      %p60 = scmp.eq.s32.totalorder %s38, 1
      %p61 = por %p59, %p60
      %p63 = scmp.ne.s32.totalorder %s46, %s62
      %p64 = scmp.eq.s32.totalorder %s38, 0
      %p65 = por %p63, %p64
      %s66 = ssub.s32 %s32, %s39
      %p67 = scmp.eq.s32.totalorder %s66, 0
      %s69 = sadd.s32 %s68, 1
      %s70 = scalar_select %p67, %s68, %s69
      %p73 = pneg %p67
      %p74 = scmp.eq.s32.totalorder %s32, 1
      %p75 = por %p73, %p74
      %p76 = scmp.ne.s32.totalorder %s68, %s71
      %p77 = scmp.eq.s32.totalorder %s32, 0
      %p78 = por %p76, %p77
      %p79 = scmp.ne.s32.totalorder %s68, %s71
      %p80 = scmp.eq.s32.totalorder %s37, 1
      %p81 = por %p79, %p80
      %p82 = scmp.ne.s32.totalorder %s71, %s72
      %p83 = scmp.eq.s32.totalorder %s37, 0
      %p84 = por %p82, %p83
      %p85 = scmp.ne.s32.totalorder %s71, %s72
      %p86 = scmp.eq.s32.totalorder %s38, 1
      %p87 = por %p85, %p86
      %p89 = scmp.ne.s32.totalorder %s72, %s88
      %p90 = scmp.eq.s32.totalorder %s38, 0
      %p91 = por %p89, %p90
      %s93 = sadd.s32 %s92, 1
      %p96 = scmp.eq.s32.totalorder %s32, 1
      %p97 = scmp.ne.s32.totalorder %s92, %s94
      %p98 = scmp.eq.s32.totalorder %s32, 0
      %p99 = por %p97, %p98
      %p100 = scmp.ne.s32.totalorder %s92, %s94
      %p101 = scmp.eq.s32.totalorder %s37, 1
      %p102 = por %p100, %p101
      %p103 = scmp.ne.s32.totalorder %s94, %s95
      %p104 = scmp.eq.s32.totalorder %s37, 0
      %p105 = por %p103, %p104
      %p106 = scmp.ne.s32.totalorder %s94, %s95
      %p107 = scmp.eq.s32.totalorder %s38, 1
      %p108 = por %p106, %p107
      %p110 = scmp.ne.s32.totalorder %s95, %s109
      %p111 = scmp.eq.s32.totalorder %s38, 0
      %p112 = por %p110, %p111
      %s114 = sadd.s32 %s113, 1
      %p117 = scmp.eq.s32.totalorder %s32, 1
      %p118 = scmp.ne.s32.totalorder %s113, %s115
      %p119 = scmp.eq.s32.totalorder %s32, 0
      %p120 = por %p118, %p119
      %p121 = scmp.ne.s32.totalorder %s113, %s115
      %p122 = scmp.eq.s32.totalorder %s37, 1
      %p123 = por %p121, %p122
      %p124 = scmp.ne.s32.totalorder %s115, %s116
      %p125 = scmp.eq.s32.totalorder %s37, 0
      %p126 = por %p124, %p125
      %p127 = scmp.ne.s32.totalorder %s115, %s116
      %p128 = scmp.eq.s32.totalorder %s38, 1
      %p129 = por %p127, %p128
      %p131 = scmp.ne.s32.totalorder %s116, %s130
      %p132 = scmp.eq.s32.totalorder %s38, 0
      %p133 = por %p131, %p132
      %s135 = sadd.s32 %s134, 1
      %p138 = scmp.eq.s32.totalorder %s32, 1
      %p139 = scmp.ne.s32.totalorder %s134, %s136
      %p140 = scmp.eq.s32.totalorder %s32, 0
      %p141 = por %p139, %p140
      %p142 = scmp.ne.s32.totalorder %s134, %s136
      %p143 = scmp.eq.s32.totalorder %s37, 1
      %p144 = por %p142, %p143
      %p145 = scmp.ne.s32.totalorder %s136, %s137
      %p146 = scmp.eq.s32.totalorder %s37, 0
      %p147 = por %p145, %p146
      %p148 = scmp.ne.s32.totalorder %s136, %s137
      %p149 = scmp.eq.s32.totalorder %s38, 1
      %p150 = por %p148, %p149
      %p152 = scmp.ne.s32.totalorder %s137, %s151
      %p153 = scmp.eq.s32.totalorder %s38, 0
      %p154 = por %p152, %p153
      %s156 = sadd.s32 %s155, 1
      %p159 = scmp.eq.s32.totalorder %s32, 1
      %p160 = scmp.ne.s32.totalorder %s155, %s157
      %p161 = scmp.eq.s32.totalorder %s32, 0
      %p162 = por %p160, %p161
      %p163 = scmp.ne.s32.totalorder %s155, %s157
      %p164 = scmp.eq.s32.totalorder %s37, 1
      %p165 = por %p163, %p164
      %p166 = scmp.ne.s32.totalorder %s157, %s158
      %p167 = scmp.eq.s32.totalorder %s37, 0
      %p168 = por %p166, %p167
      %p169 = scmp.ne.s32.totalorder %s157, %s158
      %p170 = scmp.eq.s32.totalorder %s38, 1
      %p171 = por %p169, %p170
      %p173 = scmp.ne.s32.totalorder %s158, %s172
      %p174 = scmp.eq.s32.totalorder %s38, 0
      %p175 = por %p173, %p174
      %s177 = sadd.s32 %s176, 1
      %p180 = scmp.eq.s32.totalorder %s32, 1
      %p181 = scmp.ne.s32.totalorder %s176, %s178
      %p182 = scmp.eq.s32.totalorder %s32, 0
      %p183 = por %p181, %p182
      %p184 = scmp.ne.s32.totalorder %s176, %s178
      %p185 = scmp.eq.s32.totalorder %s37, 1
      %p186 = por %p184, %p185
      %p187 = scmp.ne.s32.totalorder %s178, %s179
      %p188 = scmp.eq.s32.totalorder %s37, 0
      %p189 = por %p187, %p188
      %p190 = scmp.ne.s32.totalorder %s178, %s179
      %p191 = scmp.eq.s32.totalorder %s38, 1
      %p192 = por %p190, %p191
      %p194 = scmp.ne.s32.totalorder %s179, %s193
      %p195 = scmp.eq.s32.totalorder %s38, 0
      %p196 = por %p194, %p195
      %s198 = sadd.s32 %s197, 1
      %p201 = scmp.eq.s32.totalorder %s32, 1
      %p202 = scmp.ne.s32.totalorder %s197, %s199
      %p203 = scmp.eq.s32.totalorder %s32, 0
      %p204 = por %p202, %p203
      %p205 = scmp.ne.s32.totalorder %s197, %s199
      %p206 = scmp.eq.s32.totalorder %s37, 1
      %p207 = por %p205, %p206
      %p208 = scmp.ne.s32.totalorder %s199, %s200
      %p209 = scmp.eq.s32.totalorder %s37, 0
      %p210 = por %p208, %p209
      %p211 = scmp.ne.s32.totalorder %s199, %s200
      %p212 = scmp.eq.s32.totalorder %s38, 1
      %p213 = por %p211, %p212
      %p215 = scmp.ne.s32.totalorder %s200, %s214
      %p216 = scmp.eq.s32.totalorder %s38, 0
      %p217 = por %p215, %p216
      %s219 = sadd.s32 %s218, 1
      %p222 = scmp.eq.s32.totalorder %s32, 1
      %p223 = scmp.ne.s32.totalorder %s218, %s220
      %p224 = scmp.eq.s32.totalorder %s32, 0
      %p225 = por %p223, %p224
      %p226 = scmp.ne.s32.totalorder %s218, %s220
      %p227 = scmp.eq.s32.totalorder %s37, 1
      %p228 = por %p226, %p227
      %p229 = scmp.ne.s32.totalorder %s220, %s221
      %p230 = scmp.eq.s32.totalorder %s37, 0
      %p231 = por %p229, %p230
      %p232 = scmp.ne.s32.totalorder %s220, %s221
      %p233 = scmp.eq.s32.totalorder %s38, 1
      %p234 = por %p232, %p233
      %p236 = scmp.ne.s32.totalorder %s221, %s235
      %p237 = scmp.eq.s32.totalorder %s38, 0
      %p238 = por %p236, %p237
      %s240 = sadd.s32 %s239, 1
      %p243 = scmp.eq.s32.totalorder %s32, 1
      %p244 = scmp.ne.s32.totalorder %s239, %s241
      %p245 = scmp.eq.s32.totalorder %s32, 0
      %p246 = por %p244, %p245
      %p247 = scmp.ne.s32.totalorder %s239, %s241
      %p248 = scmp.eq.s32.totalorder %s37, 1
      %p249 = por %p247, %p248
      %p250 = scmp.ne.s32.totalorder %s241, %s242
      %p251 = scmp.eq.s32.totalorder %s37, 0
      %p252 = por %p250, %p251
      %p253 = scmp.ne.s32.totalorder %s241, %s242
      %p254 = scmp.eq.s32.totalorder %s38, 1
      %p255 = por %p253, %p254
      %p257 = scmp.ne.s32.totalorder %s242, %s256
      %p258 = scmp.eq.s32.totalorder %s38, 0
      %p259 = por %p257, %p258
      %s261 = sadd.s32 %s260, 1
      %p264 = scmp.eq.s32.totalorder %s32, 1
      %p265 = scmp.ne.s32.totalorder %s260, %s262
      %p266 = scmp.eq.s32.totalorder %s32, 0
      %p267 = por %p265, %p266
      %p268 = scmp.ne.s32.totalorder %s260, %s262
      %p269 = scmp.eq.s32.totalorder %s37, 1
      %p270 = por %p268, %p269
      %p271 = scmp.ne.s32.totalorder %s262, %s263
      %p272 = scmp.eq.s32.totalorder %s37, 0
      %p273 = por %p271, %p272
      %p274 = scmp.ne.s32.totalorder %s262, %s263
      %p275 = scmp.eq.s32.totalorder %s38, 1
      %p276 = por %p274, %p275
      %p278 = scmp.ne.s32.totalorder %s263, %s277
      %p279 = scmp.eq.s32.totalorder %s38, 0
      %p280 = por %p278, %p279
      %s282 = sadd.s32 %s281, 1
      %p285 = scmp.eq.s32.totalorder %s32, 1
      %p286 = scmp.ne.s32.totalorder %s281, %s283
      %p287 = scmp.eq.s32.totalorder %s32, 0
      %p288 = por %p286, %p287
      %p289 = scmp.ne.s32.totalorder %s281, %s283
      %p290 = scmp.eq.s32.totalorder %s37, 1
      %p291 = por %p289, %p290
      %p292 = scmp.ne.s32.totalorder %s283, %s284
      %p293 = scmp.eq.s32.totalorder %s37, 0
      %p294 = por %p292, %p293
      %p295 = scmp.ne.s32.totalorder %s283, %s284
      %p296 = scmp.eq.s32.totalorder %s38, 1
      %p297 = por %p295, %p296
      %p299 = scmp.ne.s32.totalorder %s284, %s298
      %p300 = scmp.eq.s32.totalorder %s38, 0
      %p301 = por %p299, %p300
      %s303 = sadd.s32 %s302, 1
      %p306 = scmp.eq.s32.totalorder %s32, 1
      %p307 = scmp.ne.s32.totalorder %s302, %s304
      %p308 = scmp.eq.s32.totalorder %s32, 0
      %p309 = por %p307, %p308
      %p310 = scmp.ne.s32.totalorder %s302, %s304
      %p311 = scmp.eq.s32.totalorder %s37, 1
      %p312 = por %p310, %p311
      %p313 = scmp.ne.s32.totalorder %s304, %s305
      %p314 = scmp.eq.s32.totalorder %s37, 0
      %p315 = por %p313, %p314
      %p316 = scmp.ne.s32.totalorder %s304, %s305
      %p317 = scmp.eq.s32.totalorder %s38, 1
      %p318 = por %p316, %p317
      %p320 = scmp.ne.s32.totalorder %s305, %s319
      %p321 = scmp.eq.s32.totalorder %s38, 0
      %p322 = por %p320, %p321
      %s324 = sadd.s32 %s323, 1
      %p327 = scmp.eq.s32.totalorder %s32, 1
      %p328 = scmp.ne.s32.totalorder %s323, %s325
      %p329 = scmp.eq.s32.totalorder %s32, 0
      %p330 = por %p328, %p329
      %p331 = scmp.ne.s32.totalorder %s323, %s325
      %p332 = scmp.eq.s32.totalorder %s37, 1
      %p333 = por %p331, %p332
      %p334 = scmp.ne.s32.totalorder %s325, %s326
      %p335 = scmp.eq.s32.totalorder %s37, 0
      %p336 = por %p334, %p335
      %p337 = scmp.ne.s32.totalorder %s325, %s326
      %p338 = scmp.eq.s32.totalorder %s38, 1
      %p339 = por %p337, %p338
      %p341 = scmp.ne.s32.totalorder %s326, %s340
      %p342 = scmp.eq.s32.totalorder %s38, 0
      %p343 = por %p341, %p342
      %s344 = ssub.s32 %s32, %s39
      %p345 = scmp.eq.s32.totalorder %s344, 0
      %s347 = sadd.s32 %s346, 1
      %s348 = scalar_select %p345, %s346, %s347
      %p351 = pneg %p345
      %p352 = scmp.eq.s32.totalorder %s32, 1
      %p353 = por %p351, %p352
      %p354 = scmp.ne.s32.totalorder %s346, %s349
      %p355 = scmp.eq.s32.totalorder %s32, 0
      %p356 = por %p354, %p355
      %p357 = scmp.ne.s32.totalorder %s346, %s349
      %p358 = scmp.eq.s32.totalorder %s37, 1
      %p359 = por %p357, %p358
      %p360 = scmp.ne.s32.totalorder %s349, %s350
      %p361 = scmp.eq.s32.totalorder %s37, 0
      %p362 = por %p360, %p361
      %p363 = scmp.ne.s32.totalorder %s349, %s350
      %p364 = scmp.eq.s32.totalorder %s38, 1
      %p365 = por %p363, %p364
      %p367 = scmp.ne.s32.totalorder %s350, %s366
      %p368 = scmp.eq.s32.totalorder %s38, 0
      %p369 = por %p367, %p368
      %p370 = scmp.le.s32.totalorder 1, %s32
      %p371 = scmp.lt.s32.totalorder %s32, 3
      %p372 = pnand %p370, %p371
      %p373 = pneg %p372
      // Predicated region
      $region9: #{tpu_custom_call.1} parent=5 // pred_check
        _
      $region10: #{tpu_custom_call.1} parent=5 // pred_check_branch
        %375 = sbr.rel (%p372) target = $region12
      $region11: #{tpu_custom_call.1} parent=5 // pred_region
        %s376 = ssub.s32 %s32, 1
        // Predicated region
        $region13: #{tpu_custom_call.1} parent=11 // pred_check
          %p377 = pneg %p105
        $region14: #{tpu_custom_call.1} parent=11 // pred_check_branch
          %379 = sbr.rel (%p377) target = $region16
        $region15: #{tpu_custom_call.1} parent=11 // pred_region
          %381 = vsyncadd [#allocation6], 0
          %s382 = sshll.u32 %s2, 4
          %s383 = int_to_ptr.hbm [resolvable:$true] %s382
          %s384 = sshll.u32 [#allocation7], 4
          %s385 = int_to_ptr.vmem [resolvable:$true] %s384
          %390 = dma.hbm_to_vmem [thread:$0]  %s383, 8192, %s385, [#allocation6], 128, 128, 8
        $region16: #{tpu_custom_call.1} parent=11 // pred_fallthru
          _
        // Predicated region
        $region17: #{tpu_custom_call.1} parent=11 // pred_check
          %p391 = pneg %p126
        $region18: #{tpu_custom_call.1} parent=11 // pred_check_branch
          %393 = sbr.rel (%p391) target = $region20
        $region19: #{tpu_custom_call.1} parent=11 // pred_region
          %395 = vsyncadd [#allocation9], 0
          %s396 = sshll.u32 %s3, 4
          %s397 = int_to_ptr.hbm [resolvable:$true] %s396
          %s398 = sshll.u32 [#allocation8], 4
          %s399 = int_to_ptr.vmem [resolvable:$true] %s398
          %404 = dma.hbm_to_vmem [thread:$0]  %s397, 8192, %s399, [#allocation9], 128, 128, 8
        $region20: #{tpu_custom_call.1} parent=11 // pred_fallthru
          _
        // Predicated region
        $region21: #{tpu_custom_call.1} parent=11 // pred_check
          %p405 = pneg %p147
        $region22: #{tpu_custom_call.1} parent=11 // pred_check_branch
          %407 = sbr.rel (%p405) target = $region24
        $region23: #{tpu_custom_call.1} parent=11 // pred_region
          %409 = vsyncadd [#allocation9], 0
          %s410 = sshll.u32 %s4, 4
          %s411 = int_to_ptr.hbm [resolvable:$true] %s410
          %s412 = sshll.u32 [#allocation10], 4
          %s413 = int_to_ptr.vmem [resolvable:$true] %s412
          %418 = dma.hbm_to_vmem [thread:$0]  %s411, 8192, %s413, [#allocation9], 128, 128, 8
        $region24: #{tpu_custom_call.1} parent=11 // pred_fallthru
          _
        // Predicated region
        $region25: #{tpu_custom_call.1} parent=11 // pred_check
          %p419 = pneg %p168
        $region26: #{tpu_custom_call.1} parent=11 // pred_check_branch
          %421 = sbr.rel (%p419) target = $region28
        $region27: #{tpu_custom_call.1} parent=11 // pred_region
          _
        $region28: #{tpu_custom_call.1} parent=11 // pred_fallthru
          _
        // Predicated region
        $region29: #{tpu_custom_call.1} parent=11 // pred_check
          %p422 = pneg %p189
        $region30: #{tpu_custom_call.1} parent=11 // pred_check_branch
          %424 = sbr.rel (%p422) target = $region32
        $region31: #{tpu_custom_call.1} parent=11 // pred_region
          _
        $region32: #{tpu_custom_call.1} parent=11 // pred_fallthru
          _
        // Predicated region
        $region33: #{tpu_custom_call.1} parent=11 // pred_check
          %p425 = pneg %p210
        $region34: #{tpu_custom_call.1} parent=11 // pred_check_branch
          %427 = sbr.rel (%p425) target = $region36
        $region35: #{tpu_custom_call.1} parent=11 // pred_region
          _
        $region36: #{tpu_custom_call.1} parent=11 // pred_fallthru
          _
        // Predicated region
        $region37: #{tpu_custom_call.1} parent=11 // pred_check
          %p428 = pneg %p231
        $region38: #{tpu_custom_call.1} parent=11 // pred_check_branch
          %430 = sbr.rel (%p428) target = $region40
        $region39: #{tpu_custom_call.1} parent=11 // pred_region
          %432 = vsyncadd [#allocation12], 0
          %s433 = sshll.u32 %s8, 4
          %s434 = int_to_ptr.hbm [resolvable:$true] %s433
          %s435 = sshll.u32 [#allocation11], 4
          %s436 = int_to_ptr.vmem [resolvable:$true] %s435
          %441 = dma.hbm_to_vmem [thread:$0]  %s434, 16384, %s436, [#allocation12], 512, 512, 32
        $region40: #{tpu_custom_call.1} parent=11 // pred_fallthru
          _
        // Predicated region
        $region41: #{tpu_custom_call.1} parent=11 // pred_check
          %p442 = pneg %p252
        $region42: #{tpu_custom_call.1} parent=11 // pred_check_branch
          %444 = sbr.rel (%p442) target = $region44
        $region43: #{tpu_custom_call.1} parent=11 // pred_region
          %446 = vsyncadd [#allocation12], 0
          %s447 = sshll.u32 %s9, 4
          %s448 = int_to_ptr.hbm [resolvable:$true] %s447
          %s449 = sshll.u32 [#allocation13], 4
          %s450 = int_to_ptr.vmem [resolvable:$true] %s449
          %455 = dma.hbm_to_vmem [thread:$0]  %s448, 16384, %s450, [#allocation12], 256, 256, 16
        $region44: #{tpu_custom_call.1} parent=11 // pred_fallthru
          _
        // Predicated region
        $region45: #{tpu_custom_call.1} parent=11 // pred_check
          %p456 = pneg %p273
        $region46: #{tpu_custom_call.1} parent=11 // pred_check_branch
          %458 = sbr.rel (%p456) target = $region48
        $region47: #{tpu_custom_call.1} parent=11 // pred_region
          %460 = vsyncadd [#allocation15], 0
          %s461 = sshll.u32 %s10, 4
          %s462 = int_to_ptr.hbm [resolvable:$true] %s461
          %s463 = sshll.u32 [#allocation14], 4
          %s464 = int_to_ptr.vmem [resolvable:$true] %s463
          %469 = dma.hbm_to_vmem [thread:$0]  %s462, 16384, %s464, [#allocation15], 256, 256, 16
        $region48: #{tpu_custom_call.1} parent=11 // pred_fallthru
          _
        // Predicated region
        $region49: #{tpu_custom_call.1} parent=11 // pred_check
          %p470 = pneg %p294
        $region50: #{tpu_custom_call.1} parent=11 // pred_check_branch
          %472 = sbr.rel (%p470) target = $region52
        $region51: #{tpu_custom_call.1} parent=11 // pred_region
          %474 = vsyncadd [#allocation15], 0
          %s475 = sshll.u32 %s11, 4
          %s476 = int_to_ptr.hbm [resolvable:$true] %s475
          %s477 = sshll.u32 [#allocation16], 4
          %s478 = int_to_ptr.vmem [resolvable:$true] %s477
          %483 = dma.hbm_to_vmem [thread:$0]  %s476, 16384, %s478, [#allocation15], 256, 256, 16
        $region52: #{tpu_custom_call.1} parent=11 // pred_fallthru
          _
        // Predicated region
        $region53: #{tpu_custom_call.1} parent=11 // pred_check
          %p484 = pneg %p315
        $region54: #{tpu_custom_call.1} parent=11 // pred_check_branch
          %486 = sbr.rel (%p484) target = $region56
        $region55: #{tpu_custom_call.1} parent=11 // pred_region
          _
        $region56: #{tpu_custom_call.1} parent=11 // pred_fallthru
          _
        // Predicated region
        $region57: #{tpu_custom_call.1} parent=11 // pred_check
          %p487 = pneg %p336
        $region58: #{tpu_custom_call.1} parent=11 // pred_check_branch
          %489 = sbr.rel (%p487) target = $region60
        $region59: #{tpu_custom_call.1} parent=11 // pred_region
          _
        $region60: #{tpu_custom_call.1} parent=11 // pred_fallthru
          _
      $region12: #{tpu_custom_call.1} parent=5 // pred_fallthru
        _
      %p490 = scmp.lt.s32.totalorder %s32, 2
      // Predicated region
      $region61: #{tpu_custom_call.1} parent=5 // pred_check
        %p491 = pneg %p490
      $region62: #{tpu_custom_call.1} parent=5 // pred_check_branch
        %493 = sbr.rel (%p491) target = $region64
      $region63: #{tpu_custom_call.1} parent=5 // pred_region
        // Predicated region
        $region65: #{tpu_custom_call.1} parent=63 // pred_check
          %p494 = pneg %p52
        $region66: #{tpu_custom_call.1} parent=63 // pred_check_branch
          %496 = sbr.rel (%p494) target = $region68
        $region67: #{tpu_custom_call.1} parent=63 // pred_region
          %s497 = sand.u32 %s42, 1
          %s498 = scalar_lea.sflag [#allocation3], %s497
          %s499 = sand.u32 %s42, 1
          %s500 = smul.addr %s499, 16
          %s501 = scalar_lea.vmem [#allocation2], %s500
          %503 = vsyncadd %s498, 0
          %s504 = smul.addr %s32, 4
          %s505 = smul.addr %s504, 4
          %s506 = scalar_lea.hbm %s0, %s505
          %s508 = sshll.u32 %s506, 4
          %s509 = int_to_ptr.hbm [resolvable:$true] %s508
          %s510 = sshll.u32 %s501, 4
          %s511 = int_to_ptr.vmem [resolvable:$true] %s510
          %513 = dma.hbm_to_vmem [thread:$0]  %s509, 256, %s511, %s498
        $region68: #{tpu_custom_call.1} parent=63 // pred_fallthru
          _
        // Predicated region
        $region69: #{tpu_custom_call.1} parent=63 // pred_check
          %p514 = pneg %p78
        $region70: #{tpu_custom_call.1} parent=63 // pred_check_branch
          %516 = sbr.rel (%p514) target = $region72
        $region71: #{tpu_custom_call.1} parent=63 // pred_region
          %s517 = sand.u32 %s32, 1
          %s518 = scalar_lea.sflag [#allocation6], %s517
          %s519 = sand.u32 %s68, 1
          %s520 = smul.addr %s519, 64
          %s521 = scalar_lea.vmem [#allocation5], %s520
          %523 = vsyncadd %s518, 0
          %s524 = smul.addr %s32, 8
          %s525 = smul.addr %s524, 8
          %s526 = scalar_lea.hbm %s1, %s525
          %s527 = sshll.u32 %s526, 4
          %s528 = int_to_ptr.hbm [resolvable:$true] %s527
          %s529 = sshll.u32 %s521, 4
          %s530 = int_to_ptr.vmem [resolvable:$true] %s529
          %535 = dma.hbm_to_vmem [thread:$0]  %s528, 1024, %s530, %s518, 512, 512, 32
        $region72: #{tpu_custom_call.1} parent=63 // pred_fallthru
          _
      $region64: #{tpu_custom_call.1} parent=5 // pred_fallthru
        _
      %p536 = scmp.le.s32.totalorder 1, %s32
      %p537 = scmp.lt.s32.totalorder %s32, 3
      %p538 = pnand %p536, %p537
      %p539 = pneg %p538
      // Predicated region
      $region73: #{tpu_custom_call.1} parent=5 // pred_check
        _
      $region74: #{tpu_custom_call.1} parent=5 // pred_check_branch
        %541 = sbr.rel (%p538) target = $region76
      $region75: #{tpu_custom_call.1} parent=5 // pred_region
        %s542 = ssub.s32 %s32, 1
        %s543 = sand.u32 %s45, 1
        %s544 = scalar_lea.sflag [#allocation3], %s543
        %s545 = sand.u32 %s45, 1
        %s546 = smul.addr %s545, 16
        %s547 = scalar_lea.vmem [#allocation2], %s546
        // Predicated region
        $region77: #{tpu_custom_call.1} parent=75 // pred_check
          %p548 = pneg %p58
        $region78: #{tpu_custom_call.1} parent=75 // pred_check_branch
          %550 = sbr.rel (%p548) target = $region80
        $region79: #{tpu_custom_call.1} parent=75 // pred_region
          %552 = dma.done %s544, 256
        $region80: #{tpu_custom_call.1} parent=75 // pred_fallthru
          _
        %s553 = sand.u32 %s37, 1
        %s554 = scalar_lea.sflag [#allocation6], %s553
        %s555 = sand.u32 %s71, 1
        %s556 = smul.addr %s555, 64
        %s557 = scalar_lea.vmem [#allocation5], %s556
        // Predicated region
        $region81: #{tpu_custom_call.1} parent=75 // pred_check
          %p558 = pneg %p84
        $region82: #{tpu_custom_call.1} parent=75 // pred_check_branch
          %560 = sbr.rel (%p558) target = $region84
        $region83: #{tpu_custom_call.1} parent=75 // pred_region
          %562 = dma.done %s554, 1024
        $region84: #{tpu_custom_call.1} parent=75 // pred_fallthru
          _
        // Predicated region
        $region85: #{tpu_custom_call.1} parent=75 // pred_check
          %p563 = pneg %p105
        $region86: #{tpu_custom_call.1} parent=75 // pred_check_branch
          %565 = sbr.rel (%p563) target = $region88
        $region87: #{tpu_custom_call.1} parent=75 // pred_region
          %567 = dma.done [#allocation6], 8192
        $region88: #{tpu_custom_call.1} parent=75 // pred_fallthru
          _
        // Predicated region
        $region89: #{tpu_custom_call.1} parent=75 // pred_check
          %p568 = pneg %p126
        $region90: #{tpu_custom_call.1} parent=75 // pred_check_branch
          %570 = sbr.rel (%p568) target = $region92
        $region91: #{tpu_custom_call.1} parent=75 // pred_region
          %572 = dma.done [#allocation9], 8192
        $region92: #{tpu_custom_call.1} parent=75 // pred_fallthru
          _
        // Predicated region
        $region93: #{tpu_custom_call.1} parent=75 // pred_check
          %p573 = pneg %p147
        $region94: #{tpu_custom_call.1} parent=75 // pred_check_branch
          %575 = sbr.rel (%p573) target = $region96
        $region95: #{tpu_custom_call.1} parent=75 // pred_region
          %577 = dma.done [#allocation9], 8192
        $region96: #{tpu_custom_call.1} parent=75 // pred_fallthru
          _
        // Predicated region
        $region97: #{tpu_custom_call.1} parent=75 // pred_check
          %p578 = pneg %p231
        $region98: #{tpu_custom_call.1} parent=75 // pred_check_branch
          %580 = sbr.rel (%p578) target = $region100
        $region99: #{tpu_custom_call.1} parent=75 // pred_region
          %582 = dma.done [#allocation12], 16384
        $region100: #{tpu_custom_call.1} parent=75 // pred_fallthru
          _
        // Predicated region
        $region101: #{tpu_custom_call.1} parent=75 // pred_check
          %p583 = pneg %p252
        $region102: #{tpu_custom_call.1} parent=75 // pred_check_branch
          %585 = sbr.rel (%p583) target = $region104
        $region103: #{tpu_custom_call.1} parent=75 // pred_region
          %587 = dma.done [#allocation12], 16384
        $region104: #{tpu_custom_call.1} parent=75 // pred_fallthru
          _
        // Predicated region
        $region105: #{tpu_custom_call.1} parent=75 // pred_check
          %p588 = pneg %p273
        $region106: #{tpu_custom_call.1} parent=75 // pred_check_branch
          %590 = sbr.rel (%p588) target = $region108
        $region107: #{tpu_custom_call.1} parent=75 // pred_region
          %592 = dma.done [#allocation15], 16384
        $region108: #{tpu_custom_call.1} parent=75 // pred_fallthru
          _
        // Predicated region
        $region109: #{tpu_custom_call.1} parent=75 // pred_check
          %p593 = pneg %p294
        $region110: #{tpu_custom_call.1} parent=75 // pred_check_branch
          %595 = sbr.rel (%p593) target = $region112
        $region111: #{tpu_custom_call.1} parent=75 // pred_region
          %597 = dma.done [#allocation15], 16384
        $region112: #{tpu_custom_call.1} parent=75 // pred_fallthru
          _
        %s598 = sand.u32 %s45, 1
        %s599 = scalar_lea.sflag [#allocation3], %s598
        %s600 = sand.u32 %s45, 1
        %s601 = smul.addr %s600, 16
        %s602 = scalar_lea.vmem [#allocation2], %s601
        %p603 = pneg %p58
        %p604 = pneg %p55
        %s605 = sand.u32 %s37, 1
        %s606 = scalar_lea.sflag [#allocation6], %s605
        %s607 = sand.u32 %s71, 1
        %s608 = smul.addr %s607, 64
        %s609 = scalar_lea.vmem [#allocation5], %s608
        %p610 = pneg %p84
        %p611 = pneg %p81
        %p612 = pneg %p105
        %p613 = pneg %p102
        %p614 = pneg %p126
        %p615 = pneg %p123
        %p616 = pneg %p147
        %p617 = pneg %p144
        %p618 = pneg %p168
        %p619 = pneg %p165
        %p620 = pneg %p189
        %p621 = pneg %p186
        %p622 = pneg %p210
        %p623 = pneg %p207
        %p624 = pneg %p231
        %p625 = pneg %p228
        %p626 = pneg %p252
        %p627 = pneg %p249
        %p628 = pneg %p273
        %p629 = pneg %p270
        %p630 = pneg %p294
        %p631 = pneg %p291
        %p632 = pneg %p315
        %p633 = pneg %p312
        %p634 = pneg %p336
        %p635 = pneg %p333
        %p636 = pneg %p362
        %p637 = pneg %p359
        %s638 = sand.u32 %s349, 1
        %s639 = scalar_lea.sflag [#allocation4], %s638
        %s640 = sand.u32 %s349, 1
        %s641 = smul.addr %s640, 64
        %s642 = scalar_lea.vmem [#allocation17], %s641
        %v644 = vld [vmem:[%s547] sm:$0xff]
        %v645 = vld [vmem:[%s547 + $0x8] sm:$0xff]
        %v646 = vld [vmem:[#allocation7] sm:$0xff]
        %v647 = vld [vmem:[#allocation7 + $0x8] sm:$0xff]
        %v648 = vld [vmem:[#allocation7 + $0x10] sm:$0xff]
        %v649 = vld [vmem:[#allocation7 + $0x18] sm:$0xff]
        %v650 = vld [vmem:[#allocation7 + $0x20] sm:$0xff]
        %v651 = vld [vmem:[#allocation7 + $0x28] sm:$0xff]
        %v652 = vld [vmem:[#allocation7 + $0x30] sm:$0xff]
        %v653 = vld [vmem:[#allocation7 + $0x38] sm:$0xff]
        %v654 = vld [vmem:[#allocation7 + $0x40] sm:$0xff]
        %v655 = vld [vmem:[#allocation7 + $0x48] sm:$0xff]
        %v656 = vld [vmem:[#allocation7 + $0x50] sm:$0xff]
        %v657 = vld [vmem:[#allocation7 + $0x58] sm:$0xff]
        %v658 = vld [vmem:[#allocation7 + $0x60] sm:$0xff]
        %v659 = vld [vmem:[#allocation7 + $0x68] sm:$0xff]
        %v660 = vld [vmem:[#allocation7 + $0x70] sm:$0xff]
        %v661 = vld [vmem:[#allocation7 + $0x78] sm:$0xff]
        %v662 = vld [vmem:[#allocation7 + $0x80] sm:$0xff]
        %v663 = vld [vmem:[#allocation7 + $0x88] sm:$0xff]
        %v664 = vld [vmem:[#allocation7 + $0x90] sm:$0xff]
        %v665 = vld [vmem:[#allocation7 + $0x98] sm:$0xff]
        %v666 = vld [vmem:[#allocation7 + $0xa0] sm:$0xff]
        %v667 = vld [vmem:[#allocation7 + $0xa8] sm:$0xff]
        %v668 = vld [vmem:[#allocation7 + $0xb0] sm:$0xff]
        %v669 = vld [vmem:[#allocation7 + $0xb8] sm:$0xff]
        %v670 = vld [vmem:[#allocation7 + $0xc0] sm:$0xff]
        %v671 = vld [vmem:[#allocation7 + $0xc8] sm:$0xff]
        %v672 = vld [vmem:[#allocation7 + $0xd0] sm:$0xff]
        %v673 = vld [vmem:[#allocation7 + $0xd8] sm:$0xff]
        %v674 = vld [vmem:[#allocation7 + $0xe0] sm:$0xff]
        %v675 = vld [vmem:[#allocation7 + $0xe8] sm:$0xff]
        %v676 = vld [vmem:[#allocation7 + $0xf0] sm:$0xff]
        %v677 = vld [vmem:[#allocation7 + $0xf8] sm:$0xff]
        %v678 = vld [vmem:[#allocation7 + $0x100] sm:$0xff]
        %v679 = vld [vmem:[#allocation7 + $0x108] sm:$0xff]
        %v680 = vld [vmem:[#allocation7 + $0x110] sm:$0xff]
        %v681 = vld [vmem:[#allocation7 + $0x118] sm:$0xff]
        %v682 = vld [vmem:[#allocation7 + $0x120] sm:$0xff]
        %v683 = vld [vmem:[#allocation7 + $0x128] sm:$0xff]
        %v684 = vld [vmem:[#allocation7 + $0x130] sm:$0xff]
        %v685 = vld [vmem:[#allocation7 + $0x138] sm:$0xff]
        %v686 = vld [vmem:[#allocation7 + $0x140] sm:$0xff]
        %v687 = vld [vmem:[#allocation7 + $0x148] sm:$0xff]
        %v688 = vld [vmem:[#allocation7 + $0x150] sm:$0xff]
        %v689 = vld [vmem:[#allocation7 + $0x158] sm:$0xff]
        %v690 = vld [vmem:[#allocation7 + $0x160] sm:$0xff]
        %v691 = vld [vmem:[#allocation7 + $0x168] sm:$0xff]
        %v692 = vld [vmem:[#allocation7 + $0x170] sm:$0xff]
        %v693 = vld [vmem:[#allocation7 + $0x178] sm:$0xff]
        %v694 = vld [vmem:[#allocation7 + $0x180] sm:$0xff]
        %v695 = vld [vmem:[#allocation7 + $0x188] sm:$0xff]
        %v696 = vld [vmem:[#allocation7 + $0x190] sm:$0xff]
        %v697 = vld [vmem:[#allocation7 + $0x198] sm:$0xff]
        %v698 = vld [vmem:[#allocation7 + $0x1a0] sm:$0xff]
        %v699 = vld [vmem:[#allocation7 + $0x1a8] sm:$0xff]
        %v700 = vld [vmem:[#allocation7 + $0x1b0] sm:$0xff]
        %v701 = vld [vmem:[#allocation7 + $0x1b8] sm:$0xff]
        %v702 = vld [vmem:[#allocation7 + $0x1c0] sm:$0xff]
        %v703 = vld [vmem:[#allocation7 + $0x1c8] sm:$0xff]
        %v704 = vld [vmem:[#allocation7 + $0x1d0] sm:$0xff]
        %v705 = vld [vmem:[#allocation7 + $0x1d8] sm:$0xff]
        %v706 = vld [vmem:[#allocation7 + $0x1e0] sm:$0xff]
        %v707 = vld [vmem:[#allocation7 + $0x1e8] sm:$0xff]
        %v708 = vld [vmem:[#allocation7 + $0x1f0] sm:$0xff]
        %v709 = vld [vmem:[#allocation7 + $0x1f8] sm:$0xff]
        %v710 = vld [vmem:[#allocation8] sm:$0xff]
        %v711 = vld [vmem:[#allocation8 + $0x8] sm:$0xff]
        %v712 = vld [vmem:[#allocation8 + $0x10] sm:$0xff]
        %v713 = vld [vmem:[#allocation8 + $0x18] sm:$0xff]
        %v714 = vld [vmem:[#allocation8 + $0x20] sm:$0xff]
        %v715 = vld [vmem:[#allocation8 + $0x28] sm:$0xff]
        %v716 = vld [vmem:[#allocation8 + $0x30] sm:$0xff]
        %v717 = vld [vmem:[#allocation8 + $0x38] sm:$0xff]
        %v718 = vld [vmem:[#allocation8 + $0x40] sm:$0xff]
        %v719 = vld [vmem:[#allocation8 + $0x48] sm:$0xff]
        %v720 = vld [vmem:[#allocation8 + $0x50] sm:$0xff]
        %v721 = vld [vmem:[#allocation8 + $0x58] sm:$0xff]
        %v722 = vld [vmem:[#allocation8 + $0x60] sm:$0xff]
        %v723 = vld [vmem:[#allocation8 + $0x68] sm:$0xff]
        %v724 = vld [vmem:[#allocation8 + $0x70] sm:$0xff]
        %v725 = vld [vmem:[#allocation8 + $0x78] sm:$0xff]
        %v726 = vld [vmem:[#allocation8 + $0x80] sm:$0xff]
        %v727 = vld [vmem:[#allocation8 + $0x88] sm:$0xff]
        %v728 = vld [vmem:[#allocation8 + $0x90] sm:$0xff]
        %v729 = vld [vmem:[#allocation8 + $0x98] sm:$0xff]
        %v730 = vld [vmem:[#allocation8 + $0xa0] sm:$0xff]
        %v731 = vld [vmem:[#allocation8 + $0xa8] sm:$0xff]
        %v732 = vld [vmem:[#allocation8 + $0xb0] sm:$0xff]
        %v733 = vld [vmem:[#allocation8 + $0xb8] sm:$0xff]
        %v734 = vld [vmem:[#allocation8 + $0xc0] sm:$0xff]
        %v735 = vld [vmem:[#allocation8 + $0xc8] sm:$0xff]
        %v736 = vld [vmem:[#allocation8 + $0xd0] sm:$0xff]
        %v737 = vld [vmem:[#allocation8 + $0xd8] sm:$0xff]
        %v738 = vld [vmem:[#allocation8 + $0xe0] sm:$0xff]
        %v739 = vld [vmem:[#allocation8 + $0xe8] sm:$0xff]
        %v740 = vld [vmem:[#allocation8 + $0xf0] sm:$0xff]
        %v741 = vld [vmem:[#allocation8 + $0xf8] sm:$0xff]
        %v742 = vld [vmem:[#allocation8 + $0x100] sm:$0xff]
        %v743 = vld [vmem:[#allocation8 + $0x108] sm:$0xff]
        %v744 = vld [vmem:[#allocation8 + $0x110] sm:$0xff]
        %v745 = vld [vmem:[#allocation8 + $0x118] sm:$0xff]
        %v746 = vld [vmem:[#allocation8 + $0x120] sm:$0xff]
        %v747 = vld [vmem:[#allocation8 + $0x128] sm:$0xff]
        %v748 = vld [vmem:[#allocation8 + $0x130] sm:$0xff]
        %v749 = vld [vmem:[#allocation8 + $0x138] sm:$0xff]
        %v750 = vld [vmem:[#allocation8 + $0x140] sm:$0xff]
        %v751 = vld [vmem:[#allocation8 + $0x148] sm:$0xff]
        %v752 = vld [vmem:[#allocation8 + $0x150] sm:$0xff]
        %v753 = vld [vmem:[#allocation8 + $0x158] sm:$0xff]
        %v754 = vld [vmem:[#allocation8 + $0x160] sm:$0xff]
        %v755 = vld [vmem:[#allocation8 + $0x168] sm:$0xff]
        %v756 = vld [vmem:[#allocation8 + $0x170] sm:$0xff]
        %v757 = vld [vmem:[#allocation8 + $0x178] sm:$0xff]
        %v758 = vld [vmem:[#allocation8 + $0x180] sm:$0xff]
        %v759 = vld [vmem:[#allocation8 + $0x188] sm:$0xff]
        %v760 = vld [vmem:[#allocation8 + $0x190] sm:$0xff]
        %v761 = vld [vmem:[#allocation8 + $0x198] sm:$0xff]
        %v762 = vld [vmem:[#allocation8 + $0x1a0] sm:$0xff]
        %v763 = vld [vmem:[#allocation8 + $0x1a8] sm:$0xff]
        %v764 = vld [vmem:[#allocation8 + $0x1b0] sm:$0xff]
        %v765 = vld [vmem:[#allocation8 + $0x1b8] sm:$0xff]
        %v766 = vld [vmem:[#allocation8 + $0x1c0] sm:$0xff]
        %v767 = vld [vmem:[#allocation8 + $0x1c8] sm:$0xff]
        %v768 = vld [vmem:[#allocation8 + $0x1d0] sm:$0xff]
        %v769 = vld [vmem:[#allocation8 + $0x1d8] sm:$0xff]
        %v770 = vld [vmem:[#allocation8 + $0x1e0] sm:$0xff]
        %v771 = vld [vmem:[#allocation8 + $0x1e8] sm:$0xff]
        %v772 = vld [vmem:[#allocation8 + $0x1f0] sm:$0xff]
        %v773 = vld [vmem:[#allocation8 + $0x1f8] sm:$0xff]
        %v774 = vld [vmem:[#allocation10] sm:$0xff]
        %v775 = vld [vmem:[#allocation10 + $0x8] sm:$0xff]
        %v776 = vld [vmem:[#allocation10 + $0x10] sm:$0xff]
        %v777 = vld [vmem:[#allocation10 + $0x18] sm:$0xff]
        %v778 = vld [vmem:[#allocation10 + $0x20] sm:$0xff]
        %v779 = vld [vmem:[#allocation10 + $0x28] sm:$0xff]
        %v780 = vld [vmem:[#allocation10 + $0x30] sm:$0xff]
        %v781 = vld [vmem:[#allocation10 + $0x38] sm:$0xff]
        %v782 = vld [vmem:[#allocation10 + $0x40] sm:$0xff]
        %v783 = vld [vmem:[#allocation10 + $0x48] sm:$0xff]
        %v784 = vld [vmem:[#allocation10 + $0x50] sm:$0xff]
        %v785 = vld [vmem:[#allocation10 + $0x58] sm:$0xff]
        %v786 = vld [vmem:[#allocation10 + $0x60] sm:$0xff]
        %v787 = vld [vmem:[#allocation10 + $0x68] sm:$0xff]
        %v788 = vld [vmem:[#allocation10 + $0x70] sm:$0xff]
        %v789 = vld [vmem:[#allocation10 + $0x78] sm:$0xff]
        %v790 = vld [vmem:[#allocation10 + $0x80] sm:$0xff]
        %v791 = vld [vmem:[#allocation10 + $0x88] sm:$0xff]
        %v792 = vld [vmem:[#allocation10 + $0x90] sm:$0xff]
        %v793 = vld [vmem:[#allocation10 + $0x98] sm:$0xff]
        %v794 = vld [vmem:[#allocation10 + $0xa0] sm:$0xff]
        %v795 = vld [vmem:[#allocation10 + $0xa8] sm:$0xff]
        %v796 = vld [vmem:[#allocation10 + $0xb0] sm:$0xff]
        %v797 = vld [vmem:[#allocation10 + $0xb8] sm:$0xff]
        %v798 = vld [vmem:[#allocation10 + $0xc0] sm:$0xff]
        %v799 = vld [vmem:[#allocation10 + $0xc8] sm:$0xff]
        %v800 = vld [vmem:[#allocation10 + $0xd0] sm:$0xff]
        %v801 = vld [vmem:[#allocation10 + $0xd8] sm:$0xff]
        %v802 = vld [vmem:[#allocation10 + $0xe0] sm:$0xff]
        %v803 = vld [vmem:[#allocation10 + $0xe8] sm:$0xff]
        %v804 = vld [vmem:[#allocation10 + $0xf0] sm:$0xff]
        %v805 = vld [vmem:[#allocation10 + $0xf8] sm:$0xff]
        %v806 = vld [vmem:[#allocation10 + $0x100] sm:$0xff]
        %v807 = vld [vmem:[#allocation10 + $0x108] sm:$0xff]
        %v808 = vld [vmem:[#allocation10 + $0x110] sm:$0xff]
        %v809 = vld [vmem:[#allocation10 + $0x118] sm:$0xff]
        %v810 = vld [vmem:[#allocation10 + $0x120] sm:$0xff]
        %v811 = vld [vmem:[#allocation10 + $0x128] sm:$0xff]
        %v812 = vld [vmem:[#allocation10 + $0x130] sm:$0xff]
        %v813 = vld [vmem:[#allocation10 + $0x138] sm:$0xff]
        %v814 = vld [vmem:[#allocation10 + $0x140] sm:$0xff]
        %v815 = vld [vmem:[#allocation10 + $0x148] sm:$0xff]
        %v816 = vld [vmem:[#allocation10 + $0x150] sm:$0xff]
        %v817 = vld [vmem:[#allocation10 + $0x158] sm:$0xff]
        %v818 = vld [vmem:[#allocation10 + $0x160] sm:$0xff]
        %v819 = vld [vmem:[#allocation10 + $0x168] sm:$0xff]
        %v820 = vld [vmem:[#allocation10 + $0x170] sm:$0xff]
        %v821 = vld [vmem:[#allocation10 + $0x178] sm:$0xff]
        %v822 = vld [vmem:[#allocation10 + $0x180] sm:$0xff]
        %v823 = vld [vmem:[#allocation10 + $0x188] sm:$0xff]
        %v824 = vld [vmem:[#allocation10 + $0x190] sm:$0xff]
        %v825 = vld [vmem:[#allocation10 + $0x198] sm:$0xff]
        %v826 = vld [vmem:[#allocation10 + $0x1a0] sm:$0xff]
        %v827 = vld [vmem:[#allocation10 + $0x1a8] sm:$0xff]
        %v828 = vld [vmem:[#allocation10 + $0x1b0] sm:$0xff]
        %v829 = vld [vmem:[#allocation10 + $0x1b8] sm:$0xff]
        %v830 = vld [vmem:[#allocation10 + $0x1c0] sm:$0xff]
        %v831 = vld [vmem:[#allocation10 + $0x1c8] sm:$0xff]
        %v832 = vld [vmem:[#allocation10 + $0x1d0] sm:$0xff]
        %v833 = vld [vmem:[#allocation10 + $0x1d8] sm:$0xff]
        %v834 = vld [vmem:[#allocation10 + $0x1e0] sm:$0xff]
        %v835 = vld [vmem:[#allocation10 + $0x1e8] sm:$0xff]
        %v836 = vld [vmem:[#allocation10 + $0x1f0] sm:$0xff]
        %v837 = vld [vmem:[#allocation10 + $0x1f8] sm:$0xff]
        %v838 = vlaneseq
        %v839 = vshrl.u32 %v838, 7
        %v840 = vlaneseq
        %v841 = vand.u32 %v840, 127
        %v842 = vsub.s32 %v839, 1
        %vm843 = vcmp.eq.s32.totalorder %v841, %v842
        %v844 = vsel %vm843, 1.0, 0.0
        %v845 = vpack.c.bf16 %v844, %v844
        %v846 = vadd.s32 %v839, 1
        %vm847 = vcmp.eq.s32.totalorder %v841, %v846
        %v848 = vsel %vm847, 1.0, 0.0
        %v849 = vpack.c.bf16 %v848, %v848
        %v852 = vunpack.c.l.b16 %v644
        %v853 = vunpack.c.h.b16 %v644
        %v854 = vunpack.c.l.b16 %v645
        %v855 = vunpack.c.h.b16 %v645
        %v856 = vpack.c.b16 %v852, %v852
        %v857 = vpack.c.b16 %v853, %v853
        %v858 = vpack.c.b16 %v854, %v854
        %v859 = vpack.c.b16 %v855, %v855
        %vm860 = vcmask 64512
        %v862 = vsel %vm860, %v845, 0
        %vm864 = vcmask 1043456
        %v866 = vsel %vm864, %v856, 0
        %v869 = vsel %vm864, %v857, 0
        %v872 = vsel %vm864, %v858, 0
        %v875 = vsel %vm864, %v859, 0
        %877 = vmatpush.bf16.msra.mxu0 0
        %878 = vmatpush.bf16.msra.mxu0 0
        %879 = vmatpush.bf16.msra.mxu0 0
        %880 = vmatpush.bf16.msra.mxu0 0
        %881 = vmatpush.bf16.msra.mxu0 0
        %882 = vmatpush.bf16.msra.mxu0 0
        %883 = vmatpush.bf16.msra.mxu0 0
        %884 = vmatpush.bf16.msra.mxu0 %v866
        %885 = vmatmul.bf16.gmra.mxu0 %v862
        %v886 = vpop.f32.mrf.mxu0
        %v887 = vadd.f32 0.0, %v886
        %v888 = vpop.f32.mrf.mxu0
        %889 = vdwg.mxu0
        %890 = vmatpush.bf16.msra.mxu0 0
        %891 = vmatpush.bf16.msra.mxu0 0
        %892 = vmatpush.bf16.msra.mxu0 0
        %893 = vmatpush.bf16.msra.mxu0 0
        %894 = vmatpush.bf16.msra.mxu0 0
        %895 = vmatpush.bf16.msra.mxu0 0
        %896 = vmatpush.bf16.msra.mxu0 0
        %897 = vmatpush.bf16.msra.mxu0 %v869
        %898 = vmatmul.bf16.gmra.mxu0 %v862
        %v899 = vpop.f32.mrf.mxu0
        %v900 = vadd.f32 0.0, %v899
        %v901 = vpop.f32.mrf.mxu0
        %902 = vdwg.mxu0
        %903 = vmatpush.bf16.msra.mxu0 0
        %904 = vmatpush.bf16.msra.mxu0 0
        %905 = vmatpush.bf16.msra.mxu0 0
        %906 = vmatpush.bf16.msra.mxu0 0
        %907 = vmatpush.bf16.msra.mxu0 0
        %908 = vmatpush.bf16.msra.mxu0 0
        %909 = vmatpush.bf16.msra.mxu0 0
        %910 = vmatpush.bf16.msra.mxu0 %v872
        %911 = vmatmul.bf16.gmra.mxu0 %v862
        %v912 = vpop.f32.mrf.mxu0
        %v913 = vadd.f32 0.0, %v912
        %v914 = vpop.f32.mrf.mxu0
        %915 = vdwg.mxu0
        %916 = vmatpush.bf16.msra.mxu0 0
        %917 = vmatpush.bf16.msra.mxu0 0
        %918 = vmatpush.bf16.msra.mxu0 0
        %919 = vmatpush.bf16.msra.mxu0 0
        %920 = vmatpush.bf16.msra.mxu0 0
        %921 = vmatpush.bf16.msra.mxu0 0
        %922 = vmatpush.bf16.msra.mxu0 0
        %923 = vmatpush.bf16.msra.mxu0 %v875
        %924 = vmatmul.bf16.gmra.mxu0 %v862
        %v925 = vpop.f32.mrf.mxu0
        %v926 = vadd.f32 0.0, %v925
        %v927 = vpop.f32.mrf.mxu0
        %928 = vdwg.mxu0
        %v929 = vpack.c.bf16 %v887, %v887
        %v930 = vpack.c.bf16 %v900, %v900
        %v931 = vpack.c.bf16 %v913, %v913
        %v932 = vpack.c.bf16 %v926, %v926
        %v934 = vsel %vm860, %v849, 0
        %936 = vmatpush.bf16.msra.mxu0 0
        %937 = vmatpush.bf16.msra.mxu0 0
        %938 = vmatpush.bf16.msra.mxu0 0
        %939 = vmatpush.bf16.msra.mxu0 0
        %940 = vmatpush.bf16.msra.mxu0 0
        %941 = vmatpush.bf16.msra.mxu0 0
        %942 = vmatpush.bf16.msra.mxu0 0
        %943 = vmatpush.bf16.msra.mxu0 %v866
        %944 = vmatmul.bf16.gmra.mxu0 %v934
        %v945 = vpop.f32.mrf.mxu0
        %v946 = vadd.f32 0.0, %v945
        %v947 = vpop.f32.mrf.mxu0
        %948 = vdwg.mxu0
        %949 = vmatpush.bf16.msra.mxu0 0
        %950 = vmatpush.bf16.msra.mxu0 0
        %951 = vmatpush.bf16.msra.mxu0 0
        %952 = vmatpush.bf16.msra.mxu0 0
        %953 = vmatpush.bf16.msra.mxu0 0
        %954 = vmatpush.bf16.msra.mxu0 0
        %955 = vmatpush.bf16.msra.mxu0 0
        %956 = vmatpush.bf16.msra.mxu0 %v869
        %957 = vmatmul.bf16.gmra.mxu0 %v934
        %v958 = vpop.f32.mrf.mxu0
        %v959 = vadd.f32 0.0, %v958
        %v960 = vpop.f32.mrf.mxu0
        %961 = vdwg.mxu0
        %962 = vmatpush.bf16.msra.mxu0 0
        %963 = vmatpush.bf16.msra.mxu0 0
        %964 = vmatpush.bf16.msra.mxu0 0
        %965 = vmatpush.bf16.msra.mxu0 0
        %966 = vmatpush.bf16.msra.mxu0 0
        %967 = vmatpush.bf16.msra.mxu0 0
        %968 = vmatpush.bf16.msra.mxu0 0
        %969 = vmatpush.bf16.msra.mxu0 %v872
        %970 = vmatmul.bf16.gmra.mxu0 %v934
        %v971 = vpop.f32.mrf.mxu0
        %v972 = vadd.f32 0.0, %v971
        %v973 = vpop.f32.mrf.mxu0
        %974 = vdwg.mxu0
        %975 = vmatpush.bf16.msra.mxu0 0
        %976 = vmatpush.bf16.msra.mxu0 0
        %977 = vmatpush.bf16.msra.mxu0 0
        %978 = vmatpush.bf16.msra.mxu0 0
        %979 = vmatpush.bf16.msra.mxu0 0
        %980 = vmatpush.bf16.msra.mxu0 0
        %981 = vmatpush.bf16.msra.mxu0 0
        %982 = vmatpush.bf16.msra.mxu0 %v875
        %983 = vmatmul.bf16.gmra.mxu0 %v934
        %v984 = vpop.f32.mrf.mxu0
        %v985 = vadd.f32 0.0, %v984
        %v986 = vpop.f32.mrf.mxu0
        %987 = vdwg.mxu0
        %v988 = vpack.c.bf16 %v946, %v946
        %v989 = vpack.c.bf16 %v959, %v959
        %v990 = vpack.c.bf16 %v972, %v972
        %v991 = vpack.c.bf16 %v985, %v985
        %v1060 = vunpack.c.l.b16 %v710
        %v1061 = vunpack.c.h.b16 %v710
        %v1062 = vunpack.c.l.b16 %v711
        %v1063 = vunpack.c.h.b16 %v711
        %v1064 = vunpack.c.l.b16 %v712
        %v1065 = vunpack.c.h.b16 %v712
        %v1066 = vunpack.c.l.b16 %v713
        %v1067 = vunpack.c.h.b16 %v713
        %v1068 = vunpack.c.l.b16 %v714
        %v1069 = vunpack.c.h.b16 %v714
        %v1070 = vunpack.c.l.b16 %v715
        %v1071 = vunpack.c.h.b16 %v715
        %v1072 = vunpack.c.l.b16 %v716
        %v1073 = vunpack.c.h.b16 %v716
        %v1074 = vunpack.c.l.b16 %v717
        %v1075 = vunpack.c.h.b16 %v717
        %v1076 = vunpack.c.l.b16 %v718
        %v1077 = vunpack.c.h.b16 %v718
        %v1078 = vunpack.c.l.b16 %v719
        %v1079 = vunpack.c.h.b16 %v719
        %v1080 = vunpack.c.l.b16 %v720
        %v1081 = vunpack.c.h.b16 %v720
        %v1082 = vunpack.c.l.b16 %v721
        %v1083 = vunpack.c.h.b16 %v721
        %v1084 = vunpack.c.l.b16 %v722
        %v1085 = vunpack.c.h.b16 %v722
        %v1086 = vunpack.c.l.b16 %v723
        %v1087 = vunpack.c.h.b16 %v723
        %v1088 = vunpack.c.l.b16 %v724
        %v1089 = vunpack.c.h.b16 %v724
        %v1090 = vunpack.c.l.b16 %v725
        %v1091 = vunpack.c.h.b16 %v725
        %v1092 = vunpack.c.l.b16 %v726
        %v1093 = vunpack.c.h.b16 %v726
        %v1094 = vunpack.c.l.b16 %v727
        %v1095 = vunpack.c.h.b16 %v727
        %v1096 = vunpack.c.l.b16 %v728
        %v1097 = vunpack.c.h.b16 %v728
        %v1098 = vunpack.c.l.b16 %v729
        %v1099 = vunpack.c.h.b16 %v729
        %v1100 = vunpack.c.l.b16 %v730
        %v1101 = vunpack.c.h.b16 %v730
        %v1102 = vunpack.c.l.b16 %v731
        %v1103 = vunpack.c.h.b16 %v731
        %v1104 = vunpack.c.l.b16 %v732
        %v1105 = vunpack.c.h.b16 %v732
        %v1106 = vunpack.c.l.b16 %v733
        %v1107 = vunpack.c.h.b16 %v733
        %v1108 = vunpack.c.l.b16 %v734
        %v1109 = vunpack.c.h.b16 %v734
        %v1110 = vunpack.c.l.b16 %v735
        %v1111 = vunpack.c.h.b16 %v735
        %v1112 = vunpack.c.l.b16 %v736
        %v1113 = vunpack.c.h.b16 %v736
        %v1114 = vunpack.c.l.b16 %v737
        %v1115 = vunpack.c.h.b16 %v737
        %v1116 = vunpack.c.l.b16 %v738
        %v1117 = vunpack.c.h.b16 %v738
        %v1118 = vunpack.c.l.b16 %v739
        %v1119 = vunpack.c.h.b16 %v739
        %v1120 = vunpack.c.l.b16 %v740
        %v1121 = vunpack.c.h.b16 %v740
        %v1122 = vunpack.c.l.b16 %v741
        %v1123 = vunpack.c.h.b16 %v741
        %v1124 = vunpack.c.l.b16 %v742
        %v1125 = vunpack.c.h.b16 %v742
        %v1126 = vunpack.c.l.b16 %v743
        %v1127 = vunpack.c.h.b16 %v743
        %v1128 = vunpack.c.l.b16 %v744
        %v1129 = vunpack.c.h.b16 %v744
        %v1130 = vunpack.c.l.b16 %v745
        %v1131 = vunpack.c.h.b16 %v745
        %v1132 = vunpack.c.l.b16 %v746
        %v1133 = vunpack.c.h.b16 %v746
        %v1134 = vunpack.c.l.b16 %v747
        %v1135 = vunpack.c.h.b16 %v747
        %v1136 = vunpack.c.l.b16 %v748
        %v1137 = vunpack.c.h.b16 %v748
        %v1138 = vunpack.c.l.b16 %v749
        %v1139 = vunpack.c.h.b16 %v749
        %v1140 = vunpack.c.l.b16 %v750
        %v1141 = vunpack.c.h.b16 %v750
        %v1142 = vunpack.c.l.b16 %v751
        %v1143 = vunpack.c.h.b16 %v751
        %v1144 = vunpack.c.l.b16 %v752
        %v1145 = vunpack.c.h.b16 %v752
        %v1146 = vunpack.c.l.b16 %v753
        %v1147 = vunpack.c.h.b16 %v753
        %v1148 = vunpack.c.l.b16 %v754
        %v1149 = vunpack.c.h.b16 %v754
        %v1150 = vunpack.c.l.b16 %v755
        %v1151 = vunpack.c.h.b16 %v755
        %v1152 = vunpack.c.l.b16 %v756
        %v1153 = vunpack.c.h.b16 %v756
        %v1154 = vunpack.c.l.b16 %v757
        %v1155 = vunpack.c.h.b16 %v757
        %v1156 = vunpack.c.l.b16 %v758
        %v1157 = vunpack.c.h.b16 %v758
        %v1158 = vunpack.c.l.b16 %v759
        %v1159 = vunpack.c.h.b16 %v759
        %v1160 = vunpack.c.l.b16 %v760
        %v1161 = vunpack.c.h.b16 %v760
        %v1162 = vunpack.c.l.b16 %v761
        %v1163 = vunpack.c.h.b16 %v761
        %v1164 = vunpack.c.l.b16 %v762
        %v1165 = vunpack.c.h.b16 %v762
        %v1166 = vunpack.c.l.b16 %v763
        %v1167 = vunpack.c.h.b16 %v763
        %v1168 = vunpack.c.l.b16 %v764
        %v1169 = vunpack.c.h.b16 %v764
        %v1170 = vunpack.c.l.b16 %v765
        %v1171 = vunpack.c.h.b16 %v765
        %v1172 = vunpack.c.l.b16 %v766
        %v1173 = vunpack.c.h.b16 %v766
        %v1174 = vunpack.c.l.b16 %v767
        %v1175 = vunpack.c.h.b16 %v767
        %v1176 = vunpack.c.l.b16 %v768
        %v1177 = vunpack.c.h.b16 %v768
        %v1178 = vunpack.c.l.b16 %v769
        %v1179 = vunpack.c.h.b16 %v769
        %v1180 = vunpack.c.l.b16 %v770
        %v1181 = vunpack.c.h.b16 %v770
        %v1182 = vunpack.c.l.b16 %v771
        %v1183 = vunpack.c.h.b16 %v771
        %v1184 = vunpack.c.l.b16 %v772
        %v1185 = vunpack.c.h.b16 %v772
        %v1186 = vunpack.c.l.b16 %v773
        %v1187 = vunpack.c.h.b16 %v773
        %v1188 = vpack.c.b16 %v1062, %v1060
        %v1189 = vpack.c.b16 %v1063, %v1061
        %v1190 = vpack.c.b16 %v1066, %v1064
        %v1191 = vpack.c.b16 %v1067, %v1065
        %v1192 = vpack.c.b16 %v1070, %v1068
        %v1193 = vpack.c.b16 %v1071, %v1069
        %v1194 = vpack.c.b16 %v1074, %v1072
        %v1195 = vpack.c.b16 %v1075, %v1073
        %v1196 = vpack.c.b16 %v1078, %v1076
        %v1197 = vpack.c.b16 %v1079, %v1077
        %v1198 = vpack.c.b16 %v1082, %v1080
        %v1199 = vpack.c.b16 %v1083, %v1081
        %v1200 = vpack.c.b16 %v1086, %v1084
        %v1201 = vpack.c.b16 %v1087, %v1085
        %v1202 = vpack.c.b16 %v1090, %v1088
        %v1203 = vpack.c.b16 %v1091, %v1089
        %v1204 = vpack.c.b16 %v1094, %v1092
        %v1205 = vpack.c.b16 %v1095, %v1093
        %v1206 = vpack.c.b16 %v1098, %v1096
        %v1207 = vpack.c.b16 %v1099, %v1097
        %v1208 = vpack.c.b16 %v1102, %v1100
        %v1209 = vpack.c.b16 %v1103, %v1101
        %v1210 = vpack.c.b16 %v1106, %v1104
        %v1211 = vpack.c.b16 %v1107, %v1105
        %v1212 = vpack.c.b16 %v1110, %v1108
        %v1213 = vpack.c.b16 %v1111, %v1109
        %v1214 = vpack.c.b16 %v1114, %v1112
        %v1215 = vpack.c.b16 %v1115, %v1113
        %v1216 = vpack.c.b16 %v1118, %v1116
        %v1217 = vpack.c.b16 %v1119, %v1117
        %v1218 = vpack.c.b16 %v1122, %v1120
        %v1219 = vpack.c.b16 %v1123, %v1121
        %v1220 = vpack.c.b16 %v1126, %v1124
        %v1221 = vpack.c.b16 %v1127, %v1125
        %v1222 = vpack.c.b16 %v1130, %v1128
        %v1223 = vpack.c.b16 %v1131, %v1129
        %v1224 = vpack.c.b16 %v1134, %v1132
        %v1225 = vpack.c.b16 %v1135, %v1133
        %v1226 = vpack.c.b16 %v1138, %v1136
        %v1227 = vpack.c.b16 %v1139, %v1137
        %v1228 = vpack.c.b16 %v1142, %v1140
        %v1229 = vpack.c.b16 %v1143, %v1141
        %v1230 = vpack.c.b16 %v1146, %v1144
        %v1231 = vpack.c.b16 %v1147, %v1145
        %v1232 = vpack.c.b16 %v1150, %v1148
        %v1233 = vpack.c.b16 %v1151, %v1149
        %v1234 = vpack.c.b16 %v1154, %v1152
        %v1235 = vpack.c.b16 %v1155, %v1153
        %v1236 = vpack.c.b16 %v1158, %v1156
        %v1237 = vpack.c.b16 %v1159, %v1157
        %v1238 = vpack.c.b16 %v1162, %v1160
        %v1239 = vpack.c.b16 %v1163, %v1161
        %v1240 = vpack.c.b16 %v1166, %v1164
        %v1241 = vpack.c.b16 %v1167, %v1165
        %v1242 = vpack.c.b16 %v1170, %v1168
        %v1243 = vpack.c.b16 %v1171, %v1169
        %v1244 = vpack.c.b16 %v1174, %v1172
        %v1245 = vpack.c.b16 %v1175, %v1173
        %v1246 = vpack.c.b16 %v1178, %v1176
        %v1247 = vpack.c.b16 %v1179, %v1177
        %v1248 = vpack.c.b16 %v1182, %v1180
        %v1249 = vpack.c.b16 %v1183, %v1181
        %v1250 = vpack.c.b16 %v1186, %v1184
        %v1251 = vpack.c.b16 %v1187, %v1185
        %1316 = vmatpush.bf16.msra.mxu0 %v1202
        %1317 = vmatpush.bf16.msra.mxu0 %v1200
        %1318 = vmatpush.bf16.msra.mxu0 %v1198
        %1319 = vmatpush.bf16.msra.mxu0 %v1196
        %1320 = vmatpush.bf16.msra.mxu0 %v1194
        %1321 = vmatpush.bf16.msra.mxu0 %v1192
        %1322 = vmatpush.bf16.msra.mxu0 %v1190
        %1323 = vmatpush.bf16.msra.mxu0 %v1188
        %1324 = vmatmul.bf16.gmra.mxu0 %v856
        %v1325 = vpop.f32.mrf.mxu0
        %v1326 = vadd.f32 0.0, %v1325
        %v1327 = vpop.f32.mrf.mxu0
        %1328 = vdwg.mxu0
        %1329 = vmatpush.bf16.msra.mxu0 %v1218
        %1330 = vmatpush.bf16.msra.mxu0 %v1216
        %1331 = vmatpush.bf16.msra.mxu0 %v1214
        %1332 = vmatpush.bf16.msra.mxu0 %v1212
        %1333 = vmatpush.bf16.msra.mxu0 %v1210
        %1334 = vmatpush.bf16.msra.mxu0 %v1208
        %1335 = vmatpush.bf16.msra.mxu0 %v1206
        %1336 = vmatpush.bf16.msra.mxu0 %v1204
        %1337 = vmatmul.bf16.gmra.mxu0 %v857
        %v1338 = vpop.f32.mrf.mxu0
        %v1339 = vadd.f32 %v1326, %v1338
        %v1340 = vpop.f32.mrf.mxu0
        %1341 = vdwg.mxu0
        %1342 = vmatpush.bf16.msra.mxu0 %v1234
        %1343 = vmatpush.bf16.msra.mxu0 %v1232
        %1344 = vmatpush.bf16.msra.mxu0 %v1230
        %1345 = vmatpush.bf16.msra.mxu0 %v1228
        %1346 = vmatpush.bf16.msra.mxu0 %v1226
        %1347 = vmatpush.bf16.msra.mxu0 %v1224
        %1348 = vmatpush.bf16.msra.mxu0 %v1222
        %1349 = vmatpush.bf16.msra.mxu0 %v1220
        %1350 = vmatmul.bf16.gmra.mxu0 %v858
        %v1351 = vpop.f32.mrf.mxu0
        %v1352 = vadd.f32 %v1339, %v1351
        %v1353 = vpop.f32.mrf.mxu0
        %1354 = vdwg.mxu0
        %1355 = vmatpush.bf16.msra.mxu0 %v1250
        %1356 = vmatpush.bf16.msra.mxu0 %v1248
        %1357 = vmatpush.bf16.msra.mxu0 %v1246
        %1358 = vmatpush.bf16.msra.mxu0 %v1244
        %1359 = vmatpush.bf16.msra.mxu0 %v1242
        %1360 = vmatpush.bf16.msra.mxu0 %v1240
        %1361 = vmatpush.bf16.msra.mxu0 %v1238
        %1362 = vmatpush.bf16.msra.mxu0 %v1236
        %1363 = vmatmul.bf16.gmra.mxu0 %v859
        %v1364 = vpop.f32.mrf.mxu0
        %v1365 = vadd.f32 %v1352, %v1364
        %v1366 = vpop.f32.mrf.mxu0
        %1367 = vdwg.mxu0
        %1368 = vmatpush.bf16.msra.mxu0 %v1203
        %1369 = vmatpush.bf16.msra.mxu0 %v1201
        %1370 = vmatpush.bf16.msra.mxu0 %v1199
        %1371 = vmatpush.bf16.msra.mxu0 %v1197
        %1372 = vmatpush.bf16.msra.mxu0 %v1195
        %1373 = vmatpush.bf16.msra.mxu0 %v1193
        %1374 = vmatpush.bf16.msra.mxu0 %v1191
        %1375 = vmatpush.bf16.msra.mxu0 %v1189
        %1376 = vmatmul.bf16.gmra.mxu0 %v856
        %v1377 = vpop.f32.mrf.mxu0
        %v1378 = vadd.f32 0.0, %v1377
        %v1379 = vpop.f32.mrf.mxu0
        %1380 = vdwg.mxu0
        %1381 = vmatpush.bf16.msra.mxu0 %v1219
        %1382 = vmatpush.bf16.msra.mxu0 %v1217
        %1383 = vmatpush.bf16.msra.mxu0 %v1215
        %1384 = vmatpush.bf16.msra.mxu0 %v1213
        %1385 = vmatpush.bf16.msra.mxu0 %v1211
        %1386 = vmatpush.bf16.msra.mxu0 %v1209
        %1387 = vmatpush.bf16.msra.mxu0 %v1207
        %1388 = vmatpush.bf16.msra.mxu0 %v1205
        %1389 = vmatmul.bf16.gmra.mxu0 %v857
        %v1390 = vpop.f32.mrf.mxu0
        %v1391 = vadd.f32 %v1378, %v1390
        %v1392 = vpop.f32.mrf.mxu0
        %1393 = vdwg.mxu0
        %1394 = vmatpush.bf16.msra.mxu0 %v1235
        %1395 = vmatpush.bf16.msra.mxu0 %v1233
        %1396 = vmatpush.bf16.msra.mxu0 %v1231
        %1397 = vmatpush.bf16.msra.mxu0 %v1229
        %1398 = vmatpush.bf16.msra.mxu0 %v1227
        %1399 = vmatpush.bf16.msra.mxu0 %v1225
        %1400 = vmatpush.bf16.msra.mxu0 %v1223
        %1401 = vmatpush.bf16.msra.mxu0 %v1221
        %1402 = vmatmul.bf16.gmra.mxu0 %v858
        %v1403 = vpop.f32.mrf.mxu0
        %v1404 = vadd.f32 %v1391, %v1403
        %v1405 = vpop.f32.mrf.mxu0
        %1406 = vdwg.mxu0
        %1407 = vmatpush.bf16.msra.mxu0 %v1251
        %1408 = vmatpush.bf16.msra.mxu0 %v1249
        %1409 = vmatpush.bf16.msra.mxu0 %v1247
        %1410 = vmatpush.bf16.msra.mxu0 %v1245
        %1411 = vmatpush.bf16.msra.mxu0 %v1243
        %1412 = vmatpush.bf16.msra.mxu0 %v1241
        %1413 = vmatpush.bf16.msra.mxu0 %v1239
        %1414 = vmatpush.bf16.msra.mxu0 %v1237
        %1415 = vmatmul.bf16.gmra.mxu0 %v859
        %v1416 = vpop.f32.mrf.mxu0
        %v1417 = vadd.f32 %v1404, %v1416
        %v1418 = vpop.f32.mrf.mxu0
        %1419 = vdwg.mxu0
        %v1484 = vunpack.c.l.b16 %v646
        %v1485 = vunpack.c.h.b16 %v646
        %v1486 = vunpack.c.l.b16 %v647
        %v1487 = vunpack.c.h.b16 %v647
        %v1488 = vunpack.c.l.b16 %v648
        %v1489 = vunpack.c.h.b16 %v648
        %v1490 = vunpack.c.l.b16 %v649
        %v1491 = vunpack.c.h.b16 %v649
        %v1492 = vunpack.c.l.b16 %v650
        %v1493 = vunpack.c.h.b16 %v650
        %v1494 = vunpack.c.l.b16 %v651
        %v1495 = vunpack.c.h.b16 %v651
        %v1496 = vunpack.c.l.b16 %v652
        %v1497 = vunpack.c.h.b16 %v652
        %v1498 = vunpack.c.l.b16 %v653
        %v1499 = vunpack.c.h.b16 %v653
        %v1500 = vunpack.c.l.b16 %v654
        %v1501 = vunpack.c.h.b16 %v654
        %v1502 = vunpack.c.l.b16 %v655
        %v1503 = vunpack.c.h.b16 %v655
        %v1504 = vunpack.c.l.b16 %v656
        %v1505 = vunpack.c.h.b16 %v656
        %v1506 = vunpack.c.l.b16 %v657
        %v1507 = vunpack.c.h.b16 %v657
        %v1508 = vunpack.c.l.b16 %v658
        %v1509 = vunpack.c.h.b16 %v658
        %v1510 = vunpack.c.l.b16 %v659
        %v1511 = vunpack.c.h.b16 %v659
        %v1512 = vunpack.c.l.b16 %v660
        %v1513 = vunpack.c.h.b16 %v660
        %v1514 = vunpack.c.l.b16 %v661
        %v1515 = vunpack.c.h.b16 %v661
        %v1516 = vunpack.c.l.b16 %v662
        %v1517 = vunpack.c.h.b16 %v662
        %v1518 = vunpack.c.l.b16 %v663
        %v1519 = vunpack.c.h.b16 %v663
        %v1520 = vunpack.c.l.b16 %v664
        %v1521 = vunpack.c.h.b16 %v664
        %v1522 = vunpack.c.l.b16 %v665
        %v1523 = vunpack.c.h.b16 %v665
        %v1524 = vunpack.c.l.b16 %v666
        %v1525 = vunpack.c.h.b16 %v666
        %v1526 = vunpack.c.l.b16 %v667
        %v1527 = vunpack.c.h.b16 %v667
        %v1528 = vunpack.c.l.b16 %v668
        %v1529 = vunpack.c.h.b16 %v668
        %v1530 = vunpack.c.l.b16 %v669
        %v1531 = vunpack.c.h.b16 %v669
        %v1532 = vunpack.c.l.b16 %v670
        %v1533 = vunpack.c.h.b16 %v670
        %v1534 = vunpack.c.l.b16 %v671
        %v1535 = vunpack.c.h.b16 %v671
        %v1536 = vunpack.c.l.b16 %v672
        %v1537 = vunpack.c.h.b16 %v672
        %v1538 = vunpack.c.l.b16 %v673
        %v1539 = vunpack.c.h.b16 %v673
        %v1540 = vunpack.c.l.b16 %v674
        %v1541 = vunpack.c.h.b16 %v674
        %v1542 = vunpack.c.l.b16 %v675
        %v1543 = vunpack.c.h.b16 %v675
        %v1544 = vunpack.c.l.b16 %v676
        %v1545 = vunpack.c.h.b16 %v676
        %v1546 = vunpack.c.l.b16 %v677
        %v1547 = vunpack.c.h.b16 %v677
        %v1548 = vunpack.c.l.b16 %v678
        %v1549 = vunpack.c.h.b16 %v678
        %v1550 = vunpack.c.l.b16 %v679
        %v1551 = vunpack.c.h.b16 %v679
        %v1552 = vunpack.c.l.b16 %v680
        %v1553 = vunpack.c.h.b16 %v680
        %v1554 = vunpack.c.l.b16 %v681
        %v1555 = vunpack.c.h.b16 %v681
        %v1556 = vunpack.c.l.b16 %v682
        %v1557 = vunpack.c.h.b16 %v682
        %v1558 = vunpack.c.l.b16 %v683
        %v1559 = vunpack.c.h.b16 %v683
        %v1560 = vunpack.c.l.b16 %v684
        %v1561 = vunpack.c.h.b16 %v684
        %v1562 = vunpack.c.l.b16 %v685
        %v1563 = vunpack.c.h.b16 %v685
        %v1564 = vunpack.c.l.b16 %v686
        %v1565 = vunpack.c.h.b16 %v686
        %v1566 = vunpack.c.l.b16 %v687
        %v1567 = vunpack.c.h.b16 %v687
        %v1568 = vunpack.c.l.b16 %v688
        %v1569 = vunpack.c.h.b16 %v688
        %v1570 = vunpack.c.l.b16 %v689
        %v1571 = vunpack.c.h.b16 %v689
        %v1572 = vunpack.c.l.b16 %v690
        %v1573 = vunpack.c.h.b16 %v690
        %v1574 = vunpack.c.l.b16 %v691
        %v1575 = vunpack.c.h.b16 %v691
        %v1576 = vunpack.c.l.b16 %v692
        %v1577 = vunpack.c.h.b16 %v692
        %v1578 = vunpack.c.l.b16 %v693
        %v1579 = vunpack.c.h.b16 %v693
        %v1580 = vunpack.c.l.b16 %v694
        %v1581 = vunpack.c.h.b16 %v694
        %v1582 = vunpack.c.l.b16 %v695
        %v1583 = vunpack.c.h.b16 %v695
        %v1584 = vunpack.c.l.b16 %v696
        %v1585 = vunpack.c.h.b16 %v696
        %v1586 = vunpack.c.l.b16 %v697
        %v1587 = vunpack.c.h.b16 %v697
        %v1588 = vunpack.c.l.b16 %v698
        %v1589 = vunpack.c.h.b16 %v698
        %v1590 = vunpack.c.l.b16 %v699
        %v1591 = vunpack.c.h.b16 %v699
        %v1592 = vunpack.c.l.b16 %v700
        %v1593 = vunpack.c.h.b16 %v700
        %v1594 = vunpack.c.l.b16 %v701
        %v1595 = vunpack.c.h.b16 %v701
        %v1596 = vunpack.c.l.b16 %v702
        %v1597 = vunpack.c.h.b16 %v702
        %v1598 = vunpack.c.l.b16 %v703
        %v1599 = vunpack.c.h.b16 %v703
        %v1600 = vunpack.c.l.b16 %v704
        %v1601 = vunpack.c.h.b16 %v704
        %v1602 = vunpack.c.l.b16 %v705
        %v1603 = vunpack.c.h.b16 %v705
        %v1604 = vunpack.c.l.b16 %v706
        %v1605 = vunpack.c.h.b16 %v706
        %v1606 = vunpack.c.l.b16 %v707
        %v1607 = vunpack.c.h.b16 %v707
        %v1608 = vunpack.c.l.b16 %v708
        %v1609 = vunpack.c.h.b16 %v708
        %v1610 = vunpack.c.l.b16 %v709
        %v1611 = vunpack.c.h.b16 %v709
        %v1612 = vpack.c.b16 %v1486, %v1484
        %v1613 = vpack.c.b16 %v1487, %v1485
        %v1614 = vpack.c.b16 %v1490, %v1488
        %v1615 = vpack.c.b16 %v1491, %v1489
        %v1616 = vpack.c.b16 %v1494, %v1492
        %v1617 = vpack.c.b16 %v1495, %v1493
        %v1618 = vpack.c.b16 %v1498, %v1496
        %v1619 = vpack.c.b16 %v1499, %v1497
        %v1620 = vpack.c.b16 %v1502, %v1500
        %v1621 = vpack.c.b16 %v1503, %v1501
        %v1622 = vpack.c.b16 %v1506, %v1504
        %v1623 = vpack.c.b16 %v1507, %v1505
        %v1624 = vpack.c.b16 %v1510, %v1508
        %v1625 = vpack.c.b16 %v1511, %v1509
        %v1626 = vpack.c.b16 %v1514, %v1512
        %v1627 = vpack.c.b16 %v1515, %v1513
        %v1628 = vpack.c.b16 %v1518, %v1516
        %v1629 = vpack.c.b16 %v1519, %v1517
        %v1630 = vpack.c.b16 %v1522, %v1520
        %v1631 = vpack.c.b16 %v1523, %v1521
        %v1632 = vpack.c.b16 %v1526, %v1524
        %v1633 = vpack.c.b16 %v1527, %v1525
        %v1634 = vpack.c.b16 %v1530, %v1528
        %v1635 = vpack.c.b16 %v1531, %v1529
        %v1636 = vpack.c.b16 %v1534, %v1532
        %v1637 = vpack.c.b16 %v1535, %v1533
        %v1638 = vpack.c.b16 %v1538, %v1536
        %v1639 = vpack.c.b16 %v1539, %v1537
        %v1640 = vpack.c.b16 %v1542, %v1540
        %v1641 = vpack.c.b16 %v1543, %v1541
        %v1642 = vpack.c.b16 %v1546, %v1544
        %v1643 = vpack.c.b16 %v1547, %v1545
        %v1644 = vpack.c.b16 %v1550, %v1548
        %v1645 = vpack.c.b16 %v1551, %v1549
        %v1646 = vpack.c.b16 %v1554, %v1552
        %v1647 = vpack.c.b16 %v1555, %v1553
        %v1648 = vpack.c.b16 %v1558, %v1556
        %v1649 = vpack.c.b16 %v1559, %v1557
        %v1650 = vpack.c.b16 %v1562, %v1560
        %v1651 = vpack.c.b16 %v1563, %v1561
        %v1652 = vpack.c.b16 %v1566, %v1564
        %v1653 = vpack.c.b16 %v1567, %v1565
        %v1654 = vpack.c.b16 %v1570, %v1568
        %v1655 = vpack.c.b16 %v1571, %v1569
        %v1656 = vpack.c.b16 %v1574, %v1572
        %v1657 = vpack.c.b16 %v1575, %v1573
        %v1658 = vpack.c.b16 %v1578, %v1576
        %v1659 = vpack.c.b16 %v1579, %v1577
        %v1660 = vpack.c.b16 %v1582, %v1580
        %v1661 = vpack.c.b16 %v1583, %v1581
        %v1662 = vpack.c.b16 %v1586, %v1584
        %v1663 = vpack.c.b16 %v1587, %v1585
        %v1664 = vpack.c.b16 %v1590, %v1588
        %v1665 = vpack.c.b16 %v1591, %v1589
        %v1666 = vpack.c.b16 %v1594, %v1592
        %v1667 = vpack.c.b16 %v1595, %v1593
        %v1668 = vpack.c.b16 %v1598, %v1596
        %v1669 = vpack.c.b16 %v1599, %v1597
        %v1670 = vpack.c.b16 %v1602, %v1600
        %v1671 = vpack.c.b16 %v1603, %v1601
        %v1672 = vpack.c.b16 %v1606, %v1604
        %v1673 = vpack.c.b16 %v1607, %v1605
        %v1674 = vpack.c.b16 %v1610, %v1608
        %v1675 = vpack.c.b16 %v1611, %v1609
        %1740 = vmatpush.bf16.msra.mxu0 %v1626
        %1741 = vmatpush.bf16.msra.mxu0 %v1624
        %1742 = vmatpush.bf16.msra.mxu0 %v1622
        %1743 = vmatpush.bf16.msra.mxu0 %v1620
        %1744 = vmatpush.bf16.msra.mxu0 %v1618
        %1745 = vmatpush.bf16.msra.mxu0 %v1616
        %1746 = vmatpush.bf16.msra.mxu0 %v1614
        %1747 = vmatpush.bf16.msra.mxu0 %v1612
        %1748 = vmatmul.bf16.gmra.mxu0 %v929
        %v1749 = vpop.f32.mrf.mxu0
        %v1750 = vadd.f32 %v1365, %v1749
        %v1751 = vpop.f32.mrf.mxu0
        %1752 = vdwg.mxu0
        %1753 = vmatpush.bf16.msra.mxu0 %v1642
        %1754 = vmatpush.bf16.msra.mxu0 %v1640
        %1755 = vmatpush.bf16.msra.mxu0 %v1638
        %1756 = vmatpush.bf16.msra.mxu0 %v1636
        %1757 = vmatpush.bf16.msra.mxu0 %v1634
        %1758 = vmatpush.bf16.msra.mxu0 %v1632
        %1759 = vmatpush.bf16.msra.mxu0 %v1630
        %1760 = vmatpush.bf16.msra.mxu0 %v1628
        %1761 = vmatmul.bf16.gmra.mxu0 %v930
        %v1762 = vpop.f32.mrf.mxu0
        %v1763 = vadd.f32 %v1750, %v1762
        %v1764 = vpop.f32.mrf.mxu0
        %1765 = vdwg.mxu0
        %1766 = vmatpush.bf16.msra.mxu0 %v1658
        %1767 = vmatpush.bf16.msra.mxu0 %v1656
        %1768 = vmatpush.bf16.msra.mxu0 %v1654
        %1769 = vmatpush.bf16.msra.mxu0 %v1652
        %1770 = vmatpush.bf16.msra.mxu0 %v1650
        %1771 = vmatpush.bf16.msra.mxu0 %v1648
        %1772 = vmatpush.bf16.msra.mxu0 %v1646
        %1773 = vmatpush.bf16.msra.mxu0 %v1644
        %1774 = vmatmul.bf16.gmra.mxu0 %v931
        %v1775 = vpop.f32.mrf.mxu0
        %v1776 = vadd.f32 %v1763, %v1775
        %v1777 = vpop.f32.mrf.mxu0
        %1778 = vdwg.mxu0
        %1779 = vmatpush.bf16.msra.mxu0 %v1674
        %1780 = vmatpush.bf16.msra.mxu0 %v1672
        %1781 = vmatpush.bf16.msra.mxu0 %v1670
        %1782 = vmatpush.bf16.msra.mxu0 %v1668
        %1783 = vmatpush.bf16.msra.mxu0 %v1666
        %1784 = vmatpush.bf16.msra.mxu0 %v1664
        %1785 = vmatpush.bf16.msra.mxu0 %v1662
        %1786 = vmatpush.bf16.msra.mxu0 %v1660
        %1787 = vmatmul.bf16.gmra.mxu0 %v932
        %v1788 = vpop.f32.mrf.mxu0
        %v1789 = vadd.f32 %v1776, %v1788
        %v1790 = vpop.f32.mrf.mxu0
        %1791 = vdwg.mxu0
        %1792 = vmatpush.bf16.msra.mxu0 %v1627
        %1793 = vmatpush.bf16.msra.mxu0 %v1625
        %1794 = vmatpush.bf16.msra.mxu0 %v1623
        %1795 = vmatpush.bf16.msra.mxu0 %v1621
        %1796 = vmatpush.bf16.msra.mxu0 %v1619
        %1797 = vmatpush.bf16.msra.mxu0 %v1617
        %1798 = vmatpush.bf16.msra.mxu0 %v1615
        %1799 = vmatpush.bf16.msra.mxu0 %v1613
        %1800 = vmatmul.bf16.gmra.mxu0 %v929
        %v1801 = vpop.f32.mrf.mxu0
        %v1802 = vadd.f32 %v1417, %v1801
        %v1803 = vpop.f32.mrf.mxu0
        %1804 = vdwg.mxu0
        %1805 = vmatpush.bf16.msra.mxu0 %v1643
        %1806 = vmatpush.bf16.msra.mxu0 %v1641
        %1807 = vmatpush.bf16.msra.mxu0 %v1639
        %1808 = vmatpush.bf16.msra.mxu0 %v1637
        %1809 = vmatpush.bf16.msra.mxu0 %v1635
        %1810 = vmatpush.bf16.msra.mxu0 %v1633
        %1811 = vmatpush.bf16.msra.mxu0 %v1631
        %1812 = vmatpush.bf16.msra.mxu0 %v1629
        %1813 = vmatmul.bf16.gmra.mxu0 %v930
        %v1814 = vpop.f32.mrf.mxu0
        %v1815 = vadd.f32 %v1802, %v1814
        %v1816 = vpop.f32.mrf.mxu0
        %1817 = vdwg.mxu0
        %1818 = vmatpush.bf16.msra.mxu0 %v1659
        %1819 = vmatpush.bf16.msra.mxu0 %v1657
        %1820 = vmatpush.bf16.msra.mxu0 %v1655
        %1821 = vmatpush.bf16.msra.mxu0 %v1653
        %1822 = vmatpush.bf16.msra.mxu0 %v1651
        %1823 = vmatpush.bf16.msra.mxu0 %v1649
        %1824 = vmatpush.bf16.msra.mxu0 %v1647
        %1825 = vmatpush.bf16.msra.mxu0 %v1645
        %1826 = vmatmul.bf16.gmra.mxu0 %v931
        %v1827 = vpop.f32.mrf.mxu0
        %v1828 = vadd.f32 %v1815, %v1827
        %v1829 = vpop.f32.mrf.mxu0
        %1830 = vdwg.mxu0
        %1831 = vmatpush.bf16.msra.mxu0 %v1675
        %1832 = vmatpush.bf16.msra.mxu0 %v1673
        %1833 = vmatpush.bf16.msra.mxu0 %v1671
        %1834 = vmatpush.bf16.msra.mxu0 %v1669
        %1835 = vmatpush.bf16.msra.mxu0 %v1667
        %1836 = vmatpush.bf16.msra.mxu0 %v1665
        %1837 = vmatpush.bf16.msra.mxu0 %v1663
        %1838 = vmatpush.bf16.msra.mxu0 %v1661
        %1839 = vmatmul.bf16.gmra.mxu0 %v932
        %v1840 = vpop.f32.mrf.mxu0
        %v1841 = vadd.f32 %v1828, %v1840
        %v1842 = vpop.f32.mrf.mxu0
        %1843 = vdwg.mxu0
        %v1908 = vunpack.c.l.b16 %v774
        %v1909 = vunpack.c.h.b16 %v774
        %v1910 = vunpack.c.l.b16 %v775
        %v1911 = vunpack.c.h.b16 %v775
        %v1912 = vunpack.c.l.b16 %v776
        %v1913 = vunpack.c.h.b16 %v776
        %v1914 = vunpack.c.l.b16 %v777
        %v1915 = vunpack.c.h.b16 %v777
        %v1916 = vunpack.c.l.b16 %v778
        %v1917 = vunpack.c.h.b16 %v778
        %v1918 = vunpack.c.l.b16 %v779
        %v1919 = vunpack.c.h.b16 %v779
        %v1920 = vunpack.c.l.b16 %v780
        %v1921 = vunpack.c.h.b16 %v780
        %v1922 = vunpack.c.l.b16 %v781
        %v1923 = vunpack.c.h.b16 %v781
        %v1924 = vunpack.c.l.b16 %v782
        %v1925 = vunpack.c.h.b16 %v782
        %v1926 = vunpack.c.l.b16 %v783
        %v1927 = vunpack.c.h.b16 %v783
        %v1928 = vunpack.c.l.b16 %v784
        %v1929 = vunpack.c.h.b16 %v784
        %v1930 = vunpack.c.l.b16 %v785
        %v1931 = vunpack.c.h.b16 %v785
        %v1932 = vunpack.c.l.b16 %v786
        %v1933 = vunpack.c.h.b16 %v786
        %v1934 = vunpack.c.l.b16 %v787
        %v1935 = vunpack.c.h.b16 %v787
        %v1936 = vunpack.c.l.b16 %v788
        %v1937 = vunpack.c.h.b16 %v788
        %v1938 = vunpack.c.l.b16 %v789
        %v1939 = vunpack.c.h.b16 %v789
        %v1940 = vunpack.c.l.b16 %v790
        %v1941 = vunpack.c.h.b16 %v790
        %v1942 = vunpack.c.l.b16 %v791
        %v1943 = vunpack.c.h.b16 %v791
        %v1944 = vunpack.c.l.b16 %v792
        %v1945 = vunpack.c.h.b16 %v792
        %v1946 = vunpack.c.l.b16 %v793
        %v1947 = vunpack.c.h.b16 %v793
        %v1948 = vunpack.c.l.b16 %v794
        %v1949 = vunpack.c.h.b16 %v794
        %v1950 = vunpack.c.l.b16 %v795
        %v1951 = vunpack.c.h.b16 %v795
        %v1952 = vunpack.c.l.b16 %v796
        %v1953 = vunpack.c.h.b16 %v796
        %v1954 = vunpack.c.l.b16 %v797
        %v1955 = vunpack.c.h.b16 %v797
        %v1956 = vunpack.c.l.b16 %v798
        %v1957 = vunpack.c.h.b16 %v798
        %v1958 = vunpack.c.l.b16 %v799
        %v1959 = vunpack.c.h.b16 %v799
        %v1960 = vunpack.c.l.b16 %v800
        %v1961 = vunpack.c.h.b16 %v800
        %v1962 = vunpack.c.l.b16 %v801
        %v1963 = vunpack.c.h.b16 %v801
        %v1964 = vunpack.c.l.b16 %v802
        %v1965 = vunpack.c.h.b16 %v802
        %v1966 = vunpack.c.l.b16 %v803
        %v1967 = vunpack.c.h.b16 %v803
        %v1968 = vunpack.c.l.b16 %v804
        %v1969 = vunpack.c.h.b16 %v804
        %v1970 = vunpack.c.l.b16 %v805
        %v1971 = vunpack.c.h.b16 %v805
        %v1972 = vunpack.c.l.b16 %v806
        %v1973 = vunpack.c.h.b16 %v806
        %v1974 = vunpack.c.l.b16 %v807
        %v1975 = vunpack.c.h.b16 %v807
        %v1976 = vunpack.c.l.b16 %v808
        %v1977 = vunpack.c.h.b16 %v808
        %v1978 = vunpack.c.l.b16 %v809
        %v1979 = vunpack.c.h.b16 %v809
        %v1980 = vunpack.c.l.b16 %v810
        %v1981 = vunpack.c.h.b16 %v810
        %v1982 = vunpack.c.l.b16 %v811
        %v1983 = vunpack.c.h.b16 %v811
        %v1984 = vunpack.c.l.b16 %v812
        %v1985 = vunpack.c.h.b16 %v812
        %v1986 = vunpack.c.l.b16 %v813
        %v1987 = vunpack.c.h.b16 %v813
        %v1988 = vunpack.c.l.b16 %v814
        %v1989 = vunpack.c.h.b16 %v814
        %v1990 = vunpack.c.l.b16 %v815
        %v1991 = vunpack.c.h.b16 %v815
        %v1992 = vunpack.c.l.b16 %v816
        %v1993 = vunpack.c.h.b16 %v816
        %v1994 = vunpack.c.l.b16 %v817
        %v1995 = vunpack.c.h.b16 %v817
        %v1996 = vunpack.c.l.b16 %v818
        %v1997 = vunpack.c.h.b16 %v818
        %v1998 = vunpack.c.l.b16 %v819
        %v1999 = vunpack.c.h.b16 %v819
        %v2000 = vunpack.c.l.b16 %v820
        %v2001 = vunpack.c.h.b16 %v820
        %v2002 = vunpack.c.l.b16 %v821
        %v2003 = vunpack.c.h.b16 %v821
        %v2004 = vunpack.c.l.b16 %v822
        %v2005 = vunpack.c.h.b16 %v822
        %v2006 = vunpack.c.l.b16 %v823
        %v2007 = vunpack.c.h.b16 %v823
        %v2008 = vunpack.c.l.b16 %v824
        %v2009 = vunpack.c.h.b16 %v824
        %v2010 = vunpack.c.l.b16 %v825
        %v2011 = vunpack.c.h.b16 %v825
        %v2012 = vunpack.c.l.b16 %v826
        %v2013 = vunpack.c.h.b16 %v826
        %v2014 = vunpack.c.l.b16 %v827
        %v2015 = vunpack.c.h.b16 %v827
        %v2016 = vunpack.c.l.b16 %v828
        %v2017 = vunpack.c.h.b16 %v828
        %v2018 = vunpack.c.l.b16 %v829
        %v2019 = vunpack.c.h.b16 %v829
        %v2020 = vunpack.c.l.b16 %v830
        %v2021 = vunpack.c.h.b16 %v830
        %v2022 = vunpack.c.l.b16 %v831
        %v2023 = vunpack.c.h.b16 %v831
        %v2024 = vunpack.c.l.b16 %v832
        %v2025 = vunpack.c.h.b16 %v832
        %v2026 = vunpack.c.l.b16 %v833
        %v2027 = vunpack.c.h.b16 %v833
        %v2028 = vunpack.c.l.b16 %v834
        %v2029 = vunpack.c.h.b16 %v834
        %v2030 = vunpack.c.l.b16 %v835
        %v2031 = vunpack.c.h.b16 %v835
        %v2032 = vunpack.c.l.b16 %v836
        %v2033 = vunpack.c.h.b16 %v836
        %v2034 = vunpack.c.l.b16 %v837
        %v2035 = vunpack.c.h.b16 %v837
        %v2036 = vpack.c.b16 %v1910, %v1908
        %v2037 = vpack.c.b16 %v1911, %v1909
        %v2038 = vpack.c.b16 %v1914, %v1912
        %v2039 = vpack.c.b16 %v1915, %v1913
        %v2040 = vpack.c.b16 %v1918, %v1916
        %v2041 = vpack.c.b16 %v1919, %v1917
        %v2042 = vpack.c.b16 %v1922, %v1920
        %v2043 = vpack.c.b16 %v1923, %v1921
        %v2044 = vpack.c.b16 %v1926, %v1924
        %v2045 = vpack.c.b16 %v1927, %v1925
        %v2046 = vpack.c.b16 %v1930, %v1928
        %v2047 = vpack.c.b16 %v1931, %v1929
        %v2048 = vpack.c.b16 %v1934, %v1932
        %v2049 = vpack.c.b16 %v1935, %v1933
        %v2050 = vpack.c.b16 %v1938, %v1936
        %v2051 = vpack.c.b16 %v1939, %v1937
        %v2052 = vpack.c.b16 %v1942, %v1940
        %v2053 = vpack.c.b16 %v1943, %v1941
        %v2054 = vpack.c.b16 %v1946, %v1944
        %v2055 = vpack.c.b16 %v1947, %v1945
        %v2056 = vpack.c.b16 %v1950, %v1948
        %v2057 = vpack.c.b16 %v1951, %v1949
        %v2058 = vpack.c.b16 %v1954, %v1952
        %v2059 = vpack.c.b16 %v1955, %v1953
        %v2060 = vpack.c.b16 %v1958, %v1956
        %v2061 = vpack.c.b16 %v1959, %v1957
        %v2062 = vpack.c.b16 %v1962, %v1960
        %v2063 = vpack.c.b16 %v1963, %v1961
        %v2064 = vpack.c.b16 %v1966, %v1964
        %v2065 = vpack.c.b16 %v1967, %v1965
        %v2066 = vpack.c.b16 %v1970, %v1968
        %v2067 = vpack.c.b16 %v1971, %v1969
        %v2068 = vpack.c.b16 %v1974, %v1972
        %v2069 = vpack.c.b16 %v1975, %v1973
        %v2070 = vpack.c.b16 %v1978, %v1976
        %v2071 = vpack.c.b16 %v1979, %v1977
        %v2072 = vpack.c.b16 %v1982, %v1980
        %v2073 = vpack.c.b16 %v1983, %v1981
        %v2074 = vpack.c.b16 %v1986, %v1984
        %v2075 = vpack.c.b16 %v1987, %v1985
        %v2076 = vpack.c.b16 %v1990, %v1988
        %v2077 = vpack.c.b16 %v1991, %v1989
        %v2078 = vpack.c.b16 %v1994, %v1992
        %v2079 = vpack.c.b16 %v1995, %v1993
        %v2080 = vpack.c.b16 %v1998, %v1996
        %v2081 = vpack.c.b16 %v1999, %v1997
        %v2082 = vpack.c.b16 %v2002, %v2000
        %v2083 = vpack.c.b16 %v2003, %v2001
        %v2084 = vpack.c.b16 %v2006, %v2004
        %v2085 = vpack.c.b16 %v2007, %v2005
        %v2086 = vpack.c.b16 %v2010, %v2008
        %v2087 = vpack.c.b16 %v2011, %v2009
        %v2088 = vpack.c.b16 %v2014, %v2012
        %v2089 = vpack.c.b16 %v2015, %v2013
        %v2090 = vpack.c.b16 %v2018, %v2016
        %v2091 = vpack.c.b16 %v2019, %v2017
        %v2092 = vpack.c.b16 %v2022, %v2020
        %v2093 = vpack.c.b16 %v2023, %v2021
        %v2094 = vpack.c.b16 %v2026, %v2024
        %v2095 = vpack.c.b16 %v2027, %v2025
        %v2096 = vpack.c.b16 %v2030, %v2028
        %v2097 = vpack.c.b16 %v2031, %v2029
        %v2098 = vpack.c.b16 %v2034, %v2032
        %v2099 = vpack.c.b16 %v2035, %v2033
        %2164 = vmatpush.bf16.msra.mxu0 %v2050
        %2165 = vmatpush.bf16.msra.mxu0 %v2048
        %2166 = vmatpush.bf16.msra.mxu0 %v2046
        %2167 = vmatpush.bf16.msra.mxu0 %v2044
        %2168 = vmatpush.bf16.msra.mxu0 %v2042
        %2169 = vmatpush.bf16.msra.mxu0 %v2040
        %2170 = vmatpush.bf16.msra.mxu0 %v2038
        %2171 = vmatpush.bf16.msra.mxu0 %v2036
        %2172 = vmatmul.bf16.gmra.mxu0 %v988
        %v2173 = vpop.f32.mrf.mxu0
        %v2174 = vadd.f32 0.0, %v2173
        %v2175 = vpop.f32.mrf.mxu0
        %2176 = vdwg.mxu0
        %2177 = vmatpush.bf16.msra.mxu0 %v2066
        %2178 = vmatpush.bf16.msra.mxu0 %v2064
        %2179 = vmatpush.bf16.msra.mxu0 %v2062
        %2180 = vmatpush.bf16.msra.mxu0 %v2060
        %2181 = vmatpush.bf16.msra.mxu0 %v2058
        %2182 = vmatpush.bf16.msra.mxu0 %v2056
        %2183 = vmatpush.bf16.msra.mxu0 %v2054
        %2184 = vmatpush.bf16.msra.mxu0 %v2052
        %2185 = vmatmul.bf16.gmra.mxu0 %v989
        %v2186 = vpop.f32.mrf.mxu0
        %v2187 = vadd.f32 %v2174, %v2186
        %v2188 = vpop.f32.mrf.mxu0
        %2189 = vdwg.mxu0
        %2190 = vmatpush.bf16.msra.mxu0 %v2082
        %2191 = vmatpush.bf16.msra.mxu0 %v2080
        %2192 = vmatpush.bf16.msra.mxu0 %v2078
        %2193 = vmatpush.bf16.msra.mxu0 %v2076
        %2194 = vmatpush.bf16.msra.mxu0 %v2074
        %2195 = vmatpush.bf16.msra.mxu0 %v2072
        %2196 = vmatpush.bf16.msra.mxu0 %v2070
        %2197 = vmatpush.bf16.msra.mxu0 %v2068
        %2198 = vmatmul.bf16.gmra.mxu0 %v990
        %v2199 = vpop.f32.mrf.mxu0
        %v2200 = vadd.f32 %v2187, %v2199
        %v2201 = vpop.f32.mrf.mxu0
        %2202 = vdwg.mxu0
        %2203 = vmatpush.bf16.msra.mxu0 %v2098
        %2204 = vmatpush.bf16.msra.mxu0 %v2096
        %2205 = vmatpush.bf16.msra.mxu0 %v2094
        %2206 = vmatpush.bf16.msra.mxu0 %v2092
        %2207 = vmatpush.bf16.msra.mxu0 %v2090
        %2208 = vmatpush.bf16.msra.mxu0 %v2088
        %2209 = vmatpush.bf16.msra.mxu0 %v2086
        %2210 = vmatpush.bf16.msra.mxu0 %v2084
        %2211 = vmatmul.bf16.gmra.mxu0 %v991
        %v2212 = vpop.f32.mrf.mxu0
        %v2213 = vadd.f32 %v2200, %v2212
        %v2214 = vpop.f32.mrf.mxu0
        %2215 = vdwg.mxu0
        %2216 = vmatpush.bf16.msra.mxu0 %v2051
        %2217 = vmatpush.bf16.msra.mxu0 %v2049
        %2218 = vmatpush.bf16.msra.mxu0 %v2047
        %2219 = vmatpush.bf16.msra.mxu0 %v2045
        %2220 = vmatpush.bf16.msra.mxu0 %v2043
        %2221 = vmatpush.bf16.msra.mxu0 %v2041
        %2222 = vmatpush.bf16.msra.mxu0 %v2039
        %2223 = vmatpush.bf16.msra.mxu0 %v2037
        %2224 = vmatmul.bf16.gmra.mxu0 %v988
        %v2225 = vpop.f32.mrf.mxu0
        %v2226 = vadd.f32 0.0, %v2225
        %v2227 = vpop.f32.mrf.mxu0
        %2228 = vdwg.mxu0
        %2229 = vmatpush.bf16.msra.mxu0 %v2067
        %2230 = vmatpush.bf16.msra.mxu0 %v2065
        %2231 = vmatpush.bf16.msra.mxu0 %v2063
        %2232 = vmatpush.bf16.msra.mxu0 %v2061
        %2233 = vmatpush.bf16.msra.mxu0 %v2059
        %2234 = vmatpush.bf16.msra.mxu0 %v2057
        %2235 = vmatpush.bf16.msra.mxu0 %v2055
        %2236 = vmatpush.bf16.msra.mxu0 %v2053
        %2237 = vmatmul.bf16.gmra.mxu0 %v989
        %v2238 = vpop.f32.mrf.mxu0
        %v2239 = vadd.f32 %v2226, %v2238
        %v2240 = vpop.f32.mrf.mxu0
        %2241 = vdwg.mxu0
        %2242 = vmatpush.bf16.msra.mxu0 %v2083
        %2243 = vmatpush.bf16.msra.mxu0 %v2081
        %2244 = vmatpush.bf16.msra.mxu0 %v2079
        %2245 = vmatpush.bf16.msra.mxu0 %v2077
        %2246 = vmatpush.bf16.msra.mxu0 %v2075
        %2247 = vmatpush.bf16.msra.mxu0 %v2073
        %2248 = vmatpush.bf16.msra.mxu0 %v2071
        %2249 = vmatpush.bf16.msra.mxu0 %v2069
        %2250 = vmatmul.bf16.gmra.mxu0 %v990
        %v2251 = vpop.f32.mrf.mxu0
        %v2252 = vadd.f32 %v2239, %v2251
        %v2253 = vpop.f32.mrf.mxu0
        %2254 = vdwg.mxu0
        %2255 = vmatpush.bf16.msra.mxu0 %v2099
        %2256 = vmatpush.bf16.msra.mxu0 %v2097
        %2257 = vmatpush.bf16.msra.mxu0 %v2095
        %2258 = vmatpush.bf16.msra.mxu0 %v2093
        %2259 = vmatpush.bf16.msra.mxu0 %v2091
        %2260 = vmatpush.bf16.msra.mxu0 %v2089
        %2261 = vmatpush.bf16.msra.mxu0 %v2087
        %2262 = vmatpush.bf16.msra.mxu0 %v2085
        %2263 = vmatmul.bf16.gmra.mxu0 %v991
        %v2264 = vpop.f32.mrf.mxu0
        %v2265 = vadd.f32 %v2252, %v2264
        %v2266 = vpop.f32.mrf.mxu0
        %2267 = vdwg.mxu0
        %v2268 = vadd.f32 %v1789, %v2213
        %v2269 = vadd.f32 %v1841, %v2265
        %v2270 = vld [vmem:[%s5] sm:$0x3]
        %v2272 = vperm.slane %v2270, 0
        %v2273 = vperm.slane %v2270, 1
        %v2276 = vmul.f32 %v2268, %v2272
        %v2277 = vmul.f32 %v2269, %v2273
        %v2278 = vld [vmem:[%s6] sm:$0x3]
        %v2280 = vperm.slane %v2278, 0
        %v2281 = vperm.slane %v2278, 1
        %v2284 = vadd.f32 %v2276, %v2280
        %v2285 = vadd.f32 %v2277, %v2281
        %v2286 = vmax.f32 %v2284, 0.0
        %v2287 = vmax.f32 %v2285, 0.0
        %v2288 = vld [vmem:[%s7] sm:$0xff]
        %v2289 = vld [vmem:[%s7 + $0x8] sm:$0xff]
        %v2291 = vsel %vm860, %v2288, 0
        %v2294 = vsel %vm860, %v2289, 0
        %2296 = vmatpush.msra.mxu0 0.0
        %2297 = vmatpush.msra.mxu0 0.0
        %2298 = vmatpush.msra.mxu0 0.0
        %2299 = vmatpush.msra.mxu0 0.0
        %2300 = vmatpush.msra.mxu0 0.0
        %2301 = vmatpush.msra.mxu0 0.0
        %2302 = vmatpush.msra.mxu0 0.0
        %2303 = vmatpush.msra.mxu0 0.0
        %2304 = vmatpush.msra.mxu0 0.0
        %2305 = vmatpush.msra.mxu0 0.0
        %2306 = vmatpush.msra.mxu0 0.0
        %2307 = vmatpush.msra.mxu0 0.0
        %2308 = vmatpush.msra.mxu0 0.0
        %2309 = vmatpush.msra.mxu0 0.0
        %2310 = vmatpush.msra.mxu0 0.0
        %2311 = vmatpush.msra.mxu0 %v2286
        %2312 = vmatmul.f32.gmra.mxu0 %v2291
        %v2313 = vpop.f32.mrf.mxu0
        %v2314 = vadd.f32 0.0, %v2313
        %2315 = vmatmul.f32.gmra.mxu0 %v2294
        %v2316 = vpop.f32.mrf.mxu0
        %v2317 = vadd.f32 0.0, %v2316
        %2318 = vdwg.mxu0
        %2319 = vmatpush.msra.mxu0 0.0
        %2320 = vmatpush.msra.mxu0 0.0
        %2321 = vmatpush.msra.mxu0 0.0
        %2322 = vmatpush.msra.mxu0 0.0
        %2323 = vmatpush.msra.mxu0 0.0
        %2324 = vmatpush.msra.mxu0 0.0
        %2325 = vmatpush.msra.mxu0 0.0
        %2326 = vmatpush.msra.mxu0 0.0
        %2327 = vmatpush.msra.mxu0 0.0
        %2328 = vmatpush.msra.mxu0 0.0
        %2329 = vmatpush.msra.mxu0 0.0
        %2330 = vmatpush.msra.mxu0 0.0
        %2331 = vmatpush.msra.mxu0 0.0
        %2332 = vmatpush.msra.mxu0 0.0
        %2333 = vmatpush.msra.mxu0 0.0
        %2334 = vmatpush.msra.mxu0 %v2287
        %2335 = vmatmul.f32.gmra.mxu0 %v2291
        %v2336 = vpop.f32.mrf.mxu0
        %v2337 = vadd.f32 0.0, %v2336
        %2338 = vmatmul.f32.gmra.mxu0 %v2294
        %v2339 = vpop.f32.mrf.mxu0
        %v2340 = vadd.f32 0.0, %v2339
        %2341 = vdwg.mxu0
        %v2342 = vld [vmem:[#allocation11] sm:$0xff]
        %v2343 = vld [vmem:[#allocation11 + $0x8] sm:$0xff]
        %v2344 = vld [vmem:[#allocation11 + $0x10] sm:$0xff]
        %v2345 = vld [vmem:[#allocation11 + $0x18] sm:$0xff]
        %v2346 = vld [vmem:[#allocation11 + $0x20] sm:$0xff]
        %v2347 = vld [vmem:[#allocation11 + $0x28] sm:$0xff]
        %v2348 = vld [vmem:[#allocation11 + $0x30] sm:$0xff]
        %v2349 = vld [vmem:[#allocation11 + $0x38] sm:$0xff]
        %v2350 = vld [vmem:[#allocation11 + $0x40] sm:$0xff]
        %v2351 = vld [vmem:[#allocation11 + $0x48] sm:$0xff]
        %v2352 = vld [vmem:[#allocation11 + $0x50] sm:$0xff]
        %v2353 = vld [vmem:[#allocation11 + $0x58] sm:$0xff]
        %v2354 = vld [vmem:[#allocation11 + $0x60] sm:$0xff]
        %v2355 = vld [vmem:[#allocation11 + $0x68] sm:$0xff]
        %v2356 = vld [vmem:[#allocation11 + $0x70] sm:$0xff]
        %v2357 = vld [vmem:[#allocation11 + $0x78] sm:$0xff]
        %v2358 = vld [vmem:[#allocation11 + $0x80] sm:$0xff]
        %v2359 = vld [vmem:[#allocation11 + $0x88] sm:$0xff]
        %v2360 = vld [vmem:[#allocation11 + $0x90] sm:$0xff]
        %v2361 = vld [vmem:[#allocation11 + $0x98] sm:$0xff]
        %v2362 = vld [vmem:[#allocation11 + $0xa0] sm:$0xff]
        %v2363 = vld [vmem:[#allocation11 + $0xa8] sm:$0xff]
        %v2364 = vld [vmem:[#allocation11 + $0xb0] sm:$0xff]
        %v2365 = vld [vmem:[#allocation11 + $0xb8] sm:$0xff]
        %v2366 = vld [vmem:[#allocation11 + $0xc0] sm:$0xff]
        %v2367 = vld [vmem:[#allocation11 + $0xc8] sm:$0xff]
        %v2368 = vld [vmem:[#allocation11 + $0xd0] sm:$0xff]
        %v2369 = vld [vmem:[#allocation11 + $0xd8] sm:$0xff]
        %v2370 = vld [vmem:[#allocation11 + $0xe0] sm:$0xff]
        %v2371 = vld [vmem:[#allocation11 + $0xe8] sm:$0xff]
        %v2372 = vld [vmem:[#allocation11 + $0xf0] sm:$0xff]
        %v2373 = vld [vmem:[#allocation11 + $0xf8] sm:$0xff]
        %v2374 = vld [vmem:[#allocation11 + $0x100] sm:$0xff]
        %v2375 = vld [vmem:[#allocation11 + $0x108] sm:$0xff]
        %v2376 = vld [vmem:[#allocation11 + $0x110] sm:$0xff]
        %v2377 = vld [vmem:[#allocation11 + $0x118] sm:$0xff]
        %v2378 = vld [vmem:[#allocation11 + $0x120] sm:$0xff]
        %v2379 = vld [vmem:[#allocation11 + $0x128] sm:$0xff]
        %v2380 = vld [vmem:[#allocation11 + $0x130] sm:$0xff]
        %v2381 = vld [vmem:[#allocation11 + $0x138] sm:$0xff]
        %v2382 = vld [vmem:[#allocation11 + $0x140] sm:$0xff]
        %v2383 = vld [vmem:[#allocation11 + $0x148] sm:$0xff]
        %v2384 = vld [vmem:[#allocation11 + $0x150] sm:$0xff]
        %v2385 = vld [vmem:[#allocation11 + $0x158] sm:$0xff]
        %v2386 = vld [vmem:[#allocation11 + $0x160] sm:$0xff]
        %v2387 = vld [vmem:[#allocation11 + $0x168] sm:$0xff]
        %v2388 = vld [vmem:[#allocation11 + $0x170] sm:$0xff]
        %v2389 = vld [vmem:[#allocation11 + $0x178] sm:$0xff]
        %v2390 = vld [vmem:[#allocation11 + $0x180] sm:$0xff]
        %v2391 = vld [vmem:[#allocation11 + $0x188] sm:$0xff]
        %v2392 = vld [vmem:[#allocation11 + $0x190] sm:$0xff]
        %v2393 = vld [vmem:[#allocation11 + $0x198] sm:$0xff]
        %v2394 = vld [vmem:[#allocation11 + $0x1a0] sm:$0xff]
        %v2395 = vld [vmem:[#allocation11 + $0x1a8] sm:$0xff]
        %v2396 = vld [vmem:[#allocation11 + $0x1b0] sm:$0xff]
        %v2397 = vld [vmem:[#allocation11 + $0x1b8] sm:$0xff]
        %v2398 = vld [vmem:[#allocation11 + $0x1c0] sm:$0xff]
        %v2399 = vld [vmem:[#allocation11 + $0x1c8] sm:$0xff]
        %v2400 = vld [vmem:[#allocation11 + $0x1d0] sm:$0xff]
        %v2401 = vld [vmem:[#allocation11 + $0x1d8] sm:$0xff]
        %v2402 = vld [vmem:[#allocation11 + $0x1e0] sm:$0xff]
        %v2403 = vld [vmem:[#allocation11 + $0x1e8] sm:$0xff]
        %v2404 = vld [vmem:[#allocation11 + $0x1f0] sm:$0xff]
        %v2405 = vld [vmem:[#allocation11 + $0x1f8] sm:$0xff]
        %v2406 = vld [vmem:[#allocation11 + $0x200] sm:$0xff]
        %v2407 = vld [vmem:[#allocation11 + $0x208] sm:$0xff]
        %v2408 = vld [vmem:[#allocation11 + $0x210] sm:$0xff]
        %v2409 = vld [vmem:[#allocation11 + $0x218] sm:$0xff]
        %v2410 = vld [vmem:[#allocation11 + $0x220] sm:$0xff]
        %v2411 = vld [vmem:[#allocation11 + $0x228] sm:$0xff]
        %v2412 = vld [vmem:[#allocation11 + $0x230] sm:$0xff]
        %v2413 = vld [vmem:[#allocation11 + $0x238] sm:$0xff]
        %v2414 = vld [vmem:[#allocation11 + $0x240] sm:$0xff]
        %v2415 = vld [vmem:[#allocation11 + $0x248] sm:$0xff]
        %v2416 = vld [vmem:[#allocation11 + $0x250] sm:$0xff]
        %v2417 = vld [vmem:[#allocation11 + $0x258] sm:$0xff]
        %v2418 = vld [vmem:[#allocation11 + $0x260] sm:$0xff]
        %v2419 = vld [vmem:[#allocation11 + $0x268] sm:$0xff]
        %v2420 = vld [vmem:[#allocation11 + $0x270] sm:$0xff]
        %v2421 = vld [vmem:[#allocation11 + $0x278] sm:$0xff]
        %v2422 = vld [vmem:[#allocation11 + $0x280] sm:$0xff]
        %v2423 = vld [vmem:[#allocation11 + $0x288] sm:$0xff]
        %v2424 = vld [vmem:[#allocation11 + $0x290] sm:$0xff]
        %v2425 = vld [vmem:[#allocation11 + $0x298] sm:$0xff]
        %v2426 = vld [vmem:[#allocation11 + $0x2a0] sm:$0xff]
        %v2427 = vld [vmem:[#allocation11 + $0x2a8] sm:$0xff]
        %v2428 = vld [vmem:[#allocation11 + $0x2b0] sm:$0xff]
        %v2429 = vld [vmem:[#allocation11 + $0x2b8] sm:$0xff]
        %v2430 = vld [vmem:[#allocation11 + $0x2c0] sm:$0xff]
        %v2431 = vld [vmem:[#allocation11 + $0x2c8] sm:$0xff]
        %v2432 = vld [vmem:[#allocation11 + $0x2d0] sm:$0xff]
        %v2433 = vld [vmem:[#allocation11 + $0x2d8] sm:$0xff]
        %v2434 = vld [vmem:[#allocation11 + $0x2e0] sm:$0xff]
        %v2435 = vld [vmem:[#allocation11 + $0x2e8] sm:$0xff]
        %v2436 = vld [vmem:[#allocation11 + $0x2f0] sm:$0xff]
        %v2437 = vld [vmem:[#allocation11 + $0x2f8] sm:$0xff]
        %v2438 = vld [vmem:[#allocation11 + $0x300] sm:$0xff]
        %v2439 = vld [vmem:[#allocation11 + $0x308] sm:$0xff]
        %v2440 = vld [vmem:[#allocation11 + $0x310] sm:$0xff]
        %v2441 = vld [vmem:[#allocation11 + $0x318] sm:$0xff]
        %v2442 = vld [vmem:[#allocation11 + $0x320] sm:$0xff]
        %v2443 = vld [vmem:[#allocation11 + $0x328] sm:$0xff]
        %v2444 = vld [vmem:[#allocation11 + $0x330] sm:$0xff]
        %v2445 = vld [vmem:[#allocation11 + $0x338] sm:$0xff]
        %v2446 = vld [vmem:[#allocation11 + $0x340] sm:$0xff]
        %v2447 = vld [vmem:[#allocation11 + $0x348] sm:$0xff]
        %v2448 = vld [vmem:[#allocation11 + $0x350] sm:$0xff]
        %v2449 = vld [vmem:[#allocation11 + $0x358] sm:$0xff]
        %v2450 = vld [vmem:[#allocation11 + $0x360] sm:$0xff]
        %v2451 = vld [vmem:[#allocation11 + $0x368] sm:$0xff]
        %v2452 = vld [vmem:[#allocation11 + $0x370] sm:$0xff]
        %v2453 = vld [vmem:[#allocation11 + $0x378] sm:$0xff]
        %v2454 = vld [vmem:[#allocation11 + $0x380] sm:$0xff]
        %v2455 = vld [vmem:[#allocation11 + $0x388] sm:$0xff]
        %v2456 = vld [vmem:[#allocation11 + $0x390] sm:$0xff]
        %v2457 = vld [vmem:[#allocation11 + $0x398] sm:$0xff]
        %v2458 = vld [vmem:[#allocation11 + $0x3a0] sm:$0xff]
        %v2459 = vld [vmem:[#allocation11 + $0x3a8] sm:$0xff]
        %v2460 = vld [vmem:[#allocation11 + $0x3b0] sm:$0xff]
        %v2461 = vld [vmem:[#allocation11 + $0x3b8] sm:$0xff]
        %v2462 = vld [vmem:[#allocation11 + $0x3c0] sm:$0xff]
        %v2463 = vld [vmem:[#allocation11 + $0x3c8] sm:$0xff]
        %v2464 = vld [vmem:[#allocation11 + $0x3d0] sm:$0xff]
        %v2465 = vld [vmem:[#allocation11 + $0x3d8] sm:$0xff]
        %v2466 = vld [vmem:[#allocation11 + $0x3e0] sm:$0xff]
        %v2467 = vld [vmem:[#allocation11 + $0x3e8] sm:$0xff]
        %v2468 = vld [vmem:[#allocation11 + $0x3f0] sm:$0xff]
        %v2469 = vld [vmem:[#allocation11 + $0x3f8] sm:$0xff]
        %v2470 = vld [vmem:[%s557] sm:$0xff]
        %v2471 = vld [vmem:[%s557 + $0x8] sm:$0xff]
        %v2472 = vld [vmem:[%s557 + $0x10] sm:$0xff]
        %v2473 = vld [vmem:[%s557 + $0x18] sm:$0xff]
        %v2474 = vld [vmem:[%s557 + $0x20] sm:$0xff]
        %v2475 = vld [vmem:[%s557 + $0x28] sm:$0xff]
        %v2476 = vld [vmem:[%s557 + $0x30] sm:$0xff]
        %v2477 = vld [vmem:[%s557 + $0x38] sm:$0xff]
        %2478 = vmatpush.msra.mxu0 %v2402
        %2479 = vmatpush.msra.mxu0 %v2398
        %2480 = vmatpush.msra.mxu0 %v2394
        %2481 = vmatpush.msra.mxu0 %v2390
        %2482 = vmatpush.msra.mxu0 %v2386
        %2483 = vmatpush.msra.mxu0 %v2382
        %2484 = vmatpush.msra.mxu0 %v2378
        %2485 = vmatpush.msra.mxu0 %v2374
        %2486 = vmatpush.msra.mxu0 %v2370
        %2487 = vmatpush.msra.mxu0 %v2366
        %2488 = vmatpush.msra.mxu0 %v2362
        %2489 = vmatpush.msra.mxu0 %v2358
        %2490 = vmatpush.msra.mxu0 %v2354
        %2491 = vmatpush.msra.mxu0 %v2350
        %2492 = vmatpush.msra.mxu0 %v2346
        %2493 = vmatpush.msra.mxu0 %v2342
        %2494 = vmatmul.f32.gmra.mxu0 %v2314
        %v2495 = vpop.f32.mrf.mxu0
        %v2496 = vadd.f32 %v2470, %v2495
        %2497 = vmatmul.f32.gmra.mxu0 %v2317
        %v2498 = vpop.f32.mrf.mxu0
        %v2499 = vadd.f32 %v2474, %v2498
        %2500 = vdwg.mxu0
        %2501 = vmatpush.msra.mxu0 %v2466
        %2502 = vmatpush.msra.mxu0 %v2462
        %2503 = vmatpush.msra.mxu0 %v2458
        %2504 = vmatpush.msra.mxu0 %v2454
        %2505 = vmatpush.msra.mxu0 %v2450
        %2506 = vmatpush.msra.mxu0 %v2446
        %2507 = vmatpush.msra.mxu0 %v2442
        %2508 = vmatpush.msra.mxu0 %v2438
        %2509 = vmatpush.msra.mxu0 %v2434
        %2510 = vmatpush.msra.mxu0 %v2430
        %2511 = vmatpush.msra.mxu0 %v2426
        %2512 = vmatpush.msra.mxu0 %v2422
        %2513 = vmatpush.msra.mxu0 %v2418
        %2514 = vmatpush.msra.mxu0 %v2414
        %2515 = vmatpush.msra.mxu0 %v2410
        %2516 = vmatpush.msra.mxu0 %v2406
        %2517 = vmatmul.f32.gmra.mxu0 %v2337
        %v2518 = vpop.f32.mrf.mxu0
        %v2519 = vadd.f32 %v2496, %v2518
        %2520 = vmatmul.f32.gmra.mxu0 %v2340
        %v2521 = vpop.f32.mrf.mxu0
        %v2522 = vadd.f32 %v2499, %v2521
        %2523 = vdwg.mxu0
        %2524 = vmatpush.msra.mxu0 %v2403
        %2525 = vmatpush.msra.mxu0 %v2399
        %2526 = vmatpush.msra.mxu0 %v2395
        %2527 = vmatpush.msra.mxu0 %v2391
        %2528 = vmatpush.msra.mxu0 %v2387
        %2529 = vmatpush.msra.mxu0 %v2383
        %2530 = vmatpush.msra.mxu0 %v2379
        %2531 = vmatpush.msra.mxu0 %v2375
        %2532 = vmatpush.msra.mxu0 %v2371
        %2533 = vmatpush.msra.mxu0 %v2367
        %2534 = vmatpush.msra.mxu0 %v2363
        %2535 = vmatpush.msra.mxu0 %v2359
        %2536 = vmatpush.msra.mxu0 %v2355
        %2537 = vmatpush.msra.mxu0 %v2351
        %2538 = vmatpush.msra.mxu0 %v2347
        %2539 = vmatpush.msra.mxu0 %v2343
        %2540 = vmatmul.f32.gmra.mxu0 %v2314
        %v2541 = vpop.f32.mrf.mxu0
        %v2542 = vadd.f32 %v2471, %v2541
        %2543 = vmatmul.f32.gmra.mxu0 %v2317
        %v2544 = vpop.f32.mrf.mxu0
        %v2545 = vadd.f32 %v2475, %v2544
        %2546 = vdwg.mxu0
        %2547 = vmatpush.msra.mxu0 %v2467
        %2548 = vmatpush.msra.mxu0 %v2463
        %2549 = vmatpush.msra.mxu0 %v2459
        %2550 = vmatpush.msra.mxu0 %v2455
        %2551 = vmatpush.msra.mxu0 %v2451
        %2552 = vmatpush.msra.mxu0 %v2447
        %2553 = vmatpush.msra.mxu0 %v2443
        %2554 = vmatpush.msra.mxu0 %v2439
        %2555 = vmatpush.msra.mxu0 %v2435
        %2556 = vmatpush.msra.mxu0 %v2431
        %2557 = vmatpush.msra.mxu0 %v2427
        %2558 = vmatpush.msra.mxu0 %v2423
        %2559 = vmatpush.msra.mxu0 %v2419
        %2560 = vmatpush.msra.mxu0 %v2415
        %2561 = vmatpush.msra.mxu0 %v2411
        %2562 = vmatpush.msra.mxu0 %v2407
        %2563 = vmatmul.f32.gmra.mxu0 %v2337
        %v2564 = vpop.f32.mrf.mxu0
        %v2565 = vadd.f32 %v2542, %v2564
        %2566 = vmatmul.f32.gmra.mxu0 %v2340
        %v2567 = vpop.f32.mrf.mxu0
        %v2568 = vadd.f32 %v2545, %v2567
        %2569 = vdwg.mxu0
        %2570 = vmatpush.msra.mxu0 %v2404
        %2571 = vmatpush.msra.mxu0 %v2400
        %2572 = vmatpush.msra.mxu0 %v2396
        %2573 = vmatpush.msra.mxu0 %v2392
        %2574 = vmatpush.msra.mxu0 %v2388
        %2575 = vmatpush.msra.mxu0 %v2384
        %2576 = vmatpush.msra.mxu0 %v2380
        %2577 = vmatpush.msra.mxu0 %v2376
        %2578 = vmatpush.msra.mxu0 %v2372
        %2579 = vmatpush.msra.mxu0 %v2368
        %2580 = vmatpush.msra.mxu0 %v2364
        %2581 = vmatpush.msra.mxu0 %v2360
        %2582 = vmatpush.msra.mxu0 %v2356
        %2583 = vmatpush.msra.mxu0 %v2352
        %2584 = vmatpush.msra.mxu0 %v2348
        %2585 = vmatpush.msra.mxu0 %v2344
        %2586 = vmatmul.f32.gmra.mxu0 %v2314
        %v2587 = vpop.f32.mrf.mxu0
        %v2588 = vadd.f32 %v2472, %v2587
        %2589 = vmatmul.f32.gmra.mxu0 %v2317
        %v2590 = vpop.f32.mrf.mxu0
        %v2591 = vadd.f32 %v2476, %v2590
        %2592 = vdwg.mxu0
        %2593 = vmatpush.msra.mxu0 %v2468
        %2594 = vmatpush.msra.mxu0 %v2464
        %2595 = vmatpush.msra.mxu0 %v2460
        %2596 = vmatpush.msra.mxu0 %v2456
        %2597 = vmatpush.msra.mxu0 %v2452
        %2598 = vmatpush.msra.mxu0 %v2448
        %2599 = vmatpush.msra.mxu0 %v2444
        %2600 = vmatpush.msra.mxu0 %v2440
        %2601 = vmatpush.msra.mxu0 %v2436
        %2602 = vmatpush.msra.mxu0 %v2432
        %2603 = vmatpush.msra.mxu0 %v2428
        %2604 = vmatpush.msra.mxu0 %v2424
        %2605 = vmatpush.msra.mxu0 %v2420
        %2606 = vmatpush.msra.mxu0 %v2416
        %2607 = vmatpush.msra.mxu0 %v2412
        %2608 = vmatpush.msra.mxu0 %v2408
        %2609 = vmatmul.f32.gmra.mxu0 %v2337
        %v2610 = vpop.f32.mrf.mxu0
        %v2611 = vadd.f32 %v2588, %v2610
        %2612 = vmatmul.f32.gmra.mxu0 %v2340
        %v2613 = vpop.f32.mrf.mxu0
        %v2614 = vadd.f32 %v2591, %v2613
        %2615 = vdwg.mxu0
        %2616 = vmatpush.msra.mxu0 %v2405
        %2617 = vmatpush.msra.mxu0 %v2401
        %2618 = vmatpush.msra.mxu0 %v2397
        %2619 = vmatpush.msra.mxu0 %v2393
        %2620 = vmatpush.msra.mxu0 %v2389
        %2621 = vmatpush.msra.mxu0 %v2385
        %2622 = vmatpush.msra.mxu0 %v2381
        %2623 = vmatpush.msra.mxu0 %v2377
        %2624 = vmatpush.msra.mxu0 %v2373
        %2625 = vmatpush.msra.mxu0 %v2369
        %2626 = vmatpush.msra.mxu0 %v2365
        %2627 = vmatpush.msra.mxu0 %v2361
        %2628 = vmatpush.msra.mxu0 %v2357
        %2629 = vmatpush.msra.mxu0 %v2353
        %2630 = vmatpush.msra.mxu0 %v2349
        %2631 = vmatpush.msra.mxu0 %v2345
        %2632 = vmatmul.f32.gmra.mxu0 %v2314
        %v2633 = vpop.f32.mrf.mxu0
        %v2634 = vadd.f32 %v2473, %v2633
        %2635 = vmatmul.f32.gmra.mxu0 %v2317
        %v2636 = vpop.f32.mrf.mxu0
        %v2637 = vadd.f32 %v2477, %v2636
        %2638 = vdwg.mxu0
        %2639 = vmatpush.msra.mxu0 %v2469
        %2640 = vmatpush.msra.mxu0 %v2465
        %2641 = vmatpush.msra.mxu0 %v2461
        %2642 = vmatpush.msra.mxu0 %v2457
        %2643 = vmatpush.msra.mxu0 %v2453
        %2644 = vmatpush.msra.mxu0 %v2449
        %2645 = vmatpush.msra.mxu0 %v2445
        %2646 = vmatpush.msra.mxu0 %v2441
        %2647 = vmatpush.msra.mxu0 %v2437
        %2648 = vmatpush.msra.mxu0 %v2433
        %2649 = vmatpush.msra.mxu0 %v2429
        %2650 = vmatpush.msra.mxu0 %v2425
        %2651 = vmatpush.msra.mxu0 %v2421
        %2652 = vmatpush.msra.mxu0 %v2417
        %2653 = vmatpush.msra.mxu0 %v2413
        %2654 = vmatpush.msra.mxu0 %v2409
        %2655 = vmatmul.f32.gmra.mxu0 %v2337
        %v2656 = vpop.f32.mrf.mxu0
        %v2657 = vadd.f32 %v2634, %v2656
        %2658 = vmatmul.f32.gmra.mxu0 %v2340
        %v2659 = vpop.f32.mrf.mxu0
        %v2660 = vadd.f32 %v2637, %v2659
        %2661 = vdwg.mxu0
        %v2662 = vpack.c.bf16 %v2522, %v2519
        %v2663 = vpack.c.bf16 %v2568, %v2565
        %v2664 = vpack.c.bf16 %v2614, %v2611
        %v2665 = vpack.c.bf16 %v2660, %v2657
        %v2666 = vld [vmem:[#allocation13] sm:$0xff]
        %v2667 = vld [vmem:[#allocation13 + $0x8] sm:$0xff]
        %v2668 = vld [vmem:[#allocation13 + $0x10] sm:$0xff]
        %v2669 = vld [vmem:[#allocation13 + $0x18] sm:$0xff]
        %v2670 = vld [vmem:[#allocation13 + $0x20] sm:$0xff]
        %v2671 = vld [vmem:[#allocation13 + $0x28] sm:$0xff]
        %v2672 = vld [vmem:[#allocation13 + $0x30] sm:$0xff]
        %v2673 = vld [vmem:[#allocation13 + $0x38] sm:$0xff]
        %v2674 = vld [vmem:[#allocation13 + $0x40] sm:$0xff]
        %v2675 = vld [vmem:[#allocation13 + $0x48] sm:$0xff]
        %v2676 = vld [vmem:[#allocation13 + $0x50] sm:$0xff]
        %v2677 = vld [vmem:[#allocation13 + $0x58] sm:$0xff]
        %v2678 = vld [vmem:[#allocation13 + $0x60] sm:$0xff]
        %v2679 = vld [vmem:[#allocation13 + $0x68] sm:$0xff]
        %v2680 = vld [vmem:[#allocation13 + $0x70] sm:$0xff]
        %v2681 = vld [vmem:[#allocation13 + $0x78] sm:$0xff]
        %v2682 = vld [vmem:[#allocation13 + $0x80] sm:$0xff]
        %v2683 = vld [vmem:[#allocation13 + $0x88] sm:$0xff]
        %v2684 = vld [vmem:[#allocation13 + $0x90] sm:$0xff]
        %v2685 = vld [vmem:[#allocation13 + $0x98] sm:$0xff]
        %v2686 = vld [vmem:[#allocation13 + $0xa0] sm:$0xff]
        %v2687 = vld [vmem:[#allocation13 + $0xa8] sm:$0xff]
        %v2688 = vld [vmem:[#allocation13 + $0xb0] sm:$0xff]
        %v2689 = vld [vmem:[#allocation13 + $0xb8] sm:$0xff]
        %v2690 = vld [vmem:[#allocation13 + $0xc0] sm:$0xff]
        %v2691 = vld [vmem:[#allocation13 + $0xc8] sm:$0xff]
        %v2692 = vld [vmem:[#allocation13 + $0xd0] sm:$0xff]
        %v2693 = vld [vmem:[#allocation13 + $0xd8] sm:$0xff]
        %v2694 = vld [vmem:[#allocation13 + $0xe0] sm:$0xff]
        %v2695 = vld [vmem:[#allocation13 + $0xe8] sm:$0xff]
        %v2696 = vld [vmem:[#allocation13 + $0xf0] sm:$0xff]
        %v2697 = vld [vmem:[#allocation13 + $0xf8] sm:$0xff]
        %v2698 = vld [vmem:[#allocation13 + $0x100] sm:$0xff]
        %v2699 = vld [vmem:[#allocation13 + $0x108] sm:$0xff]
        %v2700 = vld [vmem:[#allocation13 + $0x110] sm:$0xff]
        %v2701 = vld [vmem:[#allocation13 + $0x118] sm:$0xff]
        %v2702 = vld [vmem:[#allocation13 + $0x120] sm:$0xff]
        %v2703 = vld [vmem:[#allocation13 + $0x128] sm:$0xff]
        %v2704 = vld [vmem:[#allocation13 + $0x130] sm:$0xff]
        %v2705 = vld [vmem:[#allocation13 + $0x138] sm:$0xff]
        %v2706 = vld [vmem:[#allocation13 + $0x140] sm:$0xff]
        %v2707 = vld [vmem:[#allocation13 + $0x148] sm:$0xff]
        %v2708 = vld [vmem:[#allocation13 + $0x150] sm:$0xff]
        %v2709 = vld [vmem:[#allocation13 + $0x158] sm:$0xff]
        %v2710 = vld [vmem:[#allocation13 + $0x160] sm:$0xff]
        %v2711 = vld [vmem:[#allocation13 + $0x168] sm:$0xff]
        %v2712 = vld [vmem:[#allocation13 + $0x170] sm:$0xff]
        %v2713 = vld [vmem:[#allocation13 + $0x178] sm:$0xff]
        %v2714 = vld [vmem:[#allocation13 + $0x180] sm:$0xff]
        %v2715 = vld [vmem:[#allocation13 + $0x188] sm:$0xff]
        %v2716 = vld [vmem:[#allocation13 + $0x190] sm:$0xff]
        %v2717 = vld [vmem:[#allocation13 + $0x198] sm:$0xff]
        %v2718 = vld [vmem:[#allocation13 + $0x1a0] sm:$0xff]
        %v2719 = vld [vmem:[#allocation13 + $0x1a8] sm:$0xff]
        %v2720 = vld [vmem:[#allocation13 + $0x1b0] sm:$0xff]
        %v2721 = vld [vmem:[#allocation13 + $0x1b8] sm:$0xff]
        %v2722 = vld [vmem:[#allocation13 + $0x1c0] sm:$0xff]
        %v2723 = vld [vmem:[#allocation13 + $0x1c8] sm:$0xff]
        %v2724 = vld [vmem:[#allocation13 + $0x1d0] sm:$0xff]
        %v2725 = vld [vmem:[#allocation13 + $0x1d8] sm:$0xff]
        %v2726 = vld [vmem:[#allocation13 + $0x1e0] sm:$0xff]
        %v2727 = vld [vmem:[#allocation13 + $0x1e8] sm:$0xff]
        %v2728 = vld [vmem:[#allocation13 + $0x1f0] sm:$0xff]
        %v2729 = vld [vmem:[#allocation13 + $0x1f8] sm:$0xff]
        %v2730 = vld [vmem:[#allocation13 + $0x200] sm:$0xff]
        %v2731 = vld [vmem:[#allocation13 + $0x208] sm:$0xff]
        %v2732 = vld [vmem:[#allocation13 + $0x210] sm:$0xff]
        %v2733 = vld [vmem:[#allocation13 + $0x218] sm:$0xff]
        %v2734 = vld [vmem:[#allocation13 + $0x220] sm:$0xff]
        %v2735 = vld [vmem:[#allocation13 + $0x228] sm:$0xff]
        %v2736 = vld [vmem:[#allocation13 + $0x230] sm:$0xff]
        %v2737 = vld [vmem:[#allocation13 + $0x238] sm:$0xff]
        %v2738 = vld [vmem:[#allocation13 + $0x240] sm:$0xff]
        %v2739 = vld [vmem:[#allocation13 + $0x248] sm:$0xff]
        %v2740 = vld [vmem:[#allocation13 + $0x250] sm:$0xff]
        %v2741 = vld [vmem:[#allocation13 + $0x258] sm:$0xff]
        %v2742 = vld [vmem:[#allocation13 + $0x260] sm:$0xff]
        %v2743 = vld [vmem:[#allocation13 + $0x268] sm:$0xff]
        %v2744 = vld [vmem:[#allocation13 + $0x270] sm:$0xff]
        %v2745 = vld [vmem:[#allocation13 + $0x278] sm:$0xff]
        %v2746 = vld [vmem:[#allocation13 + $0x280] sm:$0xff]
        %v2747 = vld [vmem:[#allocation13 + $0x288] sm:$0xff]
        %v2748 = vld [vmem:[#allocation13 + $0x290] sm:$0xff]
        %v2749 = vld [vmem:[#allocation13 + $0x298] sm:$0xff]
        %v2750 = vld [vmem:[#allocation13 + $0x2a0] sm:$0xff]
        %v2751 = vld [vmem:[#allocation13 + $0x2a8] sm:$0xff]
        %v2752 = vld [vmem:[#allocation13 + $0x2b0] sm:$0xff]
        %v2753 = vld [vmem:[#allocation13 + $0x2b8] sm:$0xff]
        %v2754 = vld [vmem:[#allocation13 + $0x2c0] sm:$0xff]
        %v2755 = vld [vmem:[#allocation13 + $0x2c8] sm:$0xff]
        %v2756 = vld [vmem:[#allocation13 + $0x2d0] sm:$0xff]
        %v2757 = vld [vmem:[#allocation13 + $0x2d8] sm:$0xff]
        %v2758 = vld [vmem:[#allocation13 + $0x2e0] sm:$0xff]
        %v2759 = vld [vmem:[#allocation13 + $0x2e8] sm:$0xff]
        %v2760 = vld [vmem:[#allocation13 + $0x2f0] sm:$0xff]
        %v2761 = vld [vmem:[#allocation13 + $0x2f8] sm:$0xff]
        %v2762 = vld [vmem:[#allocation13 + $0x300] sm:$0xff]
        %v2763 = vld [vmem:[#allocation13 + $0x308] sm:$0xff]
        %v2764 = vld [vmem:[#allocation13 + $0x310] sm:$0xff]
        %v2765 = vld [vmem:[#allocation13 + $0x318] sm:$0xff]
        %v2766 = vld [vmem:[#allocation13 + $0x320] sm:$0xff]
        %v2767 = vld [vmem:[#allocation13 + $0x328] sm:$0xff]
        %v2768 = vld [vmem:[#allocation13 + $0x330] sm:$0xff]
        %v2769 = vld [vmem:[#allocation13 + $0x338] sm:$0xff]
        %v2770 = vld [vmem:[#allocation13 + $0x340] sm:$0xff]
        %v2771 = vld [vmem:[#allocation13 + $0x348] sm:$0xff]
        %v2772 = vld [vmem:[#allocation13 + $0x350] sm:$0xff]
        %v2773 = vld [vmem:[#allocation13 + $0x358] sm:$0xff]
        %v2774 = vld [vmem:[#allocation13 + $0x360] sm:$0xff]
        %v2775 = vld [vmem:[#allocation13 + $0x368] sm:$0xff]
        %v2776 = vld [vmem:[#allocation13 + $0x370] sm:$0xff]
        %v2777 = vld [vmem:[#allocation13 + $0x378] sm:$0xff]
        %v2778 = vld [vmem:[#allocation13 + $0x380] sm:$0xff]
        %v2779 = vld [vmem:[#allocation13 + $0x388] sm:$0xff]
        %v2780 = vld [vmem:[#allocation13 + $0x390] sm:$0xff]
        %v2781 = vld [vmem:[#allocation13 + $0x398] sm:$0xff]
        %v2782 = vld [vmem:[#allocation13 + $0x3a0] sm:$0xff]
        %v2783 = vld [vmem:[#allocation13 + $0x3a8] sm:$0xff]
        %v2784 = vld [vmem:[#allocation13 + $0x3b0] sm:$0xff]
        %v2785 = vld [vmem:[#allocation13 + $0x3b8] sm:$0xff]
        %v2786 = vld [vmem:[#allocation13 + $0x3c0] sm:$0xff]
        %v2787 = vld [vmem:[#allocation13 + $0x3c8] sm:$0xff]
        %v2788 = vld [vmem:[#allocation13 + $0x3d0] sm:$0xff]
        %v2789 = vld [vmem:[#allocation13 + $0x3d8] sm:$0xff]
        %v2790 = vld [vmem:[#allocation13 + $0x3e0] sm:$0xff]
        %v2791 = vld [vmem:[#allocation13 + $0x3e8] sm:$0xff]
        %v2792 = vld [vmem:[#allocation13 + $0x3f0] sm:$0xff]
        %v2793 = vld [vmem:[#allocation13 + $0x3f8] sm:$0xff]
        %v2794 = vld [vmem:[#allocation14] sm:$0xff]
        %v2795 = vld [vmem:[#allocation14 + $0x8] sm:$0xff]
        %v2796 = vld [vmem:[#allocation14 + $0x10] sm:$0xff]
        %v2797 = vld [vmem:[#allocation14 + $0x18] sm:$0xff]
        %v2798 = vld [vmem:[#allocation14 + $0x20] sm:$0xff]
        %v2799 = vld [vmem:[#allocation14 + $0x28] sm:$0xff]
        %v2800 = vld [vmem:[#allocation14 + $0x30] sm:$0xff]
        %v2801 = vld [vmem:[#allocation14 + $0x38] sm:$0xff]
        %v2802 = vld [vmem:[#allocation14 + $0x40] sm:$0xff]
        %v2803 = vld [vmem:[#allocation14 + $0x48] sm:$0xff]
        %v2804 = vld [vmem:[#allocation14 + $0x50] sm:$0xff]
        %v2805 = vld [vmem:[#allocation14 + $0x58] sm:$0xff]
        %v2806 = vld [vmem:[#allocation14 + $0x60] sm:$0xff]
        %v2807 = vld [vmem:[#allocation14 + $0x68] sm:$0xff]
        %v2808 = vld [vmem:[#allocation14 + $0x70] sm:$0xff]
        %v2809 = vld [vmem:[#allocation14 + $0x78] sm:$0xff]
        %v2810 = vld [vmem:[#allocation14 + $0x80] sm:$0xff]
        %v2811 = vld [vmem:[#allocation14 + $0x88] sm:$0xff]
        %v2812 = vld [vmem:[#allocation14 + $0x90] sm:$0xff]
        %v2813 = vld [vmem:[#allocation14 + $0x98] sm:$0xff]
        %v2814 = vld [vmem:[#allocation14 + $0xa0] sm:$0xff]
        %v2815 = vld [vmem:[#allocation14 + $0xa8] sm:$0xff]
        %v2816 = vld [vmem:[#allocation14 + $0xb0] sm:$0xff]
        %v2817 = vld [vmem:[#allocation14 + $0xb8] sm:$0xff]
        %v2818 = vld [vmem:[#allocation14 + $0xc0] sm:$0xff]
        %v2819 = vld [vmem:[#allocation14 + $0xc8] sm:$0xff]
        %v2820 = vld [vmem:[#allocation14 + $0xd0] sm:$0xff]
        %v2821 = vld [vmem:[#allocation14 + $0xd8] sm:$0xff]
        %v2822 = vld [vmem:[#allocation14 + $0xe0] sm:$0xff]
        %v2823 = vld [vmem:[#allocation14 + $0xe8] sm:$0xff]
        %v2824 = vld [vmem:[#allocation14 + $0xf0] sm:$0xff]
        %v2825 = vld [vmem:[#allocation14 + $0xf8] sm:$0xff]
        %v2826 = vld [vmem:[#allocation14 + $0x100] sm:$0xff]
        %v2827 = vld [vmem:[#allocation14 + $0x108] sm:$0xff]
        %v2828 = vld [vmem:[#allocation14 + $0x110] sm:$0xff]
        %v2829 = vld [vmem:[#allocation14 + $0x118] sm:$0xff]
        %v2830 = vld [vmem:[#allocation14 + $0x120] sm:$0xff]
        %v2831 = vld [vmem:[#allocation14 + $0x128] sm:$0xff]
        %v2832 = vld [vmem:[#allocation14 + $0x130] sm:$0xff]
        %v2833 = vld [vmem:[#allocation14 + $0x138] sm:$0xff]
        %v2834 = vld [vmem:[#allocation14 + $0x140] sm:$0xff]
        %v2835 = vld [vmem:[#allocation14 + $0x148] sm:$0xff]
        %v2836 = vld [vmem:[#allocation14 + $0x150] sm:$0xff]
        %v2837 = vld [vmem:[#allocation14 + $0x158] sm:$0xff]
        %v2838 = vld [vmem:[#allocation14 + $0x160] sm:$0xff]
        %v2839 = vld [vmem:[#allocation14 + $0x168] sm:$0xff]
        %v2840 = vld [vmem:[#allocation14 + $0x170] sm:$0xff]
        %v2841 = vld [vmem:[#allocation14 + $0x178] sm:$0xff]
        %v2842 = vld [vmem:[#allocation14 + $0x180] sm:$0xff]
        %v2843 = vld [vmem:[#allocation14 + $0x188] sm:$0xff]
        %v2844 = vld [vmem:[#allocation14 + $0x190] sm:$0xff]
        %v2845 = vld [vmem:[#allocation14 + $0x198] sm:$0xff]
        %v2846 = vld [vmem:[#allocation14 + $0x1a0] sm:$0xff]
        %v2847 = vld [vmem:[#allocation14 + $0x1a8] sm:$0xff]
        %v2848 = vld [vmem:[#allocation14 + $0x1b0] sm:$0xff]
        %v2849 = vld [vmem:[#allocation14 + $0x1b8] sm:$0xff]
        %v2850 = vld [vmem:[#allocation14 + $0x1c0] sm:$0xff]
        %v2851 = vld [vmem:[#allocation14 + $0x1c8] sm:$0xff]
        %v2852 = vld [vmem:[#allocation14 + $0x1d0] sm:$0xff]
        %v2853 = vld [vmem:[#allocation14 + $0x1d8] sm:$0xff]
        %v2854 = vld [vmem:[#allocation14 + $0x1e0] sm:$0xff]
        %v2855 = vld [vmem:[#allocation14 + $0x1e8] sm:$0xff]
        %v2856 = vld [vmem:[#allocation14 + $0x1f0] sm:$0xff]
        %v2857 = vld [vmem:[#allocation14 + $0x1f8] sm:$0xff]
        %v2858 = vld [vmem:[#allocation14 + $0x200] sm:$0xff]
        %v2859 = vld [vmem:[#allocation14 + $0x208] sm:$0xff]
        %v2860 = vld [vmem:[#allocation14 + $0x210] sm:$0xff]
        %v2861 = vld [vmem:[#allocation14 + $0x218] sm:$0xff]
        %v2862 = vld [vmem:[#allocation14 + $0x220] sm:$0xff]
        %v2863 = vld [vmem:[#allocation14 + $0x228] sm:$0xff]
        %v2864 = vld [vmem:[#allocation14 + $0x230] sm:$0xff]
        %v2865 = vld [vmem:[#allocation14 + $0x238] sm:$0xff]
        %v2866 = vld [vmem:[#allocation14 + $0x240] sm:$0xff]
        %v2867 = vld [vmem:[#allocation14 + $0x248] sm:$0xff]
        %v2868 = vld [vmem:[#allocation14 + $0x250] sm:$0xff]
        %v2869 = vld [vmem:[#allocation14 + $0x258] sm:$0xff]
        %v2870 = vld [vmem:[#allocation14 + $0x260] sm:$0xff]
        %v2871 = vld [vmem:[#allocation14 + $0x268] sm:$0xff]
        %v2872 = vld [vmem:[#allocation14 + $0x270] sm:$0xff]
        %v2873 = vld [vmem:[#allocation14 + $0x278] sm:$0xff]
        %v2874 = vld [vmem:[#allocation14 + $0x280] sm:$0xff]
        %v2875 = vld [vmem:[#allocation14 + $0x288] sm:$0xff]
        %v2876 = vld [vmem:[#allocation14 + $0x290] sm:$0xff]
        %v2877 = vld [vmem:[#allocation14 + $0x298] sm:$0xff]
        %v2878 = vld [vmem:[#allocation14 + $0x2a0] sm:$0xff]
        %v2879 = vld [vmem:[#allocation14 + $0x2a8] sm:$0xff]
        %v2880 = vld [vmem:[#allocation14 + $0x2b0] sm:$0xff]
        %v2881 = vld [vmem:[#allocation14 + $0x2b8] sm:$0xff]
        %v2882 = vld [vmem:[#allocation14 + $0x2c0] sm:$0xff]
        %v2883 = vld [vmem:[#allocation14 + $0x2c8] sm:$0xff]
        %v2884 = vld [vmem:[#allocation14 + $0x2d0] sm:$0xff]
        %v2885 = vld [vmem:[#allocation14 + $0x2d8] sm:$0xff]
        %v2886 = vld [vmem:[#allocation14 + $0x2e0] sm:$0xff]
        %v2887 = vld [vmem:[#allocation14 + $0x2e8] sm:$0xff]
        %v2888 = vld [vmem:[#allocation14 + $0x2f0] sm:$0xff]
        %v2889 = vld [vmem:[#allocation14 + $0x2f8] sm:$0xff]
        %v2890 = vld [vmem:[#allocation14 + $0x300] sm:$0xff]
        %v2891 = vld [vmem:[#allocation14 + $0x308] sm:$0xff]
        %v2892 = vld [vmem:[#allocation14 + $0x310] sm:$0xff]
        %v2893 = vld [vmem:[#allocation14 + $0x318] sm:$0xff]
        %v2894 = vld [vmem:[#allocation14 + $0x320] sm:$0xff]
        %v2895 = vld [vmem:[#allocation14 + $0x328] sm:$0xff]
        %v2896 = vld [vmem:[#allocation14 + $0x330] sm:$0xff]
        %v2897 = vld [vmem:[#allocation14 + $0x338] sm:$0xff]
        %v2898 = vld [vmem:[#allocation14 + $0x340] sm:$0xff]
        %v2899 = vld [vmem:[#allocation14 + $0x348] sm:$0xff]
        %v2900 = vld [vmem:[#allocation14 + $0x350] sm:$0xff]
        %v2901 = vld [vmem:[#allocation14 + $0x358] sm:$0xff]
        %v2902 = vld [vmem:[#allocation14 + $0x360] sm:$0xff]
        %v2903 = vld [vmem:[#allocation14 + $0x368] sm:$0xff]
        %v2904 = vld [vmem:[#allocation14 + $0x370] sm:$0xff]
        %v2905 = vld [vmem:[#allocation14 + $0x378] sm:$0xff]
        %v2906 = vld [vmem:[#allocation14 + $0x380] sm:$0xff]
        %v2907 = vld [vmem:[#allocation14 + $0x388] sm:$0xff]
        %v2908 = vld [vmem:[#allocation14 + $0x390] sm:$0xff]
        %v2909 = vld [vmem:[#allocation14 + $0x398] sm:$0xff]
        %v2910 = vld [vmem:[#allocation14 + $0x3a0] sm:$0xff]
        %v2911 = vld [vmem:[#allocation14 + $0x3a8] sm:$0xff]
        %v2912 = vld [vmem:[#allocation14 + $0x3b0] sm:$0xff]
        %v2913 = vld [vmem:[#allocation14 + $0x3b8] sm:$0xff]
        %v2914 = vld [vmem:[#allocation14 + $0x3c0] sm:$0xff]
        %v2915 = vld [vmem:[#allocation14 + $0x3c8] sm:$0xff]
        %v2916 = vld [vmem:[#allocation14 + $0x3d0] sm:$0xff]
        %v2917 = vld [vmem:[#allocation14 + $0x3d8] sm:$0xff]
        %v2918 = vld [vmem:[#allocation14 + $0x3e0] sm:$0xff]
        %v2919 = vld [vmem:[#allocation14 + $0x3e8] sm:$0xff]
        %v2920 = vld [vmem:[#allocation14 + $0x3f0] sm:$0xff]
        %v2921 = vld [vmem:[#allocation14 + $0x3f8] sm:$0xff]
        %v2922 = vld [vmem:[#allocation16] sm:$0xff]
        %v2923 = vld [vmem:[#allocation16 + $0x8] sm:$0xff]
        %v2924 = vld [vmem:[#allocation16 + $0x10] sm:$0xff]
        %v2925 = vld [vmem:[#allocation16 + $0x18] sm:$0xff]
        %v2926 = vld [vmem:[#allocation16 + $0x20] sm:$0xff]
        %v2927 = vld [vmem:[#allocation16 + $0x28] sm:$0xff]
        %v2928 = vld [vmem:[#allocation16 + $0x30] sm:$0xff]
        %v2929 = vld [vmem:[#allocation16 + $0x38] sm:$0xff]
        %v2930 = vld [vmem:[#allocation16 + $0x40] sm:$0xff]
        %v2931 = vld [vmem:[#allocation16 + $0x48] sm:$0xff]
        %v2932 = vld [vmem:[#allocation16 + $0x50] sm:$0xff]
        %v2933 = vld [vmem:[#allocation16 + $0x58] sm:$0xff]
        %v2934 = vld [vmem:[#allocation16 + $0x60] sm:$0xff]
        %v2935 = vld [vmem:[#allocation16 + $0x68] sm:$0xff]
        %v2936 = vld [vmem:[#allocation16 + $0x70] sm:$0xff]
        %v2937 = vld [vmem:[#allocation16 + $0x78] sm:$0xff]
        %v2938 = vld [vmem:[#allocation16 + $0x80] sm:$0xff]
        %v2939 = vld [vmem:[#allocation16 + $0x88] sm:$0xff]
        %v2940 = vld [vmem:[#allocation16 + $0x90] sm:$0xff]
        %v2941 = vld [vmem:[#allocation16 + $0x98] sm:$0xff]
        %v2942 = vld [vmem:[#allocation16 + $0xa0] sm:$0xff]
        %v2943 = vld [vmem:[#allocation16 + $0xa8] sm:$0xff]
        %v2944 = vld [vmem:[#allocation16 + $0xb0] sm:$0xff]
        %v2945 = vld [vmem:[#allocation16 + $0xb8] sm:$0xff]
        %v2946 = vld [vmem:[#allocation16 + $0xc0] sm:$0xff]
        %v2947 = vld [vmem:[#allocation16 + $0xc8] sm:$0xff]
        %v2948 = vld [vmem:[#allocation16 + $0xd0] sm:$0xff]
        %v2949 = vld [vmem:[#allocation16 + $0xd8] sm:$0xff]
        %v2950 = vld [vmem:[#allocation16 + $0xe0] sm:$0xff]
        %v2951 = vld [vmem:[#allocation16 + $0xe8] sm:$0xff]
        %v2952 = vld [vmem:[#allocation16 + $0xf0] sm:$0xff]
        %v2953 = vld [vmem:[#allocation16 + $0xf8] sm:$0xff]
        %v2954 = vld [vmem:[#allocation16 + $0x100] sm:$0xff]
        %v2955 = vld [vmem:[#allocation16 + $0x108] sm:$0xff]
        %v2956 = vld [vmem:[#allocation16 + $0x110] sm:$0xff]
        %v2957 = vld [vmem:[#allocation16 + $0x118] sm:$0xff]
        %v2958 = vld [vmem:[#allocation16 + $0x120] sm:$0xff]
        %v2959 = vld [vmem:[#allocation16 + $0x128] sm:$0xff]
        %v2960 = vld [vmem:[#allocation16 + $0x130] sm:$0xff]
        %v2961 = vld [vmem:[#allocation16 + $0x138] sm:$0xff]
        %v2962 = vld [vmem:[#allocation16 + $0x140] sm:$0xff]
        %v2963 = vld [vmem:[#allocation16 + $0x148] sm:$0xff]
        %v2964 = vld [vmem:[#allocation16 + $0x150] sm:$0xff]
        %v2965 = vld [vmem:[#allocation16 + $0x158] sm:$0xff]
        %v2966 = vld [vmem:[#allocation16 + $0x160] sm:$0xff]
        %v2967 = vld [vmem:[#allocation16 + $0x168] sm:$0xff]
        %v2968 = vld [vmem:[#allocation16 + $0x170] sm:$0xff]
        %v2969 = vld [vmem:[#allocation16 + $0x178] sm:$0xff]
        %v2970 = vld [vmem:[#allocation16 + $0x180] sm:$0xff]
        %v2971 = vld [vmem:[#allocation16 + $0x188] sm:$0xff]
        %v2972 = vld [vmem:[#allocation16 + $0x190] sm:$0xff]
        %v2973 = vld [vmem:[#allocation16 + $0x198] sm:$0xff]
        %v2974 = vld [vmem:[#allocation16 + $0x1a0] sm:$0xff]
        %v2975 = vld [vmem:[#allocation16 + $0x1a8] sm:$0xff]
        %v2976 = vld [vmem:[#allocation16 + $0x1b0] sm:$0xff]
        %v2977 = vld [vmem:[#allocation16 + $0x1b8] sm:$0xff]
        %v2978 = vld [vmem:[#allocation16 + $0x1c0] sm:$0xff]
        %v2979 = vld [vmem:[#allocation16 + $0x1c8] sm:$0xff]
        %v2980 = vld [vmem:[#allocation16 + $0x1d0] sm:$0xff]
        %v2981 = vld [vmem:[#allocation16 + $0x1d8] sm:$0xff]
        %v2982 = vld [vmem:[#allocation16 + $0x1e0] sm:$0xff]
        %v2983 = vld [vmem:[#allocation16 + $0x1e8] sm:$0xff]
        %v2984 = vld [vmem:[#allocation16 + $0x1f0] sm:$0xff]
        %v2985 = vld [vmem:[#allocation16 + $0x1f8] sm:$0xff]
        %v2986 = vld [vmem:[#allocation16 + $0x200] sm:$0xff]
        %v2987 = vld [vmem:[#allocation16 + $0x208] sm:$0xff]
        %v2988 = vld [vmem:[#allocation16 + $0x210] sm:$0xff]
        %v2989 = vld [vmem:[#allocation16 + $0x218] sm:$0xff]
        %v2990 = vld [vmem:[#allocation16 + $0x220] sm:$0xff]
        %v2991 = vld [vmem:[#allocation16 + $0x228] sm:$0xff]
        %v2992 = vld [vmem:[#allocation16 + $0x230] sm:$0xff]
        %v2993 = vld [vmem:[#allocation16 + $0x238] sm:$0xff]
        %v2994 = vld [vmem:[#allocation16 + $0x240] sm:$0xff]
        %v2995 = vld [vmem:[#allocation16 + $0x248] sm:$0xff]
        %v2996 = vld [vmem:[#allocation16 + $0x250] sm:$0xff]
        %v2997 = vld [vmem:[#allocation16 + $0x258] sm:$0xff]
        %v2998 = vld [vmem:[#allocation16 + $0x260] sm:$0xff]
        %v2999 = vld [vmem:[#allocation16 + $0x268] sm:$0xff]
        %v3000 = vld [vmem:[#allocation16 + $0x270] sm:$0xff]
        %v3001 = vld [vmem:[#allocation16 + $0x278] sm:$0xff]
        %v3002 = vld [vmem:[#allocation16 + $0x280] sm:$0xff]
        %v3003 = vld [vmem:[#allocation16 + $0x288] sm:$0xff]
        %v3004 = vld [vmem:[#allocation16 + $0x290] sm:$0xff]
        %v3005 = vld [vmem:[#allocation16 + $0x298] sm:$0xff]
        %v3006 = vld [vmem:[#allocation16 + $0x2a0] sm:$0xff]
        %v3007 = vld [vmem:[#allocation16 + $0x2a8] sm:$0xff]
        %v3008 = vld [vmem:[#allocation16 + $0x2b0] sm:$0xff]
        %v3009 = vld [vmem:[#allocation16 + $0x2b8] sm:$0xff]
        %v3010 = vld [vmem:[#allocation16 + $0x2c0] sm:$0xff]
        %v3011 = vld [vmem:[#allocation16 + $0x2c8] sm:$0xff]
        %v3012 = vld [vmem:[#allocation16 + $0x2d0] sm:$0xff]
        %v3013 = vld [vmem:[#allocation16 + $0x2d8] sm:$0xff]
        %v3014 = vld [vmem:[#allocation16 + $0x2e0] sm:$0xff]
        %v3015 = vld [vmem:[#allocation16 + $0x2e8] sm:$0xff]
        %v3016 = vld [vmem:[#allocation16 + $0x2f0] sm:$0xff]
        %v3017 = vld [vmem:[#allocation16 + $0x2f8] sm:$0xff]
        %v3018 = vld [vmem:[#allocation16 + $0x300] sm:$0xff]
        %v3019 = vld [vmem:[#allocation16 + $0x308] sm:$0xff]
        %v3020 = vld [vmem:[#allocation16 + $0x310] sm:$0xff]
        %v3021 = vld [vmem:[#allocation16 + $0x318] sm:$0xff]
        %v3022 = vld [vmem:[#allocation16 + $0x320] sm:$0xff]
        %v3023 = vld [vmem:[#allocation16 + $0x328] sm:$0xff]
        %v3024 = vld [vmem:[#allocation16 + $0x330] sm:$0xff]
        %v3025 = vld [vmem:[#allocation16 + $0x338] sm:$0xff]
        %v3026 = vld [vmem:[#allocation16 + $0x340] sm:$0xff]
        %v3027 = vld [vmem:[#allocation16 + $0x348] sm:$0xff]
        %v3028 = vld [vmem:[#allocation16 + $0x350] sm:$0xff]
        %v3029 = vld [vmem:[#allocation16 + $0x358] sm:$0xff]
        %v3030 = vld [vmem:[#allocation16 + $0x360] sm:$0xff]
        %v3031 = vld [vmem:[#allocation16 + $0x368] sm:$0xff]
        %v3032 = vld [vmem:[#allocation16 + $0x370] sm:$0xff]
        %v3033 = vld [vmem:[#allocation16 + $0x378] sm:$0xff]
        %v3034 = vld [vmem:[#allocation16 + $0x380] sm:$0xff]
        %v3035 = vld [vmem:[#allocation16 + $0x388] sm:$0xff]
        %v3036 = vld [vmem:[#allocation16 + $0x390] sm:$0xff]
        %v3037 = vld [vmem:[#allocation16 + $0x398] sm:$0xff]
        %v3038 = vld [vmem:[#allocation16 + $0x3a0] sm:$0xff]
        %v3039 = vld [vmem:[#allocation16 + $0x3a8] sm:$0xff]
        %v3040 = vld [vmem:[#allocation16 + $0x3b0] sm:$0xff]
        %v3041 = vld [vmem:[#allocation16 + $0x3b8] sm:$0xff]
        %v3042 = vld [vmem:[#allocation16 + $0x3c0] sm:$0xff]
        %v3043 = vld [vmem:[#allocation16 + $0x3c8] sm:$0xff]
        %v3044 = vld [vmem:[#allocation16 + $0x3d0] sm:$0xff]
        %v3045 = vld [vmem:[#allocation16 + $0x3d8] sm:$0xff]
        %v3046 = vld [vmem:[#allocation16 + $0x3e0] sm:$0xff]
        %v3047 = vld [vmem:[#allocation16 + $0x3e8] sm:$0xff]
        %v3048 = vld [vmem:[#allocation16 + $0x3f0] sm:$0xff]
        %v3049 = vld [vmem:[#allocation16 + $0x3f8] sm:$0xff]
        %v3050 = vadd.s32 %v839, 8
        %v3051 = vsub.s32 %v3050, 1
        %vm3052 = vcmp.eq.s32.totalorder %v841, %v3051
        %v3053 = vsel %vm3052, 1.0, 0.0
        %v3054 = vpack.c.bf16 %v3053, %v844
        %v3055 = vadd.s32 %v3050, 1
        %vm3056 = vcmp.eq.s32.totalorder %v841, %v3055
        %v3057 = vsel %vm3056, 1.0, 0.0
        %v3058 = vpack.c.bf16 %v3057, %v848
        %vm3059 = vcmask 130048
        %v3061 = vsel %vm3059, %v3054, 0
        %3063 = vmatpush.bf16.msra.mxu0 0
        %3064 = vmatpush.bf16.msra.mxu0 0
        %3065 = vmatpush.bf16.msra.mxu0 0
        %3066 = vmatpush.bf16.msra.mxu0 0
        %3067 = vmatpush.bf16.msra.mxu0 0
        %3068 = vmatpush.bf16.msra.mxu0 0
        %3069 = vmatpush.bf16.msra.mxu0 0
        %3070 = vmatpush.bf16.msra.mxu0 %v2662
        %3071 = vmatmul.bf16.gmra.mxu0 %v3061
        %v3072 = vpop.f32.mrf.mxu0
        %v3073 = vadd.f32 0.0, %v3072
        %v3074 = vpop.f32.mrf.mxu0
        %v3075 = vadd.f32 0.0, %v3074
        %3076 = vdwg.mxu0
        %3077 = vmatpush.bf16.msra.mxu0 0
        %3078 = vmatpush.bf16.msra.mxu0 0
        %3079 = vmatpush.bf16.msra.mxu0 0
        %3080 = vmatpush.bf16.msra.mxu0 0
        %3081 = vmatpush.bf16.msra.mxu0 0
        %3082 = vmatpush.bf16.msra.mxu0 0
        %3083 = vmatpush.bf16.msra.mxu0 0
        %3084 = vmatpush.bf16.msra.mxu0 %v2663
        %3085 = vmatmul.bf16.gmra.mxu0 %v3061
        %v3086 = vpop.f32.mrf.mxu0
        %v3087 = vadd.f32 0.0, %v3086
        %v3088 = vpop.f32.mrf.mxu0
        %v3089 = vadd.f32 0.0, %v3088
        %3090 = vdwg.mxu0
        %3091 = vmatpush.bf16.msra.mxu0 0
        %3092 = vmatpush.bf16.msra.mxu0 0
        %3093 = vmatpush.bf16.msra.mxu0 0
        %3094 = vmatpush.bf16.msra.mxu0 0
        %3095 = vmatpush.bf16.msra.mxu0 0
        %3096 = vmatpush.bf16.msra.mxu0 0
        %3097 = vmatpush.bf16.msra.mxu0 0
        %3098 = vmatpush.bf16.msra.mxu0 %v2664
        %3099 = vmatmul.bf16.gmra.mxu0 %v3061
        %v3100 = vpop.f32.mrf.mxu0
        %v3101 = vadd.f32 0.0, %v3100
        %v3102 = vpop.f32.mrf.mxu0
        %v3103 = vadd.f32 0.0, %v3102
        %3104 = vdwg.mxu0
        %3105 = vmatpush.bf16.msra.mxu0 0
        %3106 = vmatpush.bf16.msra.mxu0 0
        %3107 = vmatpush.bf16.msra.mxu0 0
        %3108 = vmatpush.bf16.msra.mxu0 0
        %3109 = vmatpush.bf16.msra.mxu0 0
        %3110 = vmatpush.bf16.msra.mxu0 0
        %3111 = vmatpush.bf16.msra.mxu0 0
        %3112 = vmatpush.bf16.msra.mxu0 %v2665
        %3113 = vmatmul.bf16.gmra.mxu0 %v3061
        %v3114 = vpop.f32.mrf.mxu0
        %v3115 = vadd.f32 0.0, %v3114
        %v3116 = vpop.f32.mrf.mxu0
        %v3117 = vadd.f32 0.0, %v3116
        %3118 = vdwg.mxu0
        %v3119 = vpack.c.bf16 %v3075, %v3073
        %v3120 = vpack.c.bf16 %v3089, %v3087
        %v3121 = vpack.c.bf16 %v3103, %v3101
        %v3122 = vpack.c.bf16 %v3117, %v3115
        %v3124 = vsel %vm3059, %v3058, 0
        %3126 = vmatpush.bf16.msra.mxu0 0
        %3127 = vmatpush.bf16.msra.mxu0 0
        %3128 = vmatpush.bf16.msra.mxu0 0
        %3129 = vmatpush.bf16.msra.mxu0 0
        %3130 = vmatpush.bf16.msra.mxu0 0
        %3131 = vmatpush.bf16.msra.mxu0 0
        %3132 = vmatpush.bf16.msra.mxu0 0
        %3133 = vmatpush.bf16.msra.mxu0 %v2662
        %3134 = vmatmul.bf16.gmra.mxu0 %v3124
        %v3135 = vpop.f32.mrf.mxu0
        %v3136 = vadd.f32 0.0, %v3135
        %v3137 = vpop.f32.mrf.mxu0
        %v3138 = vadd.f32 0.0, %v3137
        %3139 = vdwg.mxu0
        %3140 = vmatpush.bf16.msra.mxu0 0
        %3141 = vmatpush.bf16.msra.mxu0 0
        %3142 = vmatpush.bf16.msra.mxu0 0
        %3143 = vmatpush.bf16.msra.mxu0 0
        %3144 = vmatpush.bf16.msra.mxu0 0
        %3145 = vmatpush.bf16.msra.mxu0 0
        %3146 = vmatpush.bf16.msra.mxu0 0
        %3147 = vmatpush.bf16.msra.mxu0 %v2663
        %3148 = vmatmul.bf16.gmra.mxu0 %v3124
        %v3149 = vpop.f32.mrf.mxu0
        %v3150 = vadd.f32 0.0, %v3149
        %v3151 = vpop.f32.mrf.mxu0
        %v3152 = vadd.f32 0.0, %v3151
        %3153 = vdwg.mxu0
        %3154 = vmatpush.bf16.msra.mxu0 0
        %3155 = vmatpush.bf16.msra.mxu0 0
        %3156 = vmatpush.bf16.msra.mxu0 0
        %3157 = vmatpush.bf16.msra.mxu0 0
        %3158 = vmatpush.bf16.msra.mxu0 0
        %3159 = vmatpush.bf16.msra.mxu0 0
        %3160 = vmatpush.bf16.msra.mxu0 0
        %3161 = vmatpush.bf16.msra.mxu0 %v2664
        %3162 = vmatmul.bf16.gmra.mxu0 %v3124
        %v3163 = vpop.f32.mrf.mxu0
        %v3164 = vadd.f32 0.0, %v3163
        %v3165 = vpop.f32.mrf.mxu0
        %v3166 = vadd.f32 0.0, %v3165
        %3167 = vdwg.mxu0
        %3168 = vmatpush.bf16.msra.mxu0 0
        %3169 = vmatpush.bf16.msra.mxu0 0
        %3170 = vmatpush.bf16.msra.mxu0 0
        %3171 = vmatpush.bf16.msra.mxu0 0
        %3172 = vmatpush.bf16.msra.mxu0 0
        %3173 = vmatpush.bf16.msra.mxu0 0
        %3174 = vmatpush.bf16.msra.mxu0 0
        %3175 = vmatpush.bf16.msra.mxu0 %v2665
        %3176 = vmatmul.bf16.gmra.mxu0 %v3124
        %v3177 = vpop.f32.mrf.mxu0
        %v3178 = vadd.f32 0.0, %v3177
        %v3179 = vpop.f32.mrf.mxu0
        %v3180 = vadd.f32 0.0, %v3179
        %3181 = vdwg.mxu0
        %v3182 = vpack.c.bf16 %v3138, %v3136
        %v3183 = vpack.c.bf16 %v3152, %v3150
        %v3184 = vpack.c.bf16 %v3166, %v3164
        %v3185 = vpack.c.bf16 %v3180, %v3178
        %v3314 = vunpack.c.l.b16 %v2794
        %v3315 = vunpack.c.h.b16 %v2794
        %v3316 = vunpack.c.l.b16 %v2795
        %v3317 = vunpack.c.h.b16 %v2795
        %v3318 = vunpack.c.l.b16 %v2796
        %v3319 = vunpack.c.h.b16 %v2796
        %v3320 = vunpack.c.l.b16 %v2797
        %v3321 = vunpack.c.h.b16 %v2797
        %v3322 = vunpack.c.l.b16 %v2798
        %v3323 = vunpack.c.h.b16 %v2798
        %v3324 = vunpack.c.l.b16 %v2799
        %v3325 = vunpack.c.h.b16 %v2799
        %v3326 = vunpack.c.l.b16 %v2800
        %v3327 = vunpack.c.h.b16 %v2800
        %v3328 = vunpack.c.l.b16 %v2801
        %v3329 = vunpack.c.h.b16 %v2801
        %v3330 = vunpack.c.l.b16 %v2802
        %v3331 = vunpack.c.h.b16 %v2802
        %v3332 = vunpack.c.l.b16 %v2803
        %v3333 = vunpack.c.h.b16 %v2803
        %v3334 = vunpack.c.l.b16 %v2804
        %v3335 = vunpack.c.h.b16 %v2804
        %v3336 = vunpack.c.l.b16 %v2805
        %v3337 = vunpack.c.h.b16 %v2805
        %v3338 = vunpack.c.l.b16 %v2806
        %v3339 = vunpack.c.h.b16 %v2806
        %v3340 = vunpack.c.l.b16 %v2807
        %v3341 = vunpack.c.h.b16 %v2807
        %v3342 = vunpack.c.l.b16 %v2808
        %v3343 = vunpack.c.h.b16 %v2808
        %v3344 = vunpack.c.l.b16 %v2809
        %v3345 = vunpack.c.h.b16 %v2809
        %v3346 = vunpack.c.l.b16 %v2810
        %v3347 = vunpack.c.h.b16 %v2810
        %v3348 = vunpack.c.l.b16 %v2811
        %v3349 = vunpack.c.h.b16 %v2811
        %v3350 = vunpack.c.l.b16 %v2812
        %v3351 = vunpack.c.h.b16 %v2812
        %v3352 = vunpack.c.l.b16 %v2813
        %v3353 = vunpack.c.h.b16 %v2813
        %v3354 = vunpack.c.l.b16 %v2814
        %v3355 = vunpack.c.h.b16 %v2814
        %v3356 = vunpack.c.l.b16 %v2815
        %v3357 = vunpack.c.h.b16 %v2815
        %v3358 = vunpack.c.l.b16 %v2816
        %v3359 = vunpack.c.h.b16 %v2816
        %v3360 = vunpack.c.l.b16 %v2817
        %v3361 = vunpack.c.h.b16 %v2817
        %v3362 = vunpack.c.l.b16 %v2818
        %v3363 = vunpack.c.h.b16 %v2818
        %v3364 = vunpack.c.l.b16 %v2819
        %v3365 = vunpack.c.h.b16 %v2819
        %v3366 = vunpack.c.l.b16 %v2820
        %v3367 = vunpack.c.h.b16 %v2820
        %v3368 = vunpack.c.l.b16 %v2821
        %v3369 = vunpack.c.h.b16 %v2821
        %v3370 = vunpack.c.l.b16 %v2822
        %v3371 = vunpack.c.h.b16 %v2822
        %v3372 = vunpack.c.l.b16 %v2823
        %v3373 = vunpack.c.h.b16 %v2823
        %v3374 = vunpack.c.l.b16 %v2824
        %v3375 = vunpack.c.h.b16 %v2824
        %v3376 = vunpack.c.l.b16 %v2825
        %v3377 = vunpack.c.h.b16 %v2825
        %v3378 = vunpack.c.l.b16 %v2826
        %v3379 = vunpack.c.h.b16 %v2826
        %v3380 = vunpack.c.l.b16 %v2827
        %v3381 = vunpack.c.h.b16 %v2827
        %v3382 = vunpack.c.l.b16 %v2828
        %v3383 = vunpack.c.h.b16 %v2828
        %v3384 = vunpack.c.l.b16 %v2829
        %v3385 = vunpack.c.h.b16 %v2829
        %v3386 = vunpack.c.l.b16 %v2830
        %v3387 = vunpack.c.h.b16 %v2830
        %v3388 = vunpack.c.l.b16 %v2831
        %v3389 = vunpack.c.h.b16 %v2831
        %v3390 = vunpack.c.l.b16 %v2832
        %v3391 = vunpack.c.h.b16 %v2832
        %v3392 = vunpack.c.l.b16 %v2833
        %v3393 = vunpack.c.h.b16 %v2833
        %v3394 = vunpack.c.l.b16 %v2834
        %v3395 = vunpack.c.h.b16 %v2834
        %v3396 = vunpack.c.l.b16 %v2835
        %v3397 = vunpack.c.h.b16 %v2835
        %v3398 = vunpack.c.l.b16 %v2836
        %v3399 = vunpack.c.h.b16 %v2836
        %v3400 = vunpack.c.l.b16 %v2837
        %v3401 = vunpack.c.h.b16 %v2837
        %v3402 = vunpack.c.l.b16 %v2838
        %v3403 = vunpack.c.h.b16 %v2838
        %v3404 = vunpack.c.l.b16 %v2839
        %v3405 = vunpack.c.h.b16 %v2839
        %v3406 = vunpack.c.l.b16 %v2840
        %v3407 = vunpack.c.h.b16 %v2840
        %v3408 = vunpack.c.l.b16 %v2841
        %v3409 = vunpack.c.h.b16 %v2841
        %v3410 = vunpack.c.l.b16 %v2842
        %v3411 = vunpack.c.h.b16 %v2842
        %v3412 = vunpack.c.l.b16 %v2843
        %v3413 = vunpack.c.h.b16 %v2843
        %v3414 = vunpack.c.l.b16 %v2844
        %v3415 = vunpack.c.h.b16 %v2844
        %v3416 = vunpack.c.l.b16 %v2845
        %v3417 = vunpack.c.h.b16 %v2845
        %v3418 = vunpack.c.l.b16 %v2846
        %v3419 = vunpack.c.h.b16 %v2846
        %v3420 = vunpack.c.l.b16 %v2847
        %v3421 = vunpack.c.h.b16 %v2847
        %v3422 = vunpack.c.l.b16 %v2848
        %v3423 = vunpack.c.h.b16 %v2848
        %v3424 = vunpack.c.l.b16 %v2849
        %v3425 = vunpack.c.h.b16 %v2849
        %v3426 = vunpack.c.l.b16 %v2850
        %v3427 = vunpack.c.h.b16 %v2850
        %v3428 = vunpack.c.l.b16 %v2851
        %v3429 = vunpack.c.h.b16 %v2851
        %v3430 = vunpack.c.l.b16 %v2852
        %v3431 = vunpack.c.h.b16 %v2852
        %v3432 = vunpack.c.l.b16 %v2853
        %v3433 = vunpack.c.h.b16 %v2853
        %v3434 = vunpack.c.l.b16 %v2854
        %v3435 = vunpack.c.h.b16 %v2854
        %v3436 = vunpack.c.l.b16 %v2855
        %v3437 = vunpack.c.h.b16 %v2855
        %v3438 = vunpack.c.l.b16 %v2856
        %v3439 = vunpack.c.h.b16 %v2856
        %v3440 = vunpack.c.l.b16 %v2857
        %v3441 = vunpack.c.h.b16 %v2857
        %v3442 = vunpack.c.l.b16 %v2858
        %v3443 = vunpack.c.h.b16 %v2858
        %v3444 = vunpack.c.l.b16 %v2859
        %v3445 = vunpack.c.h.b16 %v2859
        %v3446 = vunpack.c.l.b16 %v2860
        %v3447 = vunpack.c.h.b16 %v2860
        %v3448 = vunpack.c.l.b16 %v2861
        %v3449 = vunpack.c.h.b16 %v2861
        %v3450 = vunpack.c.l.b16 %v2862
        %v3451 = vunpack.c.h.b16 %v2862
        %v3452 = vunpack.c.l.b16 %v2863
        %v3453 = vunpack.c.h.b16 %v2863
        %v3454 = vunpack.c.l.b16 %v2864
        %v3455 = vunpack.c.h.b16 %v2864
        %v3456 = vunpack.c.l.b16 %v2865
        %v3457 = vunpack.c.h.b16 %v2865
        %v3458 = vunpack.c.l.b16 %v2866
        %v3459 = vunpack.c.h.b16 %v2866
        %v3460 = vunpack.c.l.b16 %v2867
        %v3461 = vunpack.c.h.b16 %v2867
        %v3462 = vunpack.c.l.b16 %v2868
        %v3463 = vunpack.c.h.b16 %v2868
        %v3464 = vunpack.c.l.b16 %v2869
        %v3465 = vunpack.c.h.b16 %v2869
        %v3466 = vunpack.c.l.b16 %v2870
        %v3467 = vunpack.c.h.b16 %v2870
        %v3468 = vunpack.c.l.b16 %v2871
        %v3469 = vunpack.c.h.b16 %v2871
        %v3470 = vunpack.c.l.b16 %v2872
        %v3471 = vunpack.c.h.b16 %v2872
        %v3472 = vunpack.c.l.b16 %v2873
        %v3473 = vunpack.c.h.b16 %v2873
        %v3474 = vunpack.c.l.b16 %v2874
        %v3475 = vunpack.c.h.b16 %v2874
        %v3476 = vunpack.c.l.b16 %v2875
        %v3477 = vunpack.c.h.b16 %v2875
        %v3478 = vunpack.c.l.b16 %v2876
        %v3479 = vunpack.c.h.b16 %v2876
        %v3480 = vunpack.c.l.b16 %v2877
        %v3481 = vunpack.c.h.b16 %v2877
        %v3482 = vunpack.c.l.b16 %v2878
        %v3483 = vunpack.c.h.b16 %v2878
        %v3484 = vunpack.c.l.b16 %v2879
        %v3485 = vunpack.c.h.b16 %v2879
        %v3486 = vunpack.c.l.b16 %v2880
        %v3487 = vunpack.c.h.b16 %v2880
        %v3488 = vunpack.c.l.b16 %v2881
        %v3489 = vunpack.c.h.b16 %v2881
        %v3490 = vunpack.c.l.b16 %v2882
        %v3491 = vunpack.c.h.b16 %v2882
        %v3492 = vunpack.c.l.b16 %v2883
        %v3493 = vunpack.c.h.b16 %v2883
        %v3494 = vunpack.c.l.b16 %v2884
        %v3495 = vunpack.c.h.b16 %v2884
        %v3496 = vunpack.c.l.b16 %v2885
        %v3497 = vunpack.c.h.b16 %v2885
        %v3498 = vunpack.c.l.b16 %v2886
        %v3499 = vunpack.c.h.b16 %v2886
        %v3500 = vunpack.c.l.b16 %v2887
        %v3501 = vunpack.c.h.b16 %v2887
        %v3502 = vunpack.c.l.b16 %v2888
        %v3503 = vunpack.c.h.b16 %v2888
        %v3504 = vunpack.c.l.b16 %v2889
        %v3505 = vunpack.c.h.b16 %v2889
        %v3506 = vunpack.c.l.b16 %v2890
        %v3507 = vunpack.c.h.b16 %v2890
        %v3508 = vunpack.c.l.b16 %v2891
        %v3509 = vunpack.c.h.b16 %v2891
        %v3510 = vunpack.c.l.b16 %v2892
        %v3511 = vunpack.c.h.b16 %v2892
        %v3512 = vunpack.c.l.b16 %v2893
        %v3513 = vunpack.c.h.b16 %v2893
        %v3514 = vunpack.c.l.b16 %v2894
        %v3515 = vunpack.c.h.b16 %v2894
        %v3516 = vunpack.c.l.b16 %v2895
        %v3517 = vunpack.c.h.b16 %v2895
        %v3518 = vunpack.c.l.b16 %v2896
        %v3519 = vunpack.c.h.b16 %v2896
        %v3520 = vunpack.c.l.b16 %v2897
        %v3521 = vunpack.c.h.b16 %v2897
        %v3522 = vunpack.c.l.b16 %v2898
        %v3523 = vunpack.c.h.b16 %v2898
        %v3524 = vunpack.c.l.b16 %v2899
        %v3525 = vunpack.c.h.b16 %v2899
        %v3526 = vunpack.c.l.b16 %v2900
        %v3527 = vunpack.c.h.b16 %v2900
        %v3528 = vunpack.c.l.b16 %v2901
        %v3529 = vunpack.c.h.b16 %v2901
        %v3530 = vunpack.c.l.b16 %v2902
        %v3531 = vunpack.c.h.b16 %v2902
        %v3532 = vunpack.c.l.b16 %v2903
        %v3533 = vunpack.c.h.b16 %v2903
        %v3534 = vunpack.c.l.b16 %v2904
        %v3535 = vunpack.c.h.b16 %v2904
        %v3536 = vunpack.c.l.b16 %v2905
        %v3537 = vunpack.c.h.b16 %v2905
        %v3538 = vunpack.c.l.b16 %v2906
        %v3539 = vunpack.c.h.b16 %v2906
        %v3540 = vunpack.c.l.b16 %v2907
        %v3541 = vunpack.c.h.b16 %v2907
        %v3542 = vunpack.c.l.b16 %v2908
        %v3543 = vunpack.c.h.b16 %v2908
        %v3544 = vunpack.c.l.b16 %v2909
        %v3545 = vunpack.c.h.b16 %v2909
        %v3546 = vunpack.c.l.b16 %v2910
        %v3547 = vunpack.c.h.b16 %v2910
        %v3548 = vunpack.c.l.b16 %v2911
        %v3549 = vunpack.c.h.b16 %v2911
        %v3550 = vunpack.c.l.b16 %v2912
        %v3551 = vunpack.c.h.b16 %v2912
        %v3552 = vunpack.c.l.b16 %v2913
        %v3553 = vunpack.c.h.b16 %v2913
        %v3554 = vunpack.c.l.b16 %v2914
        %v3555 = vunpack.c.h.b16 %v2914
        %v3556 = vunpack.c.l.b16 %v2915
        %v3557 = vunpack.c.h.b16 %v2915
        %v3558 = vunpack.c.l.b16 %v2916
        %v3559 = vunpack.c.h.b16 %v2916
        %v3560 = vunpack.c.l.b16 %v2917
        %v3561 = vunpack.c.h.b16 %v2917
        %v3562 = vunpack.c.l.b16 %v2918
        %v3563 = vunpack.c.h.b16 %v2918
        %v3564 = vunpack.c.l.b16 %v2919
        %v3565 = vunpack.c.h.b16 %v2919
        %v3566 = vunpack.c.l.b16 %v2920
        %v3567 = vunpack.c.h.b16 %v2920
        %v3568 = vunpack.c.l.b16 %v2921
        %v3569 = vunpack.c.h.b16 %v2921
        %v3570 = vpack.c.b16 %v3318, %v3314
        %v3571 = vpack.c.b16 %v3319, %v3315
        %v3572 = vpack.c.b16 %v3320, %v3316
        %v3573 = vpack.c.b16 %v3321, %v3317
        %v3574 = vpack.c.b16 %v3326, %v3322
        %v3575 = vpack.c.b16 %v3327, %v3323
        %v3576 = vpack.c.b16 %v3328, %v3324
        %v3577 = vpack.c.b16 %v3329, %v3325
        %v3578 = vpack.c.b16 %v3334, %v3330
        %v3579 = vpack.c.b16 %v3335, %v3331
        %v3580 = vpack.c.b16 %v3336, %v3332
        %v3581 = vpack.c.b16 %v3337, %v3333
        %v3582 = vpack.c.b16 %v3342, %v3338
        %v3583 = vpack.c.b16 %v3343, %v3339
        %v3584 = vpack.c.b16 %v3344, %v3340
        %v3585 = vpack.c.b16 %v3345, %v3341
        %v3586 = vpack.c.b16 %v3350, %v3346
        %v3587 = vpack.c.b16 %v3351, %v3347
        %v3588 = vpack.c.b16 %v3352, %v3348
        %v3589 = vpack.c.b16 %v3353, %v3349
        %v3590 = vpack.c.b16 %v3358, %v3354
        %v3591 = vpack.c.b16 %v3359, %v3355
        %v3592 = vpack.c.b16 %v3360, %v3356
        %v3593 = vpack.c.b16 %v3361, %v3357
        %v3594 = vpack.c.b16 %v3366, %v3362
        %v3595 = vpack.c.b16 %v3367, %v3363
        %v3596 = vpack.c.b16 %v3368, %v3364
        %v3597 = vpack.c.b16 %v3369, %v3365
        %v3598 = vpack.c.b16 %v3374, %v3370
        %v3599 = vpack.c.b16 %v3375, %v3371
        %v3600 = vpack.c.b16 %v3376, %v3372
        %v3601 = vpack.c.b16 %v3377, %v3373
        %v3602 = vpack.c.b16 %v3382, %v3378
        %v3603 = vpack.c.b16 %v3383, %v3379
        %v3604 = vpack.c.b16 %v3384, %v3380
        %v3605 = vpack.c.b16 %v3385, %v3381
        %v3606 = vpack.c.b16 %v3390, %v3386
        %v3607 = vpack.c.b16 %v3391, %v3387
        %v3608 = vpack.c.b16 %v3392, %v3388
        %v3609 = vpack.c.b16 %v3393, %v3389
        %v3610 = vpack.c.b16 %v3398, %v3394
        %v3611 = vpack.c.b16 %v3399, %v3395
        %v3612 = vpack.c.b16 %v3400, %v3396
        %v3613 = vpack.c.b16 %v3401, %v3397
        %v3614 = vpack.c.b16 %v3406, %v3402
        %v3615 = vpack.c.b16 %v3407, %v3403
        %v3616 = vpack.c.b16 %v3408, %v3404
        %v3617 = vpack.c.b16 %v3409, %v3405
        %v3618 = vpack.c.b16 %v3414, %v3410
        %v3619 = vpack.c.b16 %v3415, %v3411
        %v3620 = vpack.c.b16 %v3416, %v3412
        %v3621 = vpack.c.b16 %v3417, %v3413
        %v3622 = vpack.c.b16 %v3422, %v3418
        %v3623 = vpack.c.b16 %v3423, %v3419
        %v3624 = vpack.c.b16 %v3424, %v3420
        %v3625 = vpack.c.b16 %v3425, %v3421
        %v3626 = vpack.c.b16 %v3430, %v3426
        %v3627 = vpack.c.b16 %v3431, %v3427
        %v3628 = vpack.c.b16 %v3432, %v3428
        %v3629 = vpack.c.b16 %v3433, %v3429
        %v3630 = vpack.c.b16 %v3438, %v3434
        %v3631 = vpack.c.b16 %v3439, %v3435
        %v3632 = vpack.c.b16 %v3440, %v3436
        %v3633 = vpack.c.b16 %v3441, %v3437
        %v3634 = vpack.c.b16 %v3446, %v3442
        %v3635 = vpack.c.b16 %v3447, %v3443
        %v3636 = vpack.c.b16 %v3448, %v3444
        %v3637 = vpack.c.b16 %v3449, %v3445
        %v3638 = vpack.c.b16 %v3454, %v3450
        %v3639 = vpack.c.b16 %v3455, %v3451
        %v3640 = vpack.c.b16 %v3456, %v3452
        %v3641 = vpack.c.b16 %v3457, %v3453
        %v3642 = vpack.c.b16 %v3462, %v3458
        %v3643 = vpack.c.b16 %v3463, %v3459
        %v3644 = vpack.c.b16 %v3464, %v3460
        %v3645 = vpack.c.b16 %v3465, %v3461
        %v3646 = vpack.c.b16 %v3470, %v3466
        %v3647 = vpack.c.b16 %v3471, %v3467
        %v3648 = vpack.c.b16 %v3472, %v3468
        %v3649 = vpack.c.b16 %v3473, %v3469
        %v3650 = vpack.c.b16 %v3478, %v3474
        %v3651 = vpack.c.b16 %v3479, %v3475
        %v3652 = vpack.c.b16 %v3480, %v3476
        %v3653 = vpack.c.b16 %v3481, %v3477
        %v3654 = vpack.c.b16 %v3486, %v3482
        %v3655 = vpack.c.b16 %v3487, %v3483
        %v3656 = vpack.c.b16 %v3488, %v3484
        %v3657 = vpack.c.b16 %v3489, %v3485
        %v3658 = vpack.c.b16 %v3494, %v3490
        %v3659 = vpack.c.b16 %v3495, %v3491
        %v3660 = vpack.c.b16 %v3496, %v3492
        %v3661 = vpack.c.b16 %v3497, %v3493
        %v3662 = vpack.c.b16 %v3502, %v3498
        %v3663 = vpack.c.b16 %v3503, %v3499
        %v3664 = vpack.c.b16 %v3504, %v3500
        %v3665 = vpack.c.b16 %v3505, %v3501
        %v3666 = vpack.c.b16 %v3510, %v3506
        %v3667 = vpack.c.b16 %v3511, %v3507
        %v3668 = vpack.c.b16 %v3512, %v3508
        %v3669 = vpack.c.b16 %v3513, %v3509
        %v3670 = vpack.c.b16 %v3518, %v3514
        %v3671 = vpack.c.b16 %v3519, %v3515
        %v3672 = vpack.c.b16 %v3520, %v3516
        %v3673 = vpack.c.b16 %v3521, %v3517
        %v3674 = vpack.c.b16 %v3526, %v3522
        %v3675 = vpack.c.b16 %v3527, %v3523
        %v3676 = vpack.c.b16 %v3528, %v3524
        %v3677 = vpack.c.b16 %v3529, %v3525
        %v3678 = vpack.c.b16 %v3534, %v3530
        %v3679 = vpack.c.b16 %v3535, %v3531
        %v3680 = vpack.c.b16 %v3536, %v3532
        %v3681 = vpack.c.b16 %v3537, %v3533
        %v3682 = vpack.c.b16 %v3542, %v3538
        %v3683 = vpack.c.b16 %v3543, %v3539
        %v3684 = vpack.c.b16 %v3544, %v3540
        %v3685 = vpack.c.b16 %v3545, %v3541
        %v3686 = vpack.c.b16 %v3550, %v3546
        %v3687 = vpack.c.b16 %v3551, %v3547
        %v3688 = vpack.c.b16 %v3552, %v3548
        %v3689 = vpack.c.b16 %v3553, %v3549
        %v3690 = vpack.c.b16 %v3558, %v3554
        %v3691 = vpack.c.b16 %v3559, %v3555
        %v3692 = vpack.c.b16 %v3560, %v3556
        %v3693 = vpack.c.b16 %v3561, %v3557
        %v3694 = vpack.c.b16 %v3566, %v3562
        %v3695 = vpack.c.b16 %v3567, %v3563
        %v3696 = vpack.c.b16 %v3568, %v3564
        %v3697 = vpack.c.b16 %v3569, %v3565
        %3826 = vmatpush.bf16.msra.mxu0 %v3598
        %3827 = vmatpush.bf16.msra.mxu0 %v3594
        %3828 = vmatpush.bf16.msra.mxu0 %v3590
        %3829 = vmatpush.bf16.msra.mxu0 %v3586
        %3830 = vmatpush.bf16.msra.mxu0 %v3582
        %3831 = vmatpush.bf16.msra.mxu0 %v3578
        %3832 = vmatpush.bf16.msra.mxu0 %v3574
        %3833 = vmatpush.bf16.msra.mxu0 %v3570
        %3834 = vmatmul.bf16.gmra.mxu0 %v2662
        %v3835 = vpop.f32.mrf.mxu0
        %v3836 = vadd.f32 0.0, %v3835
        %v3837 = vpop.f32.mrf.mxu0
        %v3838 = vadd.f32 0.0, %v3837
        %3839 = vdwg.mxu0
        %3840 = vmatpush.bf16.msra.mxu0 %v3630
        %3841 = vmatpush.bf16.msra.mxu0 %v3626
        %3842 = vmatpush.bf16.msra.mxu0 %v3622
        %3843 = vmatpush.bf16.msra.mxu0 %v3618
        %3844 = vmatpush.bf16.msra.mxu0 %v3614
        %3845 = vmatpush.bf16.msra.mxu0 %v3610
        %3846 = vmatpush.bf16.msra.mxu0 %v3606
        %3847 = vmatpush.bf16.msra.mxu0 %v3602
        %3848 = vmatmul.bf16.gmra.mxu0 %v2663
        %v3849 = vpop.f32.mrf.mxu0
        %v3850 = vadd.f32 %v3836, %v3849
        %v3851 = vpop.f32.mrf.mxu0
        %v3852 = vadd.f32 %v3838, %v3851
        %3853 = vdwg.mxu0
        %3854 = vmatpush.bf16.msra.mxu0 %v3662
        %3855 = vmatpush.bf16.msra.mxu0 %v3658
        %3856 = vmatpush.bf16.msra.mxu0 %v3654
        %3857 = vmatpush.bf16.msra.mxu0 %v3650
        %3858 = vmatpush.bf16.msra.mxu0 %v3646
        %3859 = vmatpush.bf16.msra.mxu0 %v3642
        %3860 = vmatpush.bf16.msra.mxu0 %v3638
        %3861 = vmatpush.bf16.msra.mxu0 %v3634
        %3862 = vmatmul.bf16.gmra.mxu0 %v2664
        %v3863 = vpop.f32.mrf.mxu0
        %v3864 = vadd.f32 %v3850, %v3863
        %v3865 = vpop.f32.mrf.mxu0
        %v3866 = vadd.f32 %v3852, %v3865
        %3867 = vdwg.mxu0
        %3868 = vmatpush.bf16.msra.mxu0 %v3694
        %3869 = vmatpush.bf16.msra.mxu0 %v3690
        %3870 = vmatpush.bf16.msra.mxu0 %v3686
        %3871 = vmatpush.bf16.msra.mxu0 %v3682
        %3872 = vmatpush.bf16.msra.mxu0 %v3678
        %3873 = vmatpush.bf16.msra.mxu0 %v3674
        %3874 = vmatpush.bf16.msra.mxu0 %v3670
        %3875 = vmatpush.bf16.msra.mxu0 %v3666
        %3876 = vmatmul.bf16.gmra.mxu0 %v2665
        %v3877 = vpop.f32.mrf.mxu0
        %v3878 = vadd.f32 %v3864, %v3877
        %v3879 = vpop.f32.mrf.mxu0
        %v3880 = vadd.f32 %v3866, %v3879
        %3881 = vdwg.mxu0
        %3882 = vmatpush.bf16.msra.mxu0 %v3599
        %3883 = vmatpush.bf16.msra.mxu0 %v3595
        %3884 = vmatpush.bf16.msra.mxu0 %v3591
        %3885 = vmatpush.bf16.msra.mxu0 %v3587
        %3886 = vmatpush.bf16.msra.mxu0 %v3583
        %3887 = vmatpush.bf16.msra.mxu0 %v3579
        %3888 = vmatpush.bf16.msra.mxu0 %v3575
        %3889 = vmatpush.bf16.msra.mxu0 %v3571
        %3890 = vmatmul.bf16.gmra.mxu0 %v2662
        %v3891 = vpop.f32.mrf.mxu0
        %v3892 = vadd.f32 0.0, %v3891
        %v3893 = vpop.f32.mrf.mxu0
        %v3894 = vadd.f32 0.0, %v3893
        %3895 = vdwg.mxu0
        %3896 = vmatpush.bf16.msra.mxu0 %v3631
        %3897 = vmatpush.bf16.msra.mxu0 %v3627
        %3898 = vmatpush.bf16.msra.mxu0 %v3623
        %3899 = vmatpush.bf16.msra.mxu0 %v3619
        %3900 = vmatpush.bf16.msra.mxu0 %v3615
        %3901 = vmatpush.bf16.msra.mxu0 %v3611
        %3902 = vmatpush.bf16.msra.mxu0 %v3607
        %3903 = vmatpush.bf16.msra.mxu0 %v3603
        %3904 = vmatmul.bf16.gmra.mxu0 %v2663
        %v3905 = vpop.f32.mrf.mxu0
        %v3906 = vadd.f32 %v3892, %v3905
        %v3907 = vpop.f32.mrf.mxu0
        %v3908 = vadd.f32 %v3894, %v3907
        %3909 = vdwg.mxu0
        %3910 = vmatpush.bf16.msra.mxu0 %v3663
        %3911 = vmatpush.bf16.msra.mxu0 %v3659
        %3912 = vmatpush.bf16.msra.mxu0 %v3655
        %3913 = vmatpush.bf16.msra.mxu0 %v3651
        %3914 = vmatpush.bf16.msra.mxu0 %v3647
        %3915 = vmatpush.bf16.msra.mxu0 %v3643
        %3916 = vmatpush.bf16.msra.mxu0 %v3639
        %3917 = vmatpush.bf16.msra.mxu0 %v3635
        %3918 = vmatmul.bf16.gmra.mxu0 %v2664
        %v3919 = vpop.f32.mrf.mxu0
        %v3920 = vadd.f32 %v3906, %v3919
        %v3921 = vpop.f32.mrf.mxu0
        %v3922 = vadd.f32 %v3908, %v3921
        %3923 = vdwg.mxu0
        %3924 = vmatpush.bf16.msra.mxu0 %v3695
        %3925 = vmatpush.bf16.msra.mxu0 %v3691
        %3926 = vmatpush.bf16.msra.mxu0 %v3687
        %3927 = vmatpush.bf16.msra.mxu0 %v3683
        %3928 = vmatpush.bf16.msra.mxu0 %v3679
        %3929 = vmatpush.bf16.msra.mxu0 %v3675
        %3930 = vmatpush.bf16.msra.mxu0 %v3671
        %3931 = vmatpush.bf16.msra.mxu0 %v3667
        %3932 = vmatmul.bf16.gmra.mxu0 %v2665
        %v3933 = vpop.f32.mrf.mxu0
        %v3934 = vadd.f32 %v3920, %v3933
        %v3935 = vpop.f32.mrf.mxu0
        %v3936 = vadd.f32 %v3922, %v3935
        %3937 = vdwg.mxu0
        %3938 = vmatpush.bf16.msra.mxu0 %v3600
        %3939 = vmatpush.bf16.msra.mxu0 %v3596
        %3940 = vmatpush.bf16.msra.mxu0 %v3592
        %3941 = vmatpush.bf16.msra.mxu0 %v3588
        %3942 = vmatpush.bf16.msra.mxu0 %v3584
        %3943 = vmatpush.bf16.msra.mxu0 %v3580
        %3944 = vmatpush.bf16.msra.mxu0 %v3576
        %3945 = vmatpush.bf16.msra.mxu0 %v3572
        %3946 = vmatmul.bf16.gmra.mxu0 %v2662
        %v3947 = vpop.f32.mrf.mxu0
        %v3948 = vadd.f32 0.0, %v3947
        %v3949 = vpop.f32.mrf.mxu0
        %v3950 = vadd.f32 0.0, %v3949
        %3951 = vdwg.mxu0
        %3952 = vmatpush.bf16.msra.mxu0 %v3632
        %3953 = vmatpush.bf16.msra.mxu0 %v3628
        %3954 = vmatpush.bf16.msra.mxu0 %v3624
        %3955 = vmatpush.bf16.msra.mxu0 %v3620
        %3956 = vmatpush.bf16.msra.mxu0 %v3616
        %3957 = vmatpush.bf16.msra.mxu0 %v3612
        %3958 = vmatpush.bf16.msra.mxu0 %v3608
        %3959 = vmatpush.bf16.msra.mxu0 %v3604
        %3960 = vmatmul.bf16.gmra.mxu0 %v2663
        %v3961 = vpop.f32.mrf.mxu0
        %v3962 = vadd.f32 %v3948, %v3961
        %v3963 = vpop.f32.mrf.mxu0
        %v3964 = vadd.f32 %v3950, %v3963
        %3965 = vdwg.mxu0
        %3966 = vmatpush.bf16.msra.mxu0 %v3664
        %3967 = vmatpush.bf16.msra.mxu0 %v3660
        %3968 = vmatpush.bf16.msra.mxu0 %v3656
        %3969 = vmatpush.bf16.msra.mxu0 %v3652
        %3970 = vmatpush.bf16.msra.mxu0 %v3648
        %3971 = vmatpush.bf16.msra.mxu0 %v3644
        %3972 = vmatpush.bf16.msra.mxu0 %v3640
        %3973 = vmatpush.bf16.msra.mxu0 %v3636
        %3974 = vmatmul.bf16.gmra.mxu0 %v2664
        %v3975 = vpop.f32.mrf.mxu0
        %v3976 = vadd.f32 %v3962, %v3975
        %v3977 = vpop.f32.mrf.mxu0
        %v3978 = vadd.f32 %v3964, %v3977
        %3979 = vdwg.mxu0
        %3980 = vmatpush.bf16.msra.mxu0 %v3696
        %3981 = vmatpush.bf16.msra.mxu0 %v3692
        %3982 = vmatpush.bf16.msra.mxu0 %v3688
        %3983 = vmatpush.bf16.msra.mxu0 %v3684
        %3984 = vmatpush.bf16.msra.mxu0 %v3680
        %3985 = vmatpush.bf16.msra.mxu0 %v3676
        %3986 = vmatpush.bf16.msra.mxu0 %v3672
        %3987 = vmatpush.bf16.msra.mxu0 %v3668
        %3988 = vmatmul.bf16.gmra.mxu0 %v2665
        %v3989 = vpop.f32.mrf.mxu0
        %v3990 = vadd.f32 %v3976, %v3989
        %v3991 = vpop.f32.mrf.mxu0
        %v3992 = vadd.f32 %v3978, %v3991
        %3993 = vdwg.mxu0
        %3994 = vmatpush.bf16.msra.mxu0 %v3601
        %3995 = vmatpush.bf16.msra.mxu0 %v3597
        %3996 = vmatpush.bf16.msra.mxu0 %v3593
        %3997 = vmatpush.bf16.msra.mxu0 %v3589
        %3998 = vmatpush.bf16.msra.mxu0 %v3585
        %3999 = vmatpush.bf16.msra.mxu0 %v3581
        %4000 = vmatpush.bf16.msra.mxu0 %v3577
        %4001 = vmatpush.bf16.msra.mxu0 %v3573
        %4002 = vmatmul.bf16.gmra.mxu0 %v2662
        %v4003 = vpop.f32.mrf.mxu0
        %v4004 = vadd.f32 0.0, %v4003
        %v4005 = vpop.f32.mrf.mxu0
        %v4006 = vadd.f32 0.0, %v4005
        %4007 = vdwg.mxu0
        %4008 = vmatpush.bf16.msra.mxu0 %v3633
        %4009 = vmatpush.bf16.msra.mxu0 %v3629
        %4010 = vmatpush.bf16.msra.mxu0 %v3625
        %4011 = vmatpush.bf16.msra.mxu0 %v3621
        %4012 = vmatpush.bf16.msra.mxu0 %v3617
        %4013 = vmatpush.bf16.msra.mxu0 %v3613
        %4014 = vmatpush.bf16.msra.mxu0 %v3609
        %4015 = vmatpush.bf16.msra.mxu0 %v3605
        %4016 = vmatmul.bf16.gmra.mxu0 %v2663
        %v4017 = vpop.f32.mrf.mxu0
        %v4018 = vadd.f32 %v4004, %v4017
        %v4019 = vpop.f32.mrf.mxu0
        %v4020 = vadd.f32 %v4006, %v4019
        %4021 = vdwg.mxu0
        %4022 = vmatpush.bf16.msra.mxu0 %v3665
        %4023 = vmatpush.bf16.msra.mxu0 %v3661
        %4024 = vmatpush.bf16.msra.mxu0 %v3657
        %4025 = vmatpush.bf16.msra.mxu0 %v3653
        %4026 = vmatpush.bf16.msra.mxu0 %v3649
        %4027 = vmatpush.bf16.msra.mxu0 %v3645
        %4028 = vmatpush.bf16.msra.mxu0 %v3641
        %4029 = vmatpush.bf16.msra.mxu0 %v3637
        %4030 = vmatmul.bf16.gmra.mxu0 %v2664
        %v4031 = vpop.f32.mrf.mxu0
        %v4032 = vadd.f32 %v4018, %v4031
        %v4033 = vpop.f32.mrf.mxu0
        %v4034 = vadd.f32 %v4020, %v4033
        %4035 = vdwg.mxu0
        %4036 = vmatpush.bf16.msra.mxu0 %v3697
        %4037 = vmatpush.bf16.msra.mxu0 %v3693
        %4038 = vmatpush.bf16.msra.mxu0 %v3689
        %4039 = vmatpush.bf16.msra.mxu0 %v3685
        %4040 = vmatpush.bf16.msra.mxu0 %v3681
        %4041 = vmatpush.bf16.msra.mxu0 %v3677
        %4042 = vmatpush.bf16.msra.mxu0 %v3673
        %4043 = vmatpush.bf16.msra.mxu0 %v3669
        %4044 = vmatmul.bf16.gmra.mxu0 %v2665
        %v4045 = vpop.f32.mrf.mxu0
        %v4046 = vadd.f32 %v4032, %v4045
        %v4047 = vpop.f32.mrf.mxu0
        %v4048 = vadd.f32 %v4034, %v4047
        %4049 = vdwg.mxu0
        %v4178 = vunpack.c.l.b16 %v2666
        %v4179 = vunpack.c.h.b16 %v2666
        %v4180 = vunpack.c.l.b16 %v2667
        %v4181 = vunpack.c.h.b16 %v2667
        %v4182 = vunpack.c.l.b16 %v2668
        %v4183 = vunpack.c.h.b16 %v2668
        %v4184 = vunpack.c.l.b16 %v2669
        %v4185 = vunpack.c.h.b16 %v2669
        %v4186 = vunpack.c.l.b16 %v2670
        %v4187 = vunpack.c.h.b16 %v2670
        %v4188 = vunpack.c.l.b16 %v2671
        %v4189 = vunpack.c.h.b16 %v2671
        %v4190 = vunpack.c.l.b16 %v2672
        %v4191 = vunpack.c.h.b16 %v2672
        %v4192 = vunpack.c.l.b16 %v2673
        %v4193 = vunpack.c.h.b16 %v2673
        %v4194 = vunpack.c.l.b16 %v2674
        %v4195 = vunpack.c.h.b16 %v2674
        %v4196 = vunpack.c.l.b16 %v2675
        %v4197 = vunpack.c.h.b16 %v2675
        %v4198 = vunpack.c.l.b16 %v2676
        %v4199 = vunpack.c.h.b16 %v2676
        %v4200 = vunpack.c.l.b16 %v2677
        %v4201 = vunpack.c.h.b16 %v2677
        %v4202 = vunpack.c.l.b16 %v2678
        %v4203 = vunpack.c.h.b16 %v2678
        %v4204 = vunpack.c.l.b16 %v2679
        %v4205 = vunpack.c.h.b16 %v2679
        %v4206 = vunpack.c.l.b16 %v2680
        %v4207 = vunpack.c.h.b16 %v2680
        %v4208 = vunpack.c.l.b16 %v2681
        %v4209 = vunpack.c.h.b16 %v2681
        %v4210 = vunpack.c.l.b16 %v2682
        %v4211 = vunpack.c.h.b16 %v2682
        %v4212 = vunpack.c.l.b16 %v2683
        %v4213 = vunpack.c.h.b16 %v2683
        %v4214 = vunpack.c.l.b16 %v2684
        %v4215 = vunpack.c.h.b16 %v2684
        %v4216 = vunpack.c.l.b16 %v2685
        %v4217 = vunpack.c.h.b16 %v2685
        %v4218 = vunpack.c.l.b16 %v2686
        %v4219 = vunpack.c.h.b16 %v2686
        %v4220 = vunpack.c.l.b16 %v2687
        %v4221 = vunpack.c.h.b16 %v2687
        %v4222 = vunpack.c.l.b16 %v2688
        %v4223 = vunpack.c.h.b16 %v2688
        %v4224 = vunpack.c.l.b16 %v2689
        %v4225 = vunpack.c.h.b16 %v2689
        %v4226 = vunpack.c.l.b16 %v2690
        %v4227 = vunpack.c.h.b16 %v2690
        %v4228 = vunpack.c.l.b16 %v2691
        %v4229 = vunpack.c.h.b16 %v2691
        %v4230 = vunpack.c.l.b16 %v2692
        %v4231 = vunpack.c.h.b16 %v2692
        %v4232 = vunpack.c.l.b16 %v2693
        %v4233 = vunpack.c.h.b16 %v2693
        %v4234 = vunpack.c.l.b16 %v2694
        %v4235 = vunpack.c.h.b16 %v2694
        %v4236 = vunpack.c.l.b16 %v2695
        %v4237 = vunpack.c.h.b16 %v2695
        %v4238 = vunpack.c.l.b16 %v2696
        %v4239 = vunpack.c.h.b16 %v2696
        %v4240 = vunpack.c.l.b16 %v2697
        %v4241 = vunpack.c.h.b16 %v2697
        %v4242 = vunpack.c.l.b16 %v2698
        %v4243 = vunpack.c.h.b16 %v2698
        %v4244 = vunpack.c.l.b16 %v2699
        %v4245 = vunpack.c.h.b16 %v2699
        %v4246 = vunpack.c.l.b16 %v2700
        %v4247 = vunpack.c.h.b16 %v2700
        %v4248 = vunpack.c.l.b16 %v2701
        %v4249 = vunpack.c.h.b16 %v2701
        %v4250 = vunpack.c.l.b16 %v2702
        %v4251 = vunpack.c.h.b16 %v2702
        %v4252 = vunpack.c.l.b16 %v2703
        %v4253 = vunpack.c.h.b16 %v2703
        %v4254 = vunpack.c.l.b16 %v2704
        %v4255 = vunpack.c.h.b16 %v2704
        %v4256 = vunpack.c.l.b16 %v2705
        %v4257 = vunpack.c.h.b16 %v2705
        %v4258 = vunpack.c.l.b16 %v2706
        %v4259 = vunpack.c.h.b16 %v2706
        %v4260 = vunpack.c.l.b16 %v2707
        %v4261 = vunpack.c.h.b16 %v2707
        %v4262 = vunpack.c.l.b16 %v2708
        %v4263 = vunpack.c.h.b16 %v2708
        %v4264 = vunpack.c.l.b16 %v2709
        %v4265 = vunpack.c.h.b16 %v2709
        %v4266 = vunpack.c.l.b16 %v2710
        %v4267 = vunpack.c.h.b16 %v2710
        %v4268 = vunpack.c.l.b16 %v2711
        %v4269 = vunpack.c.h.b16 %v2711
        %v4270 = vunpack.c.l.b16 %v2712
        %v4271 = vunpack.c.h.b16 %v2712
        %v4272 = vunpack.c.l.b16 %v2713
        %v4273 = vunpack.c.h.b16 %v2713
        %v4274 = vunpack.c.l.b16 %v2714
        %v4275 = vunpack.c.h.b16 %v2714
        %v4276 = vunpack.c.l.b16 %v2715
        %v4277 = vunpack.c.h.b16 %v2715
        %v4278 = vunpack.c.l.b16 %v2716
        %v4279 = vunpack.c.h.b16 %v2716
        %v4280 = vunpack.c.l.b16 %v2717
        %v4281 = vunpack.c.h.b16 %v2717
        %v4282 = vunpack.c.l.b16 %v2718
        %v4283 = vunpack.c.h.b16 %v2718
        %v4284 = vunpack.c.l.b16 %v2719
        %v4285 = vunpack.c.h.b16 %v2719
        %v4286 = vunpack.c.l.b16 %v2720
        %v4287 = vunpack.c.h.b16 %v2720
        %v4288 = vunpack.c.l.b16 %v2721
        %v4289 = vunpack.c.h.b16 %v2721
        %v4290 = vunpack.c.l.b16 %v2722
        %v4291 = vunpack.c.h.b16 %v2722
        %v4292 = vunpack.c.l.b16 %v2723
        %v4293 = vunpack.c.h.b16 %v2723
        %v4294 = vunpack.c.l.b16 %v2724
        %v4295 = vunpack.c.h.b16 %v2724
        %v4296 = vunpack.c.l.b16 %v2725
        %v4297 = vunpack.c.h.b16 %v2725
        %v4298 = vunpack.c.l.b16 %v2726
        %v4299 = vunpack.c.h.b16 %v2726
        %v4300 = vunpack.c.l.b16 %v2727
        %v4301 = vunpack.c.h.b16 %v2727
        %v4302 = vunpack.c.l.b16 %v2728
        %v4303 = vunpack.c.h.b16 %v2728
        %v4304 = vunpack.c.l.b16 %v2729
        %v4305 = vunpack.c.h.b16 %v2729
        %v4306 = vunpack.c.l.b16 %v2730
        %v4307 = vunpack.c.h.b16 %v2730
        %v4308 = vunpack.c.l.b16 %v2731
        %v4309 = vunpack.c.h.b16 %v2731
        %v4310 = vunpack.c.l.b16 %v2732
        %v4311 = vunpack.c.h.b16 %v2732
        %v4312 = vunpack.c.l.b16 %v2733
        %v4313 = vunpack.c.h.b16 %v2733
        %v4314 = vunpack.c.l.b16 %v2734
        %v4315 = vunpack.c.h.b16 %v2734
        %v4316 = vunpack.c.l.b16 %v2735
        %v4317 = vunpack.c.h.b16 %v2735
        %v4318 = vunpack.c.l.b16 %v2736
        %v4319 = vunpack.c.h.b16 %v2736
        %v4320 = vunpack.c.l.b16 %v2737
        %v4321 = vunpack.c.h.b16 %v2737
        %v4322 = vunpack.c.l.b16 %v2738
        %v4323 = vunpack.c.h.b16 %v2738
        %v4324 = vunpack.c.l.b16 %v2739
        %v4325 = vunpack.c.h.b16 %v2739
        %v4326 = vunpack.c.l.b16 %v2740
        %v4327 = vunpack.c.h.b16 %v2740
        %v4328 = vunpack.c.l.b16 %v2741
        %v4329 = vunpack.c.h.b16 %v2741
        %v4330 = vunpack.c.l.b16 %v2742
        %v4331 = vunpack.c.h.b16 %v2742
        %v4332 = vunpack.c.l.b16 %v2743
        %v4333 = vunpack.c.h.b16 %v2743
        %v4334 = vunpack.c.l.b16 %v2744
        %v4335 = vunpack.c.h.b16 %v2744
        %v4336 = vunpack.c.l.b16 %v2745
        %v4337 = vunpack.c.h.b16 %v2745
        %v4338 = vunpack.c.l.b16 %v2746
        %v4339 = vunpack.c.h.b16 %v2746
        %v4340 = vunpack.c.l.b16 %v2747
        %v4341 = vunpack.c.h.b16 %v2747
        %v4342 = vunpack.c.l.b16 %v2748
        %v4343 = vunpack.c.h.b16 %v2748
        %v4344 = vunpack.c.l.b16 %v2749
        %v4345 = vunpack.c.h.b16 %v2749
        %v4346 = vunpack.c.l.b16 %v2750
        %v4347 = vunpack.c.h.b16 %v2750
        %v4348 = vunpack.c.l.b16 %v2751
        %v4349 = vunpack.c.h.b16 %v2751
        %v4350 = vunpack.c.l.b16 %v2752
        %v4351 = vunpack.c.h.b16 %v2752
        %v4352 = vunpack.c.l.b16 %v2753
        %v4353 = vunpack.c.h.b16 %v2753
        %v4354 = vunpack.c.l.b16 %v2754
        %v4355 = vunpack.c.h.b16 %v2754
        %v4356 = vunpack.c.l.b16 %v2755
        %v4357 = vunpack.c.h.b16 %v2755
        %v4358 = vunpack.c.l.b16 %v2756
        %v4359 = vunpack.c.h.b16 %v2756
        %v4360 = vunpack.c.l.b16 %v2757
        %v4361 = vunpack.c.h.b16 %v2757
        %v4362 = vunpack.c.l.b16 %v2758
        %v4363 = vunpack.c.h.b16 %v2758
        %v4364 = vunpack.c.l.b16 %v2759
        %v4365 = vunpack.c.h.b16 %v2759
        %v4366 = vunpack.c.l.b16 %v2760
        %v4367 = vunpack.c.h.b16 %v2760
        %v4368 = vunpack.c.l.b16 %v2761
        %v4369 = vunpack.c.h.b16 %v2761
        %v4370 = vunpack.c.l.b16 %v2762
        %v4371 = vunpack.c.h.b16 %v2762
        %v4372 = vunpack.c.l.b16 %v2763
        %v4373 = vunpack.c.h.b16 %v2763
        %v4374 = vunpack.c.l.b16 %v2764
        %v4375 = vunpack.c.h.b16 %v2764
        %v4376 = vunpack.c.l.b16 %v2765
        %v4377 = vunpack.c.h.b16 %v2765
        %v4378 = vunpack.c.l.b16 %v2766
        %v4379 = vunpack.c.h.b16 %v2766
        %v4380 = vunpack.c.l.b16 %v2767
        %v4381 = vunpack.c.h.b16 %v2767
        %v4382 = vunpack.c.l.b16 %v2768
        %v4383 = vunpack.c.h.b16 %v2768
        %v4384 = vunpack.c.l.b16 %v2769
        %v4385 = vunpack.c.h.b16 %v2769
        %v4386 = vunpack.c.l.b16 %v2770
        %v4387 = vunpack.c.h.b16 %v2770
        %v4388 = vunpack.c.l.b16 %v2771
        %v4389 = vunpack.c.h.b16 %v2771
        %v4390 = vunpack.c.l.b16 %v2772
        %v4391 = vunpack.c.h.b16 %v2772
        %v4392 = vunpack.c.l.b16 %v2773
        %v4393 = vunpack.c.h.b16 %v2773
        %v4394 = vunpack.c.l.b16 %v2774
        %v4395 = vunpack.c.h.b16 %v2774
        %v4396 = vunpack.c.l.b16 %v2775
        %v4397 = vunpack.c.h.b16 %v2775
        %v4398 = vunpack.c.l.b16 %v2776
        %v4399 = vunpack.c.h.b16 %v2776
        %v4400 = vunpack.c.l.b16 %v2777
        %v4401 = vunpack.c.h.b16 %v2777
        %v4402 = vunpack.c.l.b16 %v2778
        %v4403 = vunpack.c.h.b16 %v2778
        %v4404 = vunpack.c.l.b16 %v2779
        %v4405 = vunpack.c.h.b16 %v2779
        %v4406 = vunpack.c.l.b16 %v2780
        %v4407 = vunpack.c.h.b16 %v2780
        %v4408 = vunpack.c.l.b16 %v2781
        %v4409 = vunpack.c.h.b16 %v2781
        %v4410 = vunpack.c.l.b16 %v2782
        %v4411 = vunpack.c.h.b16 %v2782
        %v4412 = vunpack.c.l.b16 %v2783
        %v4413 = vunpack.c.h.b16 %v2783
        %v4414 = vunpack.c.l.b16 %v2784
        %v4415 = vunpack.c.h.b16 %v2784
        %v4416 = vunpack.c.l.b16 %v2785
        %v4417 = vunpack.c.h.b16 %v2785
        %v4418 = vunpack.c.l.b16 %v2786
        %v4419 = vunpack.c.h.b16 %v2786
        %v4420 = vunpack.c.l.b16 %v2787
        %v4421 = vunpack.c.h.b16 %v2787
        %v4422 = vunpack.c.l.b16 %v2788
        %v4423 = vunpack.c.h.b16 %v2788
        %v4424 = vunpack.c.l.b16 %v2789
        %v4425 = vunpack.c.h.b16 %v2789
        %v4426 = vunpack.c.l.b16 %v2790
        %v4427 = vunpack.c.h.b16 %v2790
        %v4428 = vunpack.c.l.b16 %v2791
        %v4429 = vunpack.c.h.b16 %v2791
        %v4430 = vunpack.c.l.b16 %v2792
        %v4431 = vunpack.c.h.b16 %v2792
        %v4432 = vunpack.c.l.b16 %v2793
        %v4433 = vunpack.c.h.b16 %v2793
        %v4434 = vpack.c.b16 %v4182, %v4178
        %v4435 = vpack.c.b16 %v4183, %v4179
        %v4436 = vpack.c.b16 %v4184, %v4180
        %v4437 = vpack.c.b16 %v4185, %v4181
        %v4438 = vpack.c.b16 %v4190, %v4186
        %v4439 = vpack.c.b16 %v4191, %v4187
        %v4440 = vpack.c.b16 %v4192, %v4188
        %v4441 = vpack.c.b16 %v4193, %v4189
        %v4442 = vpack.c.b16 %v4198, %v4194
        %v4443 = vpack.c.b16 %v4199, %v4195
        %v4444 = vpack.c.b16 %v4200, %v4196
        %v4445 = vpack.c.b16 %v4201, %v4197
        %v4446 = vpack.c.b16 %v4206, %v4202
        %v4447 = vpack.c.b16 %v4207, %v4203
        %v4448 = vpack.c.b16 %v4208, %v4204
        %v4449 = vpack.c.b16 %v4209, %v4205
        %v4450 = vpack.c.b16 %v4214, %v4210
        %v4451 = vpack.c.b16 %v4215, %v4211
        %v4452 = vpack.c.b16 %v4216, %v4212
        %v4453 = vpack.c.b16 %v4217, %v4213
        %v4454 = vpack.c.b16 %v4222, %v4218
        %v4455 = vpack.c.b16 %v4223, %v4219
        %v4456 = vpack.c.b16 %v4224, %v4220
        %v4457 = vpack.c.b16 %v4225, %v4221
        %v4458 = vpack.c.b16 %v4230, %v4226
        %v4459 = vpack.c.b16 %v4231, %v4227
        %v4460 = vpack.c.b16 %v4232, %v4228
        %v4461 = vpack.c.b16 %v4233, %v4229
        %v4462 = vpack.c.b16 %v4238, %v4234
        %v4463 = vpack.c.b16 %v4239, %v4235
        %v4464 = vpack.c.b16 %v4240, %v4236
        %v4465 = vpack.c.b16 %v4241, %v4237
        %v4466 = vpack.c.b16 %v4246, %v4242
        %v4467 = vpack.c.b16 %v4247, %v4243
        %v4468 = vpack.c.b16 %v4248, %v4244
        %v4469 = vpack.c.b16 %v4249, %v4245
        %v4470 = vpack.c.b16 %v4254, %v4250
        %v4471 = vpack.c.b16 %v4255, %v4251
        %v4472 = vpack.c.b16 %v4256, %v4252
        %v4473 = vpack.c.b16 %v4257, %v4253
        %v4474 = vpack.c.b16 %v4262, %v4258
        %v4475 = vpack.c.b16 %v4263, %v4259
        %v4476 = vpack.c.b16 %v4264, %v4260
        %v4477 = vpack.c.b16 %v4265, %v4261
        %v4478 = vpack.c.b16 %v4270, %v4266
        %v4479 = vpack.c.b16 %v4271, %v4267
        %v4480 = vpack.c.b16 %v4272, %v4268
        %v4481 = vpack.c.b16 %v4273, %v4269
        %v4482 = vpack.c.b16 %v4278, %v4274
        %v4483 = vpack.c.b16 %v4279, %v4275
        %v4484 = vpack.c.b16 %v4280, %v4276
        %v4485 = vpack.c.b16 %v4281, %v4277
        %v4486 = vpack.c.b16 %v4286, %v4282
        %v4487 = vpack.c.b16 %v4287, %v4283
        %v4488 = vpack.c.b16 %v4288, %v4284
        %v4489 = vpack.c.b16 %v4289, %v4285
        %v4490 = vpack.c.b16 %v4294, %v4290
        %v4491 = vpack.c.b16 %v4295, %v4291
        %v4492 = vpack.c.b16 %v4296, %v4292
        %v4493 = vpack.c.b16 %v4297, %v4293
        %v4494 = vpack.c.b16 %v4302, %v4298
        %v4495 = vpack.c.b16 %v4303, %v4299
        %v4496 = vpack.c.b16 %v4304, %v4300
        %v4497 = vpack.c.b16 %v4305, %v4301
        %v4498 = vpack.c.b16 %v4310, %v4306
        %v4499 = vpack.c.b16 %v4311, %v4307
        %v4500 = vpack.c.b16 %v4312, %v4308
        %v4501 = vpack.c.b16 %v4313, %v4309
        %v4502 = vpack.c.b16 %v4318, %v4314
        %v4503 = vpack.c.b16 %v4319, %v4315
        %v4504 = vpack.c.b16 %v4320, %v4316
        %v4505 = vpack.c.b16 %v4321, %v4317
        %v4506 = vpack.c.b16 %v4326, %v4322
        %v4507 = vpack.c.b16 %v4327, %v4323
        %v4508 = vpack.c.b16 %v4328, %v4324
        %v4509 = vpack.c.b16 %v4329, %v4325
        %v4510 = vpack.c.b16 %v4334, %v4330
        %v4511 = vpack.c.b16 %v4335, %v4331
        %v4512 = vpack.c.b16 %v4336, %v4332
        %v4513 = vpack.c.b16 %v4337, %v4333
        %v4514 = vpack.c.b16 %v4342, %v4338
        %v4515 = vpack.c.b16 %v4343, %v4339
        %v4516 = vpack.c.b16 %v4344, %v4340
        %v4517 = vpack.c.b16 %v4345, %v4341
        %v4518 = vpack.c.b16 %v4350, %v4346
        %v4519 = vpack.c.b16 %v4351, %v4347
        %v4520 = vpack.c.b16 %v4352, %v4348
        %v4521 = vpack.c.b16 %v4353, %v4349
        %v4522 = vpack.c.b16 %v4358, %v4354
        %v4523 = vpack.c.b16 %v4359, %v4355
        %v4524 = vpack.c.b16 %v4360, %v4356
        %v4525 = vpack.c.b16 %v4361, %v4357
        %v4526 = vpack.c.b16 %v4366, %v4362
        %v4527 = vpack.c.b16 %v4367, %v4363
        %v4528 = vpack.c.b16 %v4368, %v4364
        %v4529 = vpack.c.b16 %v4369, %v4365
        %v4530 = vpack.c.b16 %v4374, %v4370
        %v4531 = vpack.c.b16 %v4375, %v4371
        %v4532 = vpack.c.b16 %v4376, %v4372
        %v4533 = vpack.c.b16 %v4377, %v4373
        %v4534 = vpack.c.b16 %v4382, %v4378
        %v4535 = vpack.c.b16 %v4383, %v4379
        %v4536 = vpack.c.b16 %v4384, %v4380
        %v4537 = vpack.c.b16 %v4385, %v4381
        %v4538 = vpack.c.b16 %v4390, %v4386
        %v4539 = vpack.c.b16 %v4391, %v4387
        %v4540 = vpack.c.b16 %v4392, %v4388
        %v4541 = vpack.c.b16 %v4393, %v4389
        %v4542 = vpack.c.b16 %v4398, %v4394
        %v4543 = vpack.c.b16 %v4399, %v4395
        %v4544 = vpack.c.b16 %v4400, %v4396
        %v4545 = vpack.c.b16 %v4401, %v4397
        %v4546 = vpack.c.b16 %v4406, %v4402
        %v4547 = vpack.c.b16 %v4407, %v4403
        %v4548 = vpack.c.b16 %v4408, %v4404
        %v4549 = vpack.c.b16 %v4409, %v4405
        %v4550 = vpack.c.b16 %v4414, %v4410
        %v4551 = vpack.c.b16 %v4415, %v4411
        %v4552 = vpack.c.b16 %v4416, %v4412
        %v4553 = vpack.c.b16 %v4417, %v4413
        %v4554 = vpack.c.b16 %v4422, %v4418
        %v4555 = vpack.c.b16 %v4423, %v4419
        %v4556 = vpack.c.b16 %v4424, %v4420
        %v4557 = vpack.c.b16 %v4425, %v4421
        %v4558 = vpack.c.b16 %v4430, %v4426
        %v4559 = vpack.c.b16 %v4431, %v4427
        %v4560 = vpack.c.b16 %v4432, %v4428
        %v4561 = vpack.c.b16 %v4433, %v4429
        %4690 = vmatpush.bf16.msra.mxu0 %v4462
        %4691 = vmatpush.bf16.msra.mxu0 %v4458
        %4692 = vmatpush.bf16.msra.mxu0 %v4454
        %4693 = vmatpush.bf16.msra.mxu0 %v4450
        %4694 = vmatpush.bf16.msra.mxu0 %v4446
        %4695 = vmatpush.bf16.msra.mxu0 %v4442
        %4696 = vmatpush.bf16.msra.mxu0 %v4438
        %4697 = vmatpush.bf16.msra.mxu0 %v4434
        %4698 = vmatmul.bf16.gmra.mxu0 %v3119
        %v4699 = vpop.f32.mrf.mxu0
        %v4700 = vadd.f32 %v3878, %v4699
        %v4701 = vpop.f32.mrf.mxu0
        %v4702 = vadd.f32 %v3880, %v4701
        %4703 = vdwg.mxu0
        %4704 = vmatpush.bf16.msra.mxu0 %v4494
        %4705 = vmatpush.bf16.msra.mxu0 %v4490
        %4706 = vmatpush.bf16.msra.mxu0 %v4486
        %4707 = vmatpush.bf16.msra.mxu0 %v4482
        %4708 = vmatpush.bf16.msra.mxu0 %v4478
        %4709 = vmatpush.bf16.msra.mxu0 %v4474
        %4710 = vmatpush.bf16.msra.mxu0 %v4470
        %4711 = vmatpush.bf16.msra.mxu0 %v4466
        %4712 = vmatmul.bf16.gmra.mxu0 %v3120
        %v4713 = vpop.f32.mrf.mxu0
        %v4714 = vadd.f32 %v4700, %v4713
        %v4715 = vpop.f32.mrf.mxu0
        %v4716 = vadd.f32 %v4702, %v4715
        %4717 = vdwg.mxu0
        %4718 = vmatpush.bf16.msra.mxu0 %v4526
        %4719 = vmatpush.bf16.msra.mxu0 %v4522
        %4720 = vmatpush.bf16.msra.mxu0 %v4518
        %4721 = vmatpush.bf16.msra.mxu0 %v4514
        %4722 = vmatpush.bf16.msra.mxu0 %v4510
        %4723 = vmatpush.bf16.msra.mxu0 %v4506
        %4724 = vmatpush.bf16.msra.mxu0 %v4502
        %4725 = vmatpush.bf16.msra.mxu0 %v4498
        %4726 = vmatmul.bf16.gmra.mxu0 %v3121
        %v4727 = vpop.f32.mrf.mxu0
        %v4728 = vadd.f32 %v4714, %v4727
        %v4729 = vpop.f32.mrf.mxu0
        %v4730 = vadd.f32 %v4716, %v4729
        %4731 = vdwg.mxu0
        %4732 = vmatpush.bf16.msra.mxu0 %v4558
        %4733 = vmatpush.bf16.msra.mxu0 %v4554
        %4734 = vmatpush.bf16.msra.mxu0 %v4550
        %4735 = vmatpush.bf16.msra.mxu0 %v4546
        %4736 = vmatpush.bf16.msra.mxu0 %v4542
        %4737 = vmatpush.bf16.msra.mxu0 %v4538
        %4738 = vmatpush.bf16.msra.mxu0 %v4534
        %4739 = vmatpush.bf16.msra.mxu0 %v4530
        %4740 = vmatmul.bf16.gmra.mxu0 %v3122
        %v4741 = vpop.f32.mrf.mxu0
        %v4742 = vadd.f32 %v4728, %v4741
        %v4743 = vpop.f32.mrf.mxu0
        %v4744 = vadd.f32 %v4730, %v4743
        %4745 = vdwg.mxu0
        %4746 = vmatpush.bf16.msra.mxu0 %v4463
        %4747 = vmatpush.bf16.msra.mxu0 %v4459
        %4748 = vmatpush.bf16.msra.mxu0 %v4455
        %4749 = vmatpush.bf16.msra.mxu0 %v4451
        %4750 = vmatpush.bf16.msra.mxu0 %v4447
        %4751 = vmatpush.bf16.msra.mxu0 %v4443
        %4752 = vmatpush.bf16.msra.mxu0 %v4439
        %4753 = vmatpush.bf16.msra.mxu0 %v4435
        %4754 = vmatmul.bf16.gmra.mxu0 %v3119
        %v4755 = vpop.f32.mrf.mxu0
        %v4756 = vadd.f32 %v3934, %v4755
        %v4757 = vpop.f32.mrf.mxu0
        %v4758 = vadd.f32 %v3936, %v4757
        %4759 = vdwg.mxu0
        %4760 = vmatpush.bf16.msra.mxu0 %v4495
        %4761 = vmatpush.bf16.msra.mxu0 %v4491
        %4762 = vmatpush.bf16.msra.mxu0 %v4487
        %4763 = vmatpush.bf16.msra.mxu0 %v4483
        %4764 = vmatpush.bf16.msra.mxu0 %v4479
        %4765 = vmatpush.bf16.msra.mxu0 %v4475
        %4766 = vmatpush.bf16.msra.mxu0 %v4471
        %4767 = vmatpush.bf16.msra.mxu0 %v4467
        %4768 = vmatmul.bf16.gmra.mxu0 %v3120
        %v4769 = vpop.f32.mrf.mxu0
        %v4770 = vadd.f32 %v4756, %v4769
        %v4771 = vpop.f32.mrf.mxu0
        %v4772 = vadd.f32 %v4758, %v4771
        %4773 = vdwg.mxu0
        %4774 = vmatpush.bf16.msra.mxu0 %v4527
        %4775 = vmatpush.bf16.msra.mxu0 %v4523
        %4776 = vmatpush.bf16.msra.mxu0 %v4519
        %4777 = vmatpush.bf16.msra.mxu0 %v4515
        %4778 = vmatpush.bf16.msra.mxu0 %v4511
        %4779 = vmatpush.bf16.msra.mxu0 %v4507
        %4780 = vmatpush.bf16.msra.mxu0 %v4503
        %4781 = vmatpush.bf16.msra.mxu0 %v4499
        %4782 = vmatmul.bf16.gmra.mxu0 %v3121
        %v4783 = vpop.f32.mrf.mxu0
        %v4784 = vadd.f32 %v4770, %v4783
        %v4785 = vpop.f32.mrf.mxu0
        %v4786 = vadd.f32 %v4772, %v4785
        %4787 = vdwg.mxu0
        %4788 = vmatpush.bf16.msra.mxu0 %v4559
        %4789 = vmatpush.bf16.msra.mxu0 %v4555
        %4790 = vmatpush.bf16.msra.mxu0 %v4551
        %4791 = vmatpush.bf16.msra.mxu0 %v4547
        %4792 = vmatpush.bf16.msra.mxu0 %v4543
        %4793 = vmatpush.bf16.msra.mxu0 %v4539
        %4794 = vmatpush.bf16.msra.mxu0 %v4535
        %4795 = vmatpush.bf16.msra.mxu0 %v4531
        %4796 = vmatmul.bf16.gmra.mxu0 %v3122
        %v4797 = vpop.f32.mrf.mxu0
        %v4798 = vadd.f32 %v4784, %v4797
        %v4799 = vpop.f32.mrf.mxu0
        %v4800 = vadd.f32 %v4786, %v4799
        %4801 = vdwg.mxu0
        %4802 = vmatpush.bf16.msra.mxu0 %v4464
        %4803 = vmatpush.bf16.msra.mxu0 %v4460
        %4804 = vmatpush.bf16.msra.mxu0 %v4456
        %4805 = vmatpush.bf16.msra.mxu0 %v4452
        %4806 = vmatpush.bf16.msra.mxu0 %v4448
        %4807 = vmatpush.bf16.msra.mxu0 %v4444
        %4808 = vmatpush.bf16.msra.mxu0 %v4440
        %4809 = vmatpush.bf16.msra.mxu0 %v4436
        %4810 = vmatmul.bf16.gmra.mxu0 %v3119
        %v4811 = vpop.f32.mrf.mxu0
        %v4812 = vadd.f32 %v3990, %v4811
        %v4813 = vpop.f32.mrf.mxu0
        %v4814 = vadd.f32 %v3992, %v4813
        %4815 = vdwg.mxu0
        %4816 = vmatpush.bf16.msra.mxu0 %v4496
        %4817 = vmatpush.bf16.msra.mxu0 %v4492
        %4818 = vmatpush.bf16.msra.mxu0 %v4488
        %4819 = vmatpush.bf16.msra.mxu0 %v4484
        %4820 = vmatpush.bf16.msra.mxu0 %v4480
        %4821 = vmatpush.bf16.msra.mxu0 %v4476
        %4822 = vmatpush.bf16.msra.mxu0 %v4472
        %4823 = vmatpush.bf16.msra.mxu0 %v4468
        %4824 = vmatmul.bf16.gmra.mxu0 %v3120
        %v4825 = vpop.f32.mrf.mxu0
        %v4826 = vadd.f32 %v4812, %v4825
        %v4827 = vpop.f32.mrf.mxu0
        %v4828 = vadd.f32 %v4814, %v4827
        %4829 = vdwg.mxu0
        %4830 = vmatpush.bf16.msra.mxu0 %v4528
        %4831 = vmatpush.bf16.msra.mxu0 %v4524
        %4832 = vmatpush.bf16.msra.mxu0 %v4520
        %4833 = vmatpush.bf16.msra.mxu0 %v4516
        %4834 = vmatpush.bf16.msra.mxu0 %v4512
        %4835 = vmatpush.bf16.msra.mxu0 %v4508
        %4836 = vmatpush.bf16.msra.mxu0 %v4504
        %4837 = vmatpush.bf16.msra.mxu0 %v4500
        %4838 = vmatmul.bf16.gmra.mxu0 %v3121
        %v4839 = vpop.f32.mrf.mxu0
        %v4840 = vadd.f32 %v4826, %v4839
        %v4841 = vpop.f32.mrf.mxu0
        %v4842 = vadd.f32 %v4828, %v4841
        %4843 = vdwg.mxu0
        %4844 = vmatpush.bf16.msra.mxu0 %v4560
        %4845 = vmatpush.bf16.msra.mxu0 %v4556
        %4846 = vmatpush.bf16.msra.mxu0 %v4552
        %4847 = vmatpush.bf16.msra.mxu0 %v4548
        %4848 = vmatpush.bf16.msra.mxu0 %v4544
        %4849 = vmatpush.bf16.msra.mxu0 %v4540
        %4850 = vmatpush.bf16.msra.mxu0 %v4536
        %4851 = vmatpush.bf16.msra.mxu0 %v4532
        %4852 = vmatmul.bf16.gmra.mxu0 %v3122
        %v4853 = vpop.f32.mrf.mxu0
        %v4854 = vadd.f32 %v4840, %v4853
        %v4855 = vpop.f32.mrf.mxu0
        %v4856 = vadd.f32 %v4842, %v4855
        %4857 = vdwg.mxu0
        %4858 = vmatpush.bf16.msra.mxu0 %v4465
        %4859 = vmatpush.bf16.msra.mxu0 %v4461
        %4860 = vmatpush.bf16.msra.mxu0 %v4457
        %4861 = vmatpush.bf16.msra.mxu0 %v4453
        %4862 = vmatpush.bf16.msra.mxu0 %v4449
        %4863 = vmatpush.bf16.msra.mxu0 %v4445
        %4864 = vmatpush.bf16.msra.mxu0 %v4441
        %4865 = vmatpush.bf16.msra.mxu0 %v4437
        %4866 = vmatmul.bf16.gmra.mxu0 %v3119
        %v4867 = vpop.f32.mrf.mxu0
        %v4868 = vadd.f32 %v4046, %v4867
        %v4869 = vpop.f32.mrf.mxu0
        %v4870 = vadd.f32 %v4048, %v4869
        %4871 = vdwg.mxu0
        %4872 = vmatpush.bf16.msra.mxu0 %v4497
        %4873 = vmatpush.bf16.msra.mxu0 %v4493
        %4874 = vmatpush.bf16.msra.mxu0 %v4489
        %4875 = vmatpush.bf16.msra.mxu0 %v4485
        %4876 = vmatpush.bf16.msra.mxu0 %v4481
        %4877 = vmatpush.bf16.msra.mxu0 %v4477
        %4878 = vmatpush.bf16.msra.mxu0 %v4473
        %4879 = vmatpush.bf16.msra.mxu0 %v4469
        %4880 = vmatmul.bf16.gmra.mxu0 %v3120
        %v4881 = vpop.f32.mrf.mxu0
        %v4882 = vadd.f32 %v4868, %v4881
        %v4883 = vpop.f32.mrf.mxu0
        %v4884 = vadd.f32 %v4870, %v4883
        %4885 = vdwg.mxu0
        %4886 = vmatpush.bf16.msra.mxu0 %v4529
        %4887 = vmatpush.bf16.msra.mxu0 %v4525
        %4888 = vmatpush.bf16.msra.mxu0 %v4521
        %4889 = vmatpush.bf16.msra.mxu0 %v4517
        %4890 = vmatpush.bf16.msra.mxu0 %v4513
        %4891 = vmatpush.bf16.msra.mxu0 %v4509
        %4892 = vmatpush.bf16.msra.mxu0 %v4505
        %4893 = vmatpush.bf16.msra.mxu0 %v4501
        %4894 = vmatmul.bf16.gmra.mxu0 %v3121
        %v4895 = vpop.f32.mrf.mxu0
        %v4896 = vadd.f32 %v4882, %v4895
        %v4897 = vpop.f32.mrf.mxu0
        %v4898 = vadd.f32 %v4884, %v4897
        %4899 = vdwg.mxu0
        %4900 = vmatpush.bf16.msra.mxu0 %v4561
        %4901 = vmatpush.bf16.msra.mxu0 %v4557
        %4902 = vmatpush.bf16.msra.mxu0 %v4553
        %4903 = vmatpush.bf16.msra.mxu0 %v4549
        %4904 = vmatpush.bf16.msra.mxu0 %v4545
        %4905 = vmatpush.bf16.msra.mxu0 %v4541
        %4906 = vmatpush.bf16.msra.mxu0 %v4537
        %4907 = vmatpush.bf16.msra.mxu0 %v4533
        %4908 = vmatmul.bf16.gmra.mxu0 %v3122
        %v4909 = vpop.f32.mrf.mxu0
        %v4910 = vadd.f32 %v4896, %v4909
        %v4911 = vpop.f32.mrf.mxu0
        %v4912 = vadd.f32 %v4898, %v4911
        %4913 = vdwg.mxu0
        %v5042 = vunpack.c.l.b16 %v2922
        %v5043 = vunpack.c.h.b16 %v2922
        %v5044 = vunpack.c.l.b16 %v2923
        %v5045 = vunpack.c.h.b16 %v2923
        %v5046 = vunpack.c.l.b16 %v2924
        %v5047 = vunpack.c.h.b16 %v2924
        %v5048 = vunpack.c.l.b16 %v2925
        %v5049 = vunpack.c.h.b16 %v2925
        %v5050 = vunpack.c.l.b16 %v2926
        %v5051 = vunpack.c.h.b16 %v2926
        %v5052 = vunpack.c.l.b16 %v2927
        %v5053 = vunpack.c.h.b16 %v2927
        %v5054 = vunpack.c.l.b16 %v2928
        %v5055 = vunpack.c.h.b16 %v2928
        %v5056 = vunpack.c.l.b16 %v2929
        %v5057 = vunpack.c.h.b16 %v2929
        %v5058 = vunpack.c.l.b16 %v2930
        %v5059 = vunpack.c.h.b16 %v2930
        %v5060 = vunpack.c.l.b16 %v2931
        %v5061 = vunpack.c.h.b16 %v2931
        %v5062 = vunpack.c.l.b16 %v2932
        %v5063 = vunpack.c.h.b16 %v2932
        %v5064 = vunpack.c.l.b16 %v2933
        %v5065 = vunpack.c.h.b16 %v2933
        %v5066 = vunpack.c.l.b16 %v2934
        %v5067 = vunpack.c.h.b16 %v2934
        %v5068 = vunpack.c.l.b16 %v2935
        %v5069 = vunpack.c.h.b16 %v2935
        %v5070 = vunpack.c.l.b16 %v2936
        %v5071 = vunpack.c.h.b16 %v2936
        %v5072 = vunpack.c.l.b16 %v2937
        %v5073 = vunpack.c.h.b16 %v2937
        %v5074 = vunpack.c.l.b16 %v2938
        %v5075 = vunpack.c.h.b16 %v2938
        %v5076 = vunpack.c.l.b16 %v2939
        %v5077 = vunpack.c.h.b16 %v2939
        %v5078 = vunpack.c.l.b16 %v2940
        %v5079 = vunpack.c.h.b16 %v2940
        %v5080 = vunpack.c.l.b16 %v2941
        %v5081 = vunpack.c.h.b16 %v2941
        %v5082 = vunpack.c.l.b16 %v2942
        %v5083 = vunpack.c.h.b16 %v2942
        %v5084 = vunpack.c.l.b16 %v2943
        %v5085 = vunpack.c.h.b16 %v2943
        %v5086 = vunpack.c.l.b16 %v2944
        %v5087 = vunpack.c.h.b16 %v2944
        %v5088 = vunpack.c.l.b16 %v2945
        %v5089 = vunpack.c.h.b16 %v2945
        %v5090 = vunpack.c.l.b16 %v2946
        %v5091 = vunpack.c.h.b16 %v2946
        %v5092 = vunpack.c.l.b16 %v2947
        %v5093 = vunpack.c.h.b16 %v2947
        %v5094 = vunpack.c.l.b16 %v2948
        %v5095 = vunpack.c.h.b16 %v2948
        %v5096 = vunpack.c.l.b16 %v2949
        %v5097 = vunpack.c.h.b16 %v2949
        %v5098 = vunpack.c.l.b16 %v2950
        %v5099 = vunpack.c.h.b16 %v2950
        %v5100 = vunpack.c.l.b16 %v2951
        %v5101 = vunpack.c.h.b16 %v2951
        %v5102 = vunpack.c.l.b16 %v2952
        %v5103 = vunpack.c.h.b16 %v2952
        %v5104 = vunpack.c.l.b16 %v2953
        %v5105 = vunpack.c.h.b16 %v2953
        %v5106 = vunpack.c.l.b16 %v2954
        %v5107 = vunpack.c.h.b16 %v2954
        %v5108 = vunpack.c.l.b16 %v2955
        %v5109 = vunpack.c.h.b16 %v2955
        %v5110 = vunpack.c.l.b16 %v2956
        %v5111 = vunpack.c.h.b16 %v2956
        %v5112 = vunpack.c.l.b16 %v2957
        %v5113 = vunpack.c.h.b16 %v2957
        %v5114 = vunpack.c.l.b16 %v2958
        %v5115 = vunpack.c.h.b16 %v2958
        %v5116 = vunpack.c.l.b16 %v2959
        %v5117 = vunpack.c.h.b16 %v2959
        %v5118 = vunpack.c.l.b16 %v2960
        %v5119 = vunpack.c.h.b16 %v2960
        %v5120 = vunpack.c.l.b16 %v2961
        %v5121 = vunpack.c.h.b16 %v2961
        %v5122 = vunpack.c.l.b16 %v2962
        %v5123 = vunpack.c.h.b16 %v2962
        %v5124 = vunpack.c.l.b16 %v2963
        %v5125 = vunpack.c.h.b16 %v2963
        %v5126 = vunpack.c.l.b16 %v2964
        %v5127 = vunpack.c.h.b16 %v2964
        %v5128 = vunpack.c.l.b16 %v2965
        %v5129 = vunpack.c.h.b16 %v2965
        %v5130 = vunpack.c.l.b16 %v2966
        %v5131 = vunpack.c.h.b16 %v2966
        %v5132 = vunpack.c.l.b16 %v2967
        %v5133 = vunpack.c.h.b16 %v2967
        %v5134 = vunpack.c.l.b16 %v2968
        %v5135 = vunpack.c.h.b16 %v2968
        %v5136 = vunpack.c.l.b16 %v2969
        %v5137 = vunpack.c.h.b16 %v2969
        %v5138 = vunpack.c.l.b16 %v2970
        %v5139 = vunpack.c.h.b16 %v2970
        %v5140 = vunpack.c.l.b16 %v2971
        %v5141 = vunpack.c.h.b16 %v2971
        %v5142 = vunpack.c.l.b16 %v2972
        %v5143 = vunpack.c.h.b16 %v2972
        %v5144 = vunpack.c.l.b16 %v2973
        %v5145 = vunpack.c.h.b16 %v2973
        %v5146 = vunpack.c.l.b16 %v2974
        %v5147 = vunpack.c.h.b16 %v2974
        %v5148 = vunpack.c.l.b16 %v2975
        %v5149 = vunpack.c.h.b16 %v2975
        %v5150 = vunpack.c.l.b16 %v2976
        %v5151 = vunpack.c.h.b16 %v2976
        %v5152 = vunpack.c.l.b16 %v2977
        %v5153 = vunpack.c.h.b16 %v2977
        %v5154 = vunpack.c.l.b16 %v2978
        %v5155 = vunpack.c.h.b16 %v2978
        %v5156 = vunpack.c.l.b16 %v2979
        %v5157 = vunpack.c.h.b16 %v2979
        %v5158 = vunpack.c.l.b16 %v2980
        %v5159 = vunpack.c.h.b16 %v2980
        %v5160 = vunpack.c.l.b16 %v2981
        %v5161 = vunpack.c.h.b16 %v2981
        %v5162 = vunpack.c.l.b16 %v2982
        %v5163 = vunpack.c.h.b16 %v2982
        %v5164 = vunpack.c.l.b16 %v2983
        %v5165 = vunpack.c.h.b16 %v2983
        %v5166 = vunpack.c.l.b16 %v2984
        %v5167 = vunpack.c.h.b16 %v2984
        %v5168 = vunpack.c.l.b16 %v2985
        %v5169 = vunpack.c.h.b16 %v2985
        %v5170 = vunpack.c.l.b16 %v2986
        %v5171 = vunpack.c.h.b16 %v2986
        %v5172 = vunpack.c.l.b16 %v2987
        %v5173 = vunpack.c.h.b16 %v2987
        %v5174 = vunpack.c.l.b16 %v2988
        %v5175 = vunpack.c.h.b16 %v2988
        %v5176 = vunpack.c.l.b16 %v2989
        %v5177 = vunpack.c.h.b16 %v2989
        %v5178 = vunpack.c.l.b16 %v2990
        %v5179 = vunpack.c.h.b16 %v2990
        %v5180 = vunpack.c.l.b16 %v2991
        %v5181 = vunpack.c.h.b16 %v2991
        %v5182 = vunpack.c.l.b16 %v2992
        %v5183 = vunpack.c.h.b16 %v2992
        %v5184 = vunpack.c.l.b16 %v2993
        %v5185 = vunpack.c.h.b16 %v2993
        %v5186 = vunpack.c.l.b16 %v2994
        %v5187 = vunpack.c.h.b16 %v2994
        %v5188 = vunpack.c.l.b16 %v2995
        %v5189 = vunpack.c.h.b16 %v2995
        %v5190 = vunpack.c.l.b16 %v2996
        %v5191 = vunpack.c.h.b16 %v2996
        %v5192 = vunpack.c.l.b16 %v2997
        %v5193 = vunpack.c.h.b16 %v2997
        %v5194 = vunpack.c.l.b16 %v2998
        %v5195 = vunpack.c.h.b16 %v2998
        %v5196 = vunpack.c.l.b16 %v2999
        %v5197 = vunpack.c.h.b16 %v2999
        %v5198 = vunpack.c.l.b16 %v3000
        %v5199 = vunpack.c.h.b16 %v3000
        %v5200 = vunpack.c.l.b16 %v3001
        %v5201 = vunpack.c.h.b16 %v3001
        %v5202 = vunpack.c.l.b16 %v3002
        %v5203 = vunpack.c.h.b16 %v3002
        %v5204 = vunpack.c.l.b16 %v3003
        %v5205 = vunpack.c.h.b16 %v3003
        %v5206 = vunpack.c.l.b16 %v3004
        %v5207 = vunpack.c.h.b16 %v3004
        %v5208 = vunpack.c.l.b16 %v3005
        %v5209 = vunpack.c.h.b16 %v3005
        %v5210 = vunpack.c.l.b16 %v3006
        %v5211 = vunpack.c.h.b16 %v3006
        %v5212 = vunpack.c.l.b16 %v3007
        %v5213 = vunpack.c.h.b16 %v3007
        %v5214 = vunpack.c.l.b16 %v3008
        %v5215 = vunpack.c.h.b16 %v3008
        %v5216 = vunpack.c.l.b16 %v3009
        %v5217 = vunpack.c.h.b16 %v3009
        %v5218 = vunpack.c.l.b16 %v3010
        %v5219 = vunpack.c.h.b16 %v3010
        %v5220 = vunpack.c.l.b16 %v3011
        %v5221 = vunpack.c.h.b16 %v3011
        %v5222 = vunpack.c.l.b16 %v3012
        %v5223 = vunpack.c.h.b16 %v3012
        %v5224 = vunpack.c.l.b16 %v3013
        %v5225 = vunpack.c.h.b16 %v3013
        %v5226 = vunpack.c.l.b16 %v3014
        %v5227 = vunpack.c.h.b16 %v3014
        %v5228 = vunpack.c.l.b16 %v3015
        %v5229 = vunpack.c.h.b16 %v3015
        %v5230 = vunpack.c.l.b16 %v3016
        %v5231 = vunpack.c.h.b16 %v3016
        %v5232 = vunpack.c.l.b16 %v3017
        %v5233 = vunpack.c.h.b16 %v3017
        %v5234 = vunpack.c.l.b16 %v3018
        %v5235 = vunpack.c.h.b16 %v3018
        %v5236 = vunpack.c.l.b16 %v3019
        %v5237 = vunpack.c.h.b16 %v3019
        %v5238 = vunpack.c.l.b16 %v3020
        %v5239 = vunpack.c.h.b16 %v3020
        %v5240 = vunpack.c.l.b16 %v3021
        %v5241 = vunpack.c.h.b16 %v3021
        %v5242 = vunpack.c.l.b16 %v3022
        %v5243 = vunpack.c.h.b16 %v3022
        %v5244 = vunpack.c.l.b16 %v3023
        %v5245 = vunpack.c.h.b16 %v3023
        %v5246 = vunpack.c.l.b16 %v3024
        %v5247 = vunpack.c.h.b16 %v3024
        %v5248 = vunpack.c.l.b16 %v3025
        %v5249 = vunpack.c.h.b16 %v3025
        %v5250 = vunpack.c.l.b16 %v3026
        %v5251 = vunpack.c.h.b16 %v3026
        %v5252 = vunpack.c.l.b16 %v3027
        %v5253 = vunpack.c.h.b16 %v3027
        %v5254 = vunpack.c.l.b16 %v3028
        %v5255 = vunpack.c.h.b16 %v3028
        %v5256 = vunpack.c.l.b16 %v3029
        %v5257 = vunpack.c.h.b16 %v3029
        %v5258 = vunpack.c.l.b16 %v3030
        %v5259 = vunpack.c.h.b16 %v3030
        %v5260 = vunpack.c.l.b16 %v3031
        %v5261 = vunpack.c.h.b16 %v3031
        %v5262 = vunpack.c.l.b16 %v3032
        %v5263 = vunpack.c.h.b16 %v3032
        %v5264 = vunpack.c.l.b16 %v3033
        %v5265 = vunpack.c.h.b16 %v3033
        %v5266 = vunpack.c.l.b16 %v3034
        %v5267 = vunpack.c.h.b16 %v3034
        %v5268 = vunpack.c.l.b16 %v3035
        %v5269 = vunpack.c.h.b16 %v3035
        %v5270 = vunpack.c.l.b16 %v3036
        %v5271 = vunpack.c.h.b16 %v3036
        %v5272 = vunpack.c.l.b16 %v3037
        %v5273 = vunpack.c.h.b16 %v3037
        %v5274 = vunpack.c.l.b16 %v3038
        %v5275 = vunpack.c.h.b16 %v3038
        %v5276 = vunpack.c.l.b16 %v3039
        %v5277 = vunpack.c.h.b16 %v3039
        %v5278 = vunpack.c.l.b16 %v3040
        %v5279 = vunpack.c.h.b16 %v3040
        %v5280 = vunpack.c.l.b16 %v3041
        %v5281 = vunpack.c.h.b16 %v3041
        %v5282 = vunpack.c.l.b16 %v3042
        %v5283 = vunpack.c.h.b16 %v3042
        %v5284 = vunpack.c.l.b16 %v3043
        %v5285 = vunpack.c.h.b16 %v3043
        %v5286 = vunpack.c.l.b16 %v3044
        %v5287 = vunpack.c.h.b16 %v3044
        %v5288 = vunpack.c.l.b16 %v3045
        %v5289 = vunpack.c.h.b16 %v3045
        %v5290 = vunpack.c.l.b16 %v3046
        %v5291 = vunpack.c.h.b16 %v3046
        %v5292 = vunpack.c.l.b16 %v3047
        %v5293 = vunpack.c.h.b16 %v3047
        %v5294 = vunpack.c.l.b16 %v3048
        %v5295 = vunpack.c.h.b16 %v3048
        %v5296 = vunpack.c.l.b16 %v3049
        %v5297 = vunpack.c.h.b16 %v3049
        %v5298 = vpack.c.b16 %v5046, %v5042
        %v5299 = vpack.c.b16 %v5047, %v5043
        %v5300 = vpack.c.b16 %v5048, %v5044
        %v5301 = vpack.c.b16 %v5049, %v5045
        %v5302 = vpack.c.b16 %v5054, %v5050
        %v5303 = vpack.c.b16 %v5055, %v5051
        %v5304 = vpack.c.b16 %v5056, %v5052
        %v5305 = vpack.c.b16 %v5057, %v5053
        %v5306 = vpack.c.b16 %v5062, %v5058
        %v5307 = vpack.c.b16 %v5063, %v5059
        %v5308 = vpack.c.b16 %v5064, %v5060
        %v5309 = vpack.c.b16 %v5065, %v5061
        %v5310 = vpack.c.b16 %v5070, %v5066
        %v5311 = vpack.c.b16 %v5071, %v5067
        %v5312 = vpack.c.b16 %v5072, %v5068
        %v5313 = vpack.c.b16 %v5073, %v5069
        %v5314 = vpack.c.b16 %v5078, %v5074
        %v5315 = vpack.c.b16 %v5079, %v5075
        %v5316 = vpack.c.b16 %v5080, %v5076
        %v5317 = vpack.c.b16 %v5081, %v5077
        %v5318 = vpack.c.b16 %v5086, %v5082
        %v5319 = vpack.c.b16 %v5087, %v5083
        %v5320 = vpack.c.b16 %v5088, %v5084
        %v5321 = vpack.c.b16 %v5089, %v5085
        %v5322 = vpack.c.b16 %v5094, %v5090
        %v5323 = vpack.c.b16 %v5095, %v5091
        %v5324 = vpack.c.b16 %v5096, %v5092
        %v5325 = vpack.c.b16 %v5097, %v5093
        %v5326 = vpack.c.b16 %v5102, %v5098
        %v5327 = vpack.c.b16 %v5103, %v5099
        %v5328 = vpack.c.b16 %v5104, %v5100
        %v5329 = vpack.c.b16 %v5105, %v5101
        %v5330 = vpack.c.b16 %v5110, %v5106
        %v5331 = vpack.c.b16 %v5111, %v5107
        %v5332 = vpack.c.b16 %v5112, %v5108
        %v5333 = vpack.c.b16 %v5113, %v5109
        %v5334 = vpack.c.b16 %v5118, %v5114
        %v5335 = vpack.c.b16 %v5119, %v5115
        %v5336 = vpack.c.b16 %v5120, %v5116
        %v5337 = vpack.c.b16 %v5121, %v5117
        %v5338 = vpack.c.b16 %v5126, %v5122
        %v5339 = vpack.c.b16 %v5127, %v5123
        %v5340 = vpack.c.b16 %v5128, %v5124
        %v5341 = vpack.c.b16 %v5129, %v5125
        %v5342 = vpack.c.b16 %v5134, %v5130
        %v5343 = vpack.c.b16 %v5135, %v5131
        %v5344 = vpack.c.b16 %v5136, %v5132
        %v5345 = vpack.c.b16 %v5137, %v5133
        %v5346 = vpack.c.b16 %v5142, %v5138
        %v5347 = vpack.c.b16 %v5143, %v5139
        %v5348 = vpack.c.b16 %v5144, %v5140
        %v5349 = vpack.c.b16 %v5145, %v5141
        %v5350 = vpack.c.b16 %v5150, %v5146
        %v5351 = vpack.c.b16 %v5151, %v5147
        %v5352 = vpack.c.b16 %v5152, %v5148
        %v5353 = vpack.c.b16 %v5153, %v5149
        %v5354 = vpack.c.b16 %v5158, %v5154
        %v5355 = vpack.c.b16 %v5159, %v5155
        %v5356 = vpack.c.b16 %v5160, %v5156
        %v5357 = vpack.c.b16 %v5161, %v5157
        %v5358 = vpack.c.b16 %v5166, %v5162
        %v5359 = vpack.c.b16 %v5167, %v5163
        %v5360 = vpack.c.b16 %v5168, %v5164
        %v5361 = vpack.c.b16 %v5169, %v5165
        %v5362 = vpack.c.b16 %v5174, %v5170
        %v5363 = vpack.c.b16 %v5175, %v5171
        %v5364 = vpack.c.b16 %v5176, %v5172
        %v5365 = vpack.c.b16 %v5177, %v5173
        %v5366 = vpack.c.b16 %v5182, %v5178
        %v5367 = vpack.c.b16 %v5183, %v5179
        %v5368 = vpack.c.b16 %v5184, %v5180
        %v5369 = vpack.c.b16 %v5185, %v5181
        %v5370 = vpack.c.b16 %v5190, %v5186
        %v5371 = vpack.c.b16 %v5191, %v5187
        %v5372 = vpack.c.b16 %v5192, %v5188
        %v5373 = vpack.c.b16 %v5193, %v5189
        %v5374 = vpack.c.b16 %v5198, %v5194
        %v5375 = vpack.c.b16 %v5199, %v5195
        %v5376 = vpack.c.b16 %v5200, %v5196
        %v5377 = vpack.c.b16 %v5201, %v5197
        %v5378 = vpack.c.b16 %v5206, %v5202
        %v5379 = vpack.c.b16 %v5207, %v5203
        %v5380 = vpack.c.b16 %v5208, %v5204
        %v5381 = vpack.c.b16 %v5209, %v5205
        %v5382 = vpack.c.b16 %v5214, %v5210
        %v5383 = vpack.c.b16 %v5215, %v5211
        %v5384 = vpack.c.b16 %v5216, %v5212
        %v5385 = vpack.c.b16 %v5217, %v5213
        %v5386 = vpack.c.b16 %v5222, %v5218
        %v5387 = vpack.c.b16 %v5223, %v5219
        %v5388 = vpack.c.b16 %v5224, %v5220
        %v5389 = vpack.c.b16 %v5225, %v5221
        %v5390 = vpack.c.b16 %v5230, %v5226
        %v5391 = vpack.c.b16 %v5231, %v5227
        %v5392 = vpack.c.b16 %v5232, %v5228
        %v5393 = vpack.c.b16 %v5233, %v5229
        %v5394 = vpack.c.b16 %v5238, %v5234
        %v5395 = vpack.c.b16 %v5239, %v5235
        %v5396 = vpack.c.b16 %v5240, %v5236
        %v5397 = vpack.c.b16 %v5241, %v5237
        %v5398 = vpack.c.b16 %v5246, %v5242
        %v5399 = vpack.c.b16 %v5247, %v5243
        %v5400 = vpack.c.b16 %v5248, %v5244
        %v5401 = vpack.c.b16 %v5249, %v5245
        %v5402 = vpack.c.b16 %v5254, %v5250
        %v5403 = vpack.c.b16 %v5255, %v5251
        %v5404 = vpack.c.b16 %v5256, %v5252
        %v5405 = vpack.c.b16 %v5257, %v5253
        %v5406 = vpack.c.b16 %v5262, %v5258
        %v5407 = vpack.c.b16 %v5263, %v5259
        %v5408 = vpack.c.b16 %v5264, %v5260
        %v5409 = vpack.c.b16 %v5265, %v5261
        %v5410 = vpack.c.b16 %v5270, %v5266
        %v5411 = vpack.c.b16 %v5271, %v5267
        %v5412 = vpack.c.b16 %v5272, %v5268
        %v5413 = vpack.c.b16 %v5273, %v5269
        %v5414 = vpack.c.b16 %v5278, %v5274
        %v5415 = vpack.c.b16 %v5279, %v5275
        %v5416 = vpack.c.b16 %v5280, %v5276
        %v5417 = vpack.c.b16 %v5281, %v5277
        %v5418 = vpack.c.b16 %v5286, %v5282
        %v5419 = vpack.c.b16 %v5287, %v5283
        %v5420 = vpack.c.b16 %v5288, %v5284
        %v5421 = vpack.c.b16 %v5289, %v5285
        %v5422 = vpack.c.b16 %v5294, %v5290
        %v5423 = vpack.c.b16 %v5295, %v5291
        %v5424 = vpack.c.b16 %v5296, %v5292
        %v5425 = vpack.c.b16 %v5297, %v5293
        %5554 = vmatpush.bf16.msra.mxu0 %v5326
        %5555 = vmatpush.bf16.msra.mxu0 %v5322
        %5556 = vmatpush.bf16.msra.mxu0 %v5318
        %5557 = vmatpush.bf16.msra.mxu0 %v5314
        %5558 = vmatpush.bf16.msra.mxu0 %v5310
        %5559 = vmatpush.bf16.msra.mxu0 %v5306
        %5560 = vmatpush.bf16.msra.mxu0 %v5302
        %5561 = vmatpush.bf16.msra.mxu0 %v5298
        %5562 = vmatmul.bf16.gmra.mxu0 %v3182
        %v5563 = vpop.f32.mrf.mxu0
        %v5564 = vadd.f32 0.0, %v5563
        %v5565 = vpop.f32.mrf.mxu0
        %v5566 = vadd.f32 0.0, %v5565
        %5567 = vdwg.mxu0
        %5568 = vmatpush.bf16.msra.mxu0 %v5358
        %5569 = vmatpush.bf16.msra.mxu0 %v5354
        %5570 = vmatpush.bf16.msra.mxu0 %v5350
        %5571 = vmatpush.bf16.msra.mxu0 %v5346
        %5572 = vmatpush.bf16.msra.mxu0 %v5342
        %5573 = vmatpush.bf16.msra.mxu0 %v5338
        %5574 = vmatpush.bf16.msra.mxu0 %v5334
        %5575 = vmatpush.bf16.msra.mxu0 %v5330
        %5576 = vmatmul.bf16.gmra.mxu0 %v3183
        %v5577 = vpop.f32.mrf.mxu0
        %v5578 = vadd.f32 %v5564, %v5577
        %v5579 = vpop.f32.mrf.mxu0
        %v5580 = vadd.f32 %v5566, %v5579
        %5581 = vdwg.mxu0
        %5582 = vmatpush.bf16.msra.mxu0 %v5390
        %5583 = vmatpush.bf16.msra.mxu0 %v5386
        %5584 = vmatpush.bf16.msra.mxu0 %v5382
        %5585 = vmatpush.bf16.msra.mxu0 %v5378
        %5586 = vmatpush.bf16.msra.mxu0 %v5374
        %5587 = vmatpush.bf16.msra.mxu0 %v5370
        %5588 = vmatpush.bf16.msra.mxu0 %v5366
        %5589 = vmatpush.bf16.msra.mxu0 %v5362
        %5590 = vmatmul.bf16.gmra.mxu0 %v3184
        %v5591 = vpop.f32.mrf.mxu0
        %v5592 = vadd.f32 %v5578, %v5591
        %v5593 = vpop.f32.mrf.mxu0
        %v5594 = vadd.f32 %v5580, %v5593
        %5595 = vdwg.mxu0
        %5596 = vmatpush.bf16.msra.mxu0 %v5422
        %5597 = vmatpush.bf16.msra.mxu0 %v5418
        %5598 = vmatpush.bf16.msra.mxu0 %v5414
        %5599 = vmatpush.bf16.msra.mxu0 %v5410
        %5600 = vmatpush.bf16.msra.mxu0 %v5406
        %5601 = vmatpush.bf16.msra.mxu0 %v5402
        %5602 = vmatpush.bf16.msra.mxu0 %v5398
        %5603 = vmatpush.bf16.msra.mxu0 %v5394
        %5604 = vmatmul.bf16.gmra.mxu0 %v3185
        %v5605 = vpop.f32.mrf.mxu0
        %v5606 = vadd.f32 %v5592, %v5605
        %v5607 = vpop.f32.mrf.mxu0
        %v5608 = vadd.f32 %v5594, %v5607
        %5609 = vdwg.mxu0
        %5610 = vmatpush.bf16.msra.mxu0 %v5327
        %5611 = vmatpush.bf16.msra.mxu0 %v5323
        %5612 = vmatpush.bf16.msra.mxu0 %v5319
        %5613 = vmatpush.bf16.msra.mxu0 %v5315
        %5614 = vmatpush.bf16.msra.mxu0 %v5311
        %5615 = vmatpush.bf16.msra.mxu0 %v5307
        %5616 = vmatpush.bf16.msra.mxu0 %v5303
        %5617 = vmatpush.bf16.msra.mxu0 %v5299
        %5618 = vmatmul.bf16.gmra.mxu0 %v3182
        %v5619 = vpop.f32.mrf.mxu0
        %v5620 = vadd.f32 0.0, %v5619
        %v5621 = vpop.f32.mrf.mxu0
        %v5622 = vadd.f32 0.0, %v5621
        %5623 = vdwg.mxu0
        %5624 = vmatpush.bf16.msra.mxu0 %v5359
        %5625 = vmatpush.bf16.msra.mxu0 %v5355
        %5626 = vmatpush.bf16.msra.mxu0 %v5351
        %5627 = vmatpush.bf16.msra.mxu0 %v5347
        %5628 = vmatpush.bf16.msra.mxu0 %v5343
        %5629 = vmatpush.bf16.msra.mxu0 %v5339
        %5630 = vmatpush.bf16.msra.mxu0 %v5335
        %5631 = vmatpush.bf16.msra.mxu0 %v5331
        %5632 = vmatmul.bf16.gmra.mxu0 %v3183
        %v5633 = vpop.f32.mrf.mxu0
        %v5634 = vadd.f32 %v5620, %v5633
        %v5635 = vpop.f32.mrf.mxu0
        %v5636 = vadd.f32 %v5622, %v5635
        %5637 = vdwg.mxu0
        %5638 = vmatpush.bf16.msra.mxu0 %v5391
        %5639 = vmatpush.bf16.msra.mxu0 %v5387
        %5640 = vmatpush.bf16.msra.mxu0 %v5383
        %5641 = vmatpush.bf16.msra.mxu0 %v5379
        %5642 = vmatpush.bf16.msra.mxu0 %v5375
        %5643 = vmatpush.bf16.msra.mxu0 %v5371
        %5644 = vmatpush.bf16.msra.mxu0 %v5367
        %5645 = vmatpush.bf16.msra.mxu0 %v5363
        %5646 = vmatmul.bf16.gmra.mxu0 %v3184
        %v5647 = vpop.f32.mrf.mxu0
        %v5648 = vadd.f32 %v5634, %v5647
        %v5649 = vpop.f32.mrf.mxu0
        %v5650 = vadd.f32 %v5636, %v5649
        %5651 = vdwg.mxu0
        %5652 = vmatpush.bf16.msra.mxu0 %v5423
        %5653 = vmatpush.bf16.msra.mxu0 %v5419
        %5654 = vmatpush.bf16.msra.mxu0 %v5415
        %5655 = vmatpush.bf16.msra.mxu0 %v5411
        %5656 = vmatpush.bf16.msra.mxu0 %v5407
        %5657 = vmatpush.bf16.msra.mxu0 %v5403
        %5658 = vmatpush.bf16.msra.mxu0 %v5399
        %5659 = vmatpush.bf16.msra.mxu0 %v5395
        %5660 = vmatmul.bf16.gmra.mxu0 %v3185
        %v5661 = vpop.f32.mrf.mxu0
        %v5662 = vadd.f32 %v5648, %v5661
        %v5663 = vpop.f32.mrf.mxu0
        %v5664 = vadd.f32 %v5650, %v5663
        %5665 = vdwg.mxu0
        %5666 = vmatpush.bf16.msra.mxu0 %v5328
        %5667 = vmatpush.bf16.msra.mxu0 %v5324
        %5668 = vmatpush.bf16.msra.mxu0 %v5320
        %5669 = vmatpush.bf16.msra.mxu0 %v5316
        %5670 = vmatpush.bf16.msra.mxu0 %v5312
        %5671 = vmatpush.bf16.msra.mxu0 %v5308
        %5672 = vmatpush.bf16.msra.mxu0 %v5304
        %5673 = vmatpush.bf16.msra.mxu0 %v5300
        %5674 = vmatmul.bf16.gmra.mxu0 %v3182
        %v5675 = vpop.f32.mrf.mxu0
        %v5676 = vadd.f32 0.0, %v5675
        %v5677 = vpop.f32.mrf.mxu0
        %v5678 = vadd.f32 0.0, %v5677
        %5679 = vdwg.mxu0
        %5680 = vmatpush.bf16.msra.mxu0 %v5360
        %5681 = vmatpush.bf16.msra.mxu0 %v5356
        %5682 = vmatpush.bf16.msra.mxu0 %v5352
        %5683 = vmatpush.bf16.msra.mxu0 %v5348
        %5684 = vmatpush.bf16.msra.mxu0 %v5344
        %5685 = vmatpush.bf16.msra.mxu0 %v5340
        %5686 = vmatpush.bf16.msra.mxu0 %v5336
        %5687 = vmatpush.bf16.msra.mxu0 %v5332
        %5688 = vmatmul.bf16.gmra.mxu0 %v3183
        %v5689 = vpop.f32.mrf.mxu0
        %v5690 = vadd.f32 %v5676, %v5689
        %v5691 = vpop.f32.mrf.mxu0
        %v5692 = vadd.f32 %v5678, %v5691
        %5693 = vdwg.mxu0
        %5694 = vmatpush.bf16.msra.mxu0 %v5392
        %5695 = vmatpush.bf16.msra.mxu0 %v5388
        %5696 = vmatpush.bf16.msra.mxu0 %v5384
        %5697 = vmatpush.bf16.msra.mxu0 %v5380
        %5698 = vmatpush.bf16.msra.mxu0 %v5376
        %5699 = vmatpush.bf16.msra.mxu0 %v5372
        %5700 = vmatpush.bf16.msra.mxu0 %v5368
        %5701 = vmatpush.bf16.msra.mxu0 %v5364
        %5702 = vmatmul.bf16.gmra.mxu0 %v3184
        %v5703 = vpop.f32.mrf.mxu0
        %v5704 = vadd.f32 %v5690, %v5703
        %v5705 = vpop.f32.mrf.mxu0
        %v5706 = vadd.f32 %v5692, %v5705
        %5707 = vdwg.mxu0
        %5708 = vmatpush.bf16.msra.mxu0 %v5424
        %5709 = vmatpush.bf16.msra.mxu0 %v5420
        %5710 = vmatpush.bf16.msra.mxu0 %v5416
        %5711 = vmatpush.bf16.msra.mxu0 %v5412
        %5712 = vmatpush.bf16.msra.mxu0 %v5408
        %5713 = vmatpush.bf16.msra.mxu0 %v5404
        %5714 = vmatpush.bf16.msra.mxu0 %v5400
        %5715 = vmatpush.bf16.msra.mxu0 %v5396
        %5716 = vmatmul.bf16.gmra.mxu0 %v3185
        %v5717 = vpop.f32.mrf.mxu0
        %v5718 = vadd.f32 %v5704, %v5717
        %v5719 = vpop.f32.mrf.mxu0
        %v5720 = vadd.f32 %v5706, %v5719
        %5721 = vdwg.mxu0
        %5722 = vmatpush.bf16.msra.mxu0 %v5329
        %5723 = vmatpush.bf16.msra.mxu0 %v5325
        %5724 = vmatpush.bf16.msra.mxu0 %v5321
        %5725 = vmatpush.bf16.msra.mxu0 %v5317
        %5726 = vmatpush.bf16.msra.mxu0 %v5313
        %5727 = vmatpush.bf16.msra.mxu0 %v5309
        %5728 = vmatpush.bf16.msra.mxu0 %v5305
        %5729 = vmatpush.bf16.msra.mxu0 %v5301
        %5730 = vmatmul.bf16.gmra.mxu0 %v3182
        %v5731 = vpop.f32.mrf.mxu0
        %v5732 = vadd.f32 0.0, %v5731
        %v5733 = vpop.f32.mrf.mxu0
        %v5734 = vadd.f32 0.0, %v5733
        %5735 = vdwg.mxu0
        %5736 = vmatpush.bf16.msra.mxu0 %v5361
        %5737 = vmatpush.bf16.msra.mxu0 %v5357
        %5738 = vmatpush.bf16.msra.mxu0 %v5353
        %5739 = vmatpush.bf16.msra.mxu0 %v5349
        %5740 = vmatpush.bf16.msra.mxu0 %v5345
        %5741 = vmatpush.bf16.msra.mxu0 %v5341
        %5742 = vmatpush.bf16.msra.mxu0 %v5337
        %5743 = vmatpush.bf16.msra.mxu0 %v5333
        %5744 = vmatmul.bf16.gmra.mxu0 %v3183
        %v5745 = vpop.f32.mrf.mxu0
        %v5746 = vadd.f32 %v5732, %v5745
        %v5747 = vpop.f32.mrf.mxu0
        %v5748 = vadd.f32 %v5734, %v5747
        %5749 = vdwg.mxu0
        %5750 = vmatpush.bf16.msra.mxu0 %v5393
        %5751 = vmatpush.bf16.msra.mxu0 %v5389
        %5752 = vmatpush.bf16.msra.mxu0 %v5385
        %5753 = vmatpush.bf16.msra.mxu0 %v5381
        %5754 = vmatpush.bf16.msra.mxu0 %v5377
        %5755 = vmatpush.bf16.msra.mxu0 %v5373
        %5756 = vmatpush.bf16.msra.mxu0 %v5369
        %5757 = vmatpush.bf16.msra.mxu0 %v5365
        %5758 = vmatmul.bf16.gmra.mxu0 %v3184
        %v5759 = vpop.f32.mrf.mxu0
        %v5760 = vadd.f32 %v5746, %v5759
        %v5761 = vpop.f32.mrf.mxu0
        %v5762 = vadd.f32 %v5748, %v5761
        %5763 = vdwg.mxu0
        %5764 = vmatpush.bf16.msra.mxu0 %v5425
        %5765 = vmatpush.bf16.msra.mxu0 %v5421
        %5766 = vmatpush.bf16.msra.mxu0 %v5417
        %5767 = vmatpush.bf16.msra.mxu0 %v5413
        %5768 = vmatpush.bf16.msra.mxu0 %v5409
        %5769 = vmatpush.bf16.msra.mxu0 %v5405
        %5770 = vmatpush.bf16.msra.mxu0 %v5401
        %5771 = vmatpush.bf16.msra.mxu0 %v5397
        %5772 = vmatmul.bf16.gmra.mxu0 %v3185
        %v5773 = vpop.f32.mrf.mxu0
        %v5774 = vadd.f32 %v5760, %v5773
        %v5775 = vpop.f32.mrf.mxu0
        %v5776 = vadd.f32 %v5762, %v5775
        %5777 = vdwg.mxu0
        %v5778 = vadd.f32 %v4742, %v5606
        %v5779 = vadd.f32 %v4798, %v5662
        %v5780 = vadd.f32 %v4854, %v5718
        %v5781 = vadd.f32 %v4910, %v5774
        %v5782 = vadd.f32 %v4744, %v5608
        %v5783 = vadd.f32 %v4800, %v5664
        %v5784 = vadd.f32 %v4856, %v5720
        %v5785 = vadd.f32 %v4912, %v5776
        %v5786 = vld [vmem:[%s12] sm:$0xf]
        %v5788 = vperm.slane %v5786, 0
        %v5789 = vperm.slane %v5786, 1
        %v5790 = vperm.slane %v5786, 2
        %v5791 = vperm.slane %v5786, 3
        %v5796 = vmul.f32 %v5778, %v5788
        %v5797 = vmul.f32 %v5779, %v5789
        %v5798 = vmul.f32 %v5780, %v5790
        %v5799 = vmul.f32 %v5781, %v5791
        %v5800 = vmul.f32 %v5782, %v5788
        %v5801 = vmul.f32 %v5783, %v5789
        %v5802 = vmul.f32 %v5784, %v5790
        %v5803 = vmul.f32 %v5785, %v5791
        %v5804 = vld [vmem:[%s13] sm:$0xf]
        %v5806 = vperm.slane %v5804, 0
        %v5807 = vperm.slane %v5804, 1
        %v5808 = vperm.slane %v5804, 2
        %v5809 = vperm.slane %v5804, 3
        %v5814 = vadd.f32 %v5796, %v5806
        %v5815 = vadd.f32 %v5797, %v5807
        %v5816 = vadd.f32 %v5798, %v5808
        %v5817 = vadd.f32 %v5799, %v5809
        %v5818 = vadd.f32 %v5800, %v5806
        %v5819 = vadd.f32 %v5801, %v5807
        %v5820 = vadd.f32 %v5802, %v5808
        %v5821 = vadd.f32 %v5803, %v5809
        %v5822 = vmax.f32 %v5814, 0.0
        %v5823 = vmax.f32 %v5815, 0.0
        %v5824 = vmax.f32 %v5816, 0.0
        %v5825 = vmax.f32 %v5817, 0.0
        %v5826 = vmax.f32 %v5818, 0.0
        %v5827 = vmax.f32 %v5819, 0.0
        %v5828 = vmax.f32 %v5820, 0.0
        %v5829 = vmax.f32 %v5821, 0.0
        %5830 = vst [vmem:[%s642] sm:$0xff] %v5822
        %5831 = vst [vmem:[%s642 + $0x8] sm:$0xff] %v5823
        %5832 = vst [vmem:[%s642 + $0x10] sm:$0xff] %v5824
        %5833 = vst [vmem:[%s642 + $0x18] sm:$0xff] %v5825
        %5834 = vst [vmem:[%s642 + $0x20] sm:$0xff] %v5826
        %5835 = vst [vmem:[%s642 + $0x28] sm:$0xff] %v5827
        %5836 = vst [vmem:[%s642 + $0x30] sm:$0xff] %v5828
        %5837 = vst [vmem:[%s642 + $0x38] sm:$0xff] %v5829
        %s5838 = sand.u32 %s349, 1
        %s5839 = scalar_lea.sflag [#allocation4], %s5838
        %s5840 = sand.u32 %s349, 1
        %s5841 = smul.addr %s5840, 64
        %s5842 = scalar_lea.vmem [#allocation17], %s5841
        // Predicated region
        $region113: #{tpu_custom_call.1} parent=75 // pred_check
          %p5843 = pneg %p359
        $region114: #{tpu_custom_call.1} parent=75 // pred_check_branch
          %5845 = sbr.rel (%p5843) target = $region116
        $region115: #{tpu_custom_call.1} parent=75 // pred_region
          %5847 = vsyncadd %s5839, 0
          %s5848 = smul.addr %s37, 8
          %s5849 = smul.addr %s5848, 8
          %s5850 = scalar_lea.hbm %s14, %s5849
          %s5851 = sshll.u32 %s5842, 4
          %s5852 = int_to_ptr.vmem [resolvable:$true] %s5851
          %s5853 = sshll.u32 %s5850, 4
          %s5854 = int_to_ptr.hbm [resolvable:$true] %s5853
          %5859 = dma.vmem_to_hbm [thread:$0]  %s5852, 1024, %s5854, %s5839, 512, 512, 32
        $region116: #{tpu_custom_call.1} parent=75 // pred_fallthru
          _
      $region76: #{tpu_custom_call.1} parent=5 // pred_fallthru
        _
      %p5860 = scmp.le.s32.totalorder 2, %s32
      // Predicated region
      $region117: #{tpu_custom_call.1} parent=5 // pred_check
        %p5861 = pneg %p5860
      $region118: #{tpu_custom_call.1} parent=5 // pred_check_branch
        %5863 = sbr.rel (%p5861) target = $region120
      $region119: #{tpu_custom_call.1} parent=5 // pred_region
        %s5864 = ssub.s32 %s32, 2
        // Predicated region
        $region121: #{tpu_custom_call.1} parent=119 // pred_check
          %p5865 = pneg %p365
        $region122: #{tpu_custom_call.1} parent=119 // pred_check_branch
          %5867 = sbr.rel (%p5865) target = $region124
        $region123: #{tpu_custom_call.1} parent=119 // pred_region
          %s5868 = sand.u32 %s350, 1
          %s5869 = scalar_lea.sflag [#allocation4], %s5868
          %s5870 = sand.u32 %s350, 1
          %s5871 = smul.addr %s5870, 64
          %s5872 = scalar_lea.vmem [#allocation17], %s5871
          %5874 = dma.done %s5869, 1024
        $region124: #{tpu_custom_call.1} parent=119 // pred_fallthru
          _
      $region120: #{tpu_custom_call.1} parent=5 // pred_fallthru
        _
    $region6: #{tpu_custom_call.1} parent=1 // loop_footer
      %s36 = sadd.s32 1, %s32
    $region7: #{tpu_custom_call.1} parent=1 // loop_footer_branch
      %31 = sbr.rel target = $region3
    $region8: #{tpu_custom_call.1} parent=1 // loop_exit
      _
    %5875 = vsyncpa [#allocation3], 1
    %s5876 = scalar_lea.sflag [#allocation3], 1
    %5877 = vsyncpa %s5876, 1
    %5878 = vsyncpa [#allocation6], 1
    %s5879 = scalar_lea.sflag [#allocation6], 1
    %5880 = vsyncpa %s5879, 1
    %5881 = vsyncpa [#allocation9], 1
    %5882 = vsyncpa [#allocation12], 1
    %5883 = vsyncpa [#allocation15], 1
    %5884 = vsyncpa [#allocation4], 1
    %s5885 = scalar_lea.sflag [#allocation4], 1
    %5886 = vsyncpa %s5885, 1

</llo_original>
